<compile_context>
chip_gen: v7x
topology: tpu7x:2x2x1
jax: 0.10.0
libtpu: 0.0.40
codegen_flags: <defaults>
</compile_context>

<pallas_src>
import functools

import jax
import jax.numpy as jnp
from jax.experimental import pallas as pl
from jax.experimental.pallas import tpu as pltpu

EPS = 1e-5
LANE = 128
VMEM_LIMIT = 32 * 1024 * 1024


# --------------------------------------------------------------------------
# Kernels
# --------------------------------------------------------------------------
def _pass1_conv3x3_stats(xf_ref, ml_ref, mr_ref, w1_ref, h_ref, s1_ref, *, width):
    """One H-padded, row-flattened image -> conv3x3 rows + streamed BN1 sum/sumsq."""
    @pl.when(pl.program_id(0) == 0)
    def _init():
        s1_ref[...] = jnp.zeros_like(s1_ref)

    rows, cp = h_ref.shape                       # (H*W, Cp)
    acc = jnp.zeros((rows, cp), jnp.float32)
    for k in range(9):                           # static unroll: 9 MXU matmuls
        ky, kx = divmod(k, 3)
        off = ky * width + kx                    # static row offset of this tap
        tap = xf_ref[0, off:off + rows, :]       # (rows, Cp) f32, contiguous rows
        if kx == 0:                              # zero the wrapped left-edge column
            tap = tap * ml_ref[...]
        elif kx == 2:                            # zero the wrapped right-edge column
            tap = tap * mr_ref[...]
        acc = acc + jnp.dot(tap.astype(jnp.bfloat16), w1_ref[k],
                            preferred_element_type=jnp.float32)

    h_ref[...] = acc
    s1_ref[0:1, :] += jnp.sum(acc, axis=0, keepdims=True)
    s1_ref[1:2, :] += jnp.sum(acc * acc, axis=0, keepdims=True)


def _pass2_bn1_relu_conv1x1_stats(h_ref, a1_ref, w2_ref, s2_ref):
    """TM-row tile: apply folded BN1 + ReLU + 1x1 conv, accumulate BN2 sum/sumsq."""
    @pl.when(pl.program_id(0) == 0)
    def _init():
        s2_ref[...] = jnp.zeros_like(s2_ref)

    r = jnp.maximum(h_ref[...] * a1_ref[0:1, :] + a1_ref[1:2, :], 0.0)
    h2 = jnp.dot(r.astype(jnp.bfloat16), w2_ref[...],
                 preferred_element_type=jnp.float32)
    s2_ref[0:1, :] += jnp.sum(h2, axis=0, keepdims=True)
    s2_ref[1:2, :] += jnp.sum(h2 * h2, axis=0, keepdims=True)


def _pass3_finalize(h_ref, x_ref, a1_ref, a2_ref, w2_ref, o_ref):
    """TM-row tile: BN1 + ReLU + 1x1 conv (recomputed) + BN2 + residual add."""
    r = jnp.maximum(h_ref[...] * a1_ref[0:1, :] + a1_ref[1:2, :], 0.0)
    h2 = jnp.dot(r.astype(jnp.bfloat16), w2_ref[...],
                 preferred_element_type=jnp.float32)
    o_ref[...] = x_ref[...] + (h2 * a2_ref[0:1, :] + a2_ref[1:2, :])


# --------------------------------------------------------------------------
# Host-side helpers
# --------------------------------------------------------------------------
def _round_up(v, m):
    return (v + m - 1) // m * m


def _pick_row_tile(m, target=256):
    """Largest sublane-aligned divisor of m that is <= target (else whole m)."""
    if m <= target:
        return m
    for t in range(target, 7, -1):
        if m % t == 0 and t % 8 == 0:
            return t
    return m


def _pad2d(a, rows, cols):
    return jnp.zeros((rows, cols), a.dtype).at[:a.shape[0], :a.shape[1]].set(a)


def _bn_fold(sums, count, gamma_p, beta_p):
    """Fold streamed (sum, sumsq) into per-channel (scale, shift) for y*s + t."""
    mean = sums[0] / count
    var = jnp.maximum(sums[1] / count - mean * mean, 0.0)
    scale = gamma_p * jax.lax.rsqrt(var + EPS)
    shift = beta_p - mean * scale
    return jnp.stack([scale, shift], axis=0)          # (2, Cp) f32


# --------------------------------------------------------------------------
# Public wrapper
# --------------------------------------------------------------------------
def resblock_forward(x_nchw, w1, g1, b1, w2, g2, b2, *, row_tile=256):
    """x: (N,C,H,W) f32; w1: (C,C,3,3); w2: (C,C,1,1); g/b: (C,).  Returns NCHW f32."""
    N, C, H, W = x_nchw.shape
    assert w1.shape[0] == C, "ResBlock residual add requires in_channel == out_channel"
    assert (H * W) % 8 == 0, "per-image row block must be sublane (8) aligned"

    Cp = _round_up(max(C, LANE), LANE)                # lane-dense channel dim
    M = N * H * W                                     # pixel rows
    R = H * W                                         # rows per image
    TM = _pick_row_tile(M, row_tile)                  # row tile for passes 2/3
    MT = M // TM
    FR = (H + 2) * W + 8                              # flattened rows/image (+guards)

    # ---- layout prep (cheap, ~1x the input; no 9x im2col) ----
    x_nhwc = jnp.transpose(x_nchw, (0, 2, 3, 1))
    x_nhwc = jnp.pad(x_nhwc, ((0, 0), (0, 0), (0, 0), (0, Cp - C)))
    x2d = x_nhwc.reshape(M, Cp)                                           # residual slab
    x_rows = jnp.pad(x_nhwc, ((0, 0), (1, 1), (0, 0), (0, 0)))            # pad H only
    x_rows = x_rows.reshape(N, (H + 2) * W, Cp)
    x_rows = jnp.pad(x_rows, ((0, 0), (1, 7), (0, 0)))                    # (N, FR, Cp)

    # 0/1 masks that realize the left/right SAME padding for the shifted taps
    col = jnp.arange(R, dtype=jnp.int32) % W
    mask_l = (col != 0).astype(jnp.float32).reshape(R, 1)
    mask_r = (col != W - 1).astype(jnp.float32).reshape(R, 1)

    # conv weights -> per-tap (Cin, Cout), zero-padded to Cp, bf16 for the MXU
    w1_taps = jnp.stack([_pad2d(w1[:, :, ky, kx].T, Cp, Cp)
                         for ky in range(3) for kx in range(3)],
                        axis=0).astype(jnp.bfloat16)                      # (9, Cp, Cp)
    w2_mat = _pad2d(w2[:, :, 0, 0].T, Cp, Cp).astype(jnp.bfloat16)        # (Cp, Cp)

    pad_c = lambda v: jnp.pad(v, (0, Cp - C))
    g1p, b1p, g2p, b2p = pad_c(g1), pad_c(b1), pad_c(g2), pad_c(b2)

    params_red = pltpu.CompilerParams(vmem_limit_bytes=VMEM_LIMIT,
                                      dimension_semantics=("arbitrary",))
    params_par = pltpu.CompilerParams(vmem_limit_bytes=VMEM_LIMIT,
                                      dimension_semantics=("parallel",))

    row_spec = pl.BlockSpec((TM, Cp), lambda i: (i, 0))
    vec_spec = pl.BlockSpec((2, Cp), lambda i: (0, 0))
    w2_spec = pl.BlockSpec((Cp, Cp), lambda i: (0, 0))

    # ---- pass 1: in-kernel 3x3 conv (9 shifted bf16 matmuls) + BN1 stats ----
    h, s1 = pl.pallas_call(
        functools.partial(_pass1_conv3x3_stats, width=W),
        grid=(N,),
        in_specs=[
            pl.BlockSpec((1, FR, Cp), lambda n: (n, 0, 0)),
            pl.BlockSpec((R, 1), lambda n: (0, 0)),
            pl.BlockSpec((R, 1), lambda n: (0, 0)),
            pl.BlockSpec((9, Cp, Cp), lambda n: (0, 0, 0)),
        ],
        out_specs=[
            pl.BlockSpec((R, Cp), lambda n: (n, 0)),
            pl.BlockSpec((2, Cp), lambda n: (0, 0)),
        ],
        out_shape=(jax.ShapeDtypeStruct((M, Cp), jnp.float32),
                   jax.ShapeDtypeStruct((2, Cp), jnp.float32)),
        compiler_params=params_red,
        cost_estimate=pl.CostEstimate(
            flops=int(2 * M * 9 * Cp * Cp + 4 * M * Cp),
            transcendentals=0,
            bytes_accessed=int(N * FR * Cp * 4 + 9 * Cp * Cp * 2 + M * Cp * 4)),
    )(x_rows, mask_l, mask_r, w1_taps)

    a1 = _bn_fold(s1, float(M), g1p, b1p)             # (2, Cp): BN1 scale/shift

    # ---- pass 2: bn1 + relu + conv1x1 over TM-row tiles, streamed BN2 stats ----
    s2 = pl.pallas_call(
        _pass2_bn1_relu_conv1x1_stats,
        grid=(MT,),
        in_specs=[row_spec, vec_spec, w2_spec],
        out_specs=pl.BlockSpec((2, Cp), lambda i: (0, 0)),
        out_shape=jax.ShapeDtypeStruct((2, Cp), jnp.float32),
        compiler_params=params_red,
        cost_estimate=pl.CostEstimate(
            flops=int(2 * M * Cp * Cp + 6 * M * Cp),
            transcendentals=0,
            bytes_accessed=int(M * Cp * 4 + Cp * Cp * 2 + 4 * Cp * 4)),
    )(h, a1, w2_mat)

    a2 = _bn_fold(s2, float(M), g2p, b2p)             # (2, Cp): BN2 scale/shift

    # ---- pass 3: bn1 + relu + conv1x1 (recomputed) + bn2 + residual ----
    out2d = pl.pallas_call(
        _pass3_finalize,
        grid=(MT,),
        in_specs=[row_spec, row_spec, vec_spec, vec_spec, w2_spec],
        out_specs=row_spec,
        out_shape=jax.ShapeDtypeStruct((M, Cp), jnp.float32),
        compiler_params=params_par,
        cost_estimate=pl.CostEstimate(
            flops=int(2 * M * Cp * Cp + 8 * M * Cp),
            transcendentals=0,
            bytes_accessed=int(3 * M * Cp * 4 + Cp * Cp * 2 + 8 * Cp * 4)),
    )(h, x2d, a1, a2, w2_mat)

    out = out2d.reshape(N, H, W, Cp)[..., :C]
    return jnp.transpose(out, (0, 3, 1, 2))           # back to NCHW


# --------------------------------------------------------------------------
# Pure-JAX reference (matching MXU precision: bf16 conv inputs, f32 acc/BN)
# --------------------------------------------------------------------------
def _reference(x, w1, g1, b1, w2, g2, b2):
    dn = ("NCHW", "OIHW", "NCHW")

    def bn(y, g, b):
        mu = jnp.mean(y, axis=(0, 2, 3), keepdims=True)
        var = jnp.mean((y - mu) ** 2, axis=(0, 2, 3), keepdims=True)
        return ((y - mu) * jax.lax.rsqrt(var + EPS) * g.reshape(1, -1, 1, 1)
                + b.reshape(1, -1, 1, 1))

    y = jax.lax.conv_general_dilated(
        x.astype(jnp.bfloat16), w1.astype(jnp.bfloat16), (1, 1), "SAME",
        dimension_numbers=dn, preferred_element_type=jnp.float32)
    y = jnp.maximum(bn(y, g1, b1), 0.0)
    y = jax.lax.conv_general_dilated(
        y.astype(jnp.bfloat16), w2.astype(jnp.bfloat16), (1, 1), "VALID",
        dimension_numbers=dn, preferred_element_type=jnp.float32)
    y = bn(y, g2, b2)
    return x + y


if __name__ == "__main__":
    key = jax.random.PRNGKey(0)
    k_x, k_w1, k_w2, k_g1, k_b1, k_g2, k_b2 = jax.random.split(key, 7)

    N, C, H, W = 2, 4, 16, 16          # in_channel == out_channel == 4
    x = jax.random.normal(k_x, (N, C, H, W), dtype=jnp.float32)

    w1 = 0.1 * jax.random.normal(k_w1, (C, C, 3, 3), dtype=jnp.float32)
    w2 = 0.1 * jax.random.normal(k_w2, (C, C, 1, 1), dtype=jnp.float32)
    g1 = 1.0 + 0.1 * jax.random.normal(k_g1, (C,), dtype=jnp.float32)
    b1 = 0.1 * jax.random.normal(k_b1, (C,), dtype=jnp.float32)
    g2 = 1.0 + 0.1 * jax.random.normal(k_g2, (C,), dtype=jnp.float32)
    b2 = 0.1 * jax.random.normal(k_b2, (C,), dtype=jnp.float32)

    fwd = jax.jit(resblock_forward)
    out = jax.block_until_ready(fwd(x, w1, g1, b1, w2, g2, b2))
    ref = jax.block_until_ready(_reference(x, w1, g1, b1, w2, g2, b2))

    assert out.shape == (N, C, H, W) and out.dtype == jnp.float32
    # bf16 MXU operands -> compare against the precision-matched reference.
    assert jnp.allclose(out, ref, rtol=5e-2, atol=5e-2), float(jnp.max(jnp.abs(out - ref)))
    print("KERNEL_OK")
</pallas_src>

<mosaic_0001>
module attributes {stable_mosaic.version = 11 : i64} {
  func.func @_pass1_conv3x3_stats(%arg0: i32, %arg1: memref<1x296x128xf32, #tpu.memory_space<vmem>>, %arg2: memref<256x1xf32, #tpu.memory_space<vmem>>, %arg3: memref<256x1xf32, #tpu.memory_space<vmem>>, %arg4: memref<9x128x128xbf16, #tpu.memory_space<vmem>>, %arg5: memref<256x128xf32, #tpu.memory_space<vmem>>, %arg6: memref<2x128xf32, #tpu.memory_space<vmem>>) attributes {dimension_semantics = [#tpu.dimension_semantics<arbitrary>], iteration_bounds = array<i64: 2>, scalar_prefetch = 0 : i64, scratch_operands = 0 : i64, tpu.core_type = #tpu.core_type<tc>, window_params = [{transform_indices = @transform_0, window_bounds = array<i64: 1, 296, 128>}, {pipeline_mode = #tpu.pipeline_mode<synchronous>, transform_indices = @transform_1, window_bounds = array<i64: 256, 1>}, {pipeline_mode = #tpu.pipeline_mode<synchronous>, transform_indices = @transform_2, window_bounds = array<i64: 256, 1>}, {pipeline_mode = #tpu.pipeline_mode<synchronous>, transform_indices = @transform_3, window_bounds = array<i64: 9, 128, 128>}, {transform_indices = @transform_4, window_bounds = array<i64: 256, 128>}, {pipeline_mode = #tpu.pipeline_mode<synchronous>, transform_indices = @transform_5, window_bounds = array<i64: 2, 128>}]} {
    %c0_i32 = arith.constant 0 : i32
    %0 = arith.cmpi eq, %arg0, %c0_i32 : i32
    %1 = arith.extui %0 : i1 to i32
    %c0_i32_0 = arith.constant 0 : i32
    %2 = arith.cmpi ne, %1, %c0_i32_0 : i32
    scf.if %2 {
      %cst_73 = arith.constant 0.000000e+00 : f32
      %97 = vector.broadcast %cst_73 : f32 to vector<2x128xf32>
      %c0_74 = arith.constant 0 : index
      %c0_75 = arith.constant 0 : index
      %98 = vector.load %arg6[%c0_74, %c0_75] : memref<2x128xf32, #tpu.memory_space<vmem>>, vector<2x128xf32>
      tpu.vector_store %arg6[%c0_74, %c0_75], %97 {strides = array<i32>} : memref<2x128xf32, #tpu.memory_space<vmem>>, vector<2x128xf32>,
    } else {
    }
    %cst = arith.constant 0.000000e+00 : f32
    %3 = vector.broadcast %cst : f32 to vector<256x128xf32>
    %c0 = arith.constant 0 : index
    %c0_1 = arith.constant 0 : index
    %c0_2 = arith.constant 0 : index
    %4 = vector.load %arg1[%c0, %c0_1, %c0_2] : memref<1x296x128xf32, #tpu.memory_space<vmem>>, vector<1x256x128xf32>
    %5 = vector.shape_cast %4 : vector<1x256x128xf32> to vector<256x128xf32>
    %c0_3 = arith.constant 0 : index
    %c0_4 = arith.constant 0 : index
    %6 = vector.load %arg2[%c0_3, %c0_4] : memref<256x1xf32, #tpu.memory_space<vmem>>, vector<256x1xf32>
    %7 = vector.broadcast %6 : vector<256x1xf32> to vector<256x128xf32>
    %8 = arith.mulf %5, %7 : vector<256x128xf32>
    %9 = arith.truncf %8 : vector<256x128xf32> to vector<256x128xbf16>
    %c0_5 = arith.constant 0 : index
    %c0_6 = arith.constant 0 : index
    %c0_7 = arith.constant 0 : index
    %10 = vector.load %arg4[%c0_5, %c0_6, %c0_7] : memref<9x128x128xbf16, #tpu.memory_space<vmem>>, vector<1x128x128xbf16>
    %11 = vector.shape_cast %10 : vector<1x128x128xbf16> to vector<128x128xbf16>
    %cst_8 = arith.constant dense<0.000000e+00> : vector<256x128xf32>
    %12 = tpu.matmul %9, %11, %cst_8 {dimension_numbers = #tpu.dot_dimension_numbers<[1], [0], [0], [1], [0, 0, 1, 1], [], []>} : vector<256x128xbf16>, vector<128x128xbf16>, vector<256x128xf32> -> vector<256x128xf32>
    %13 = arith.addf %3, %12 : vector<256x128xf32>
    %c0_9 = arith.constant 0 : index
    %c1 = arith.constant 1 : index
    %c0_10 = arith.constant 0 : index
    %14 = vector.load %arg1[%c0_9, %c1, %c0_10] : memref<1x296x128xf32, #tpu.memory_space<vmem>>, vector<1x256x128xf32>
    %15 = vector.shape_cast %14 : vector<1x256x128xf32> to vector<256x128xf32>
    %16 = arith.truncf %15 : vector<256x128xf32> to vector<256x128xbf16>
    %c1_11 = arith.constant 1 : index
    %c0_12 = arith.constant 0 : index
    %c0_13 = arith.constant 0 : index
    %17 = vector.load %arg4[%c1_11, %c0_12, %c0_13] : memref<9x128x128xbf16, #tpu.memory_space<vmem>>, vector<1x128x128xbf16>
    %18 = vector.shape_cast %17 : vector<1x128x128xbf16> to vector<128x128xbf16>
    %cst_14 = arith.constant dense<0.000000e+00> : vector<256x128xf32>
    %19 = tpu.matmul %16, %18, %cst_14 {dimension_numbers = #tpu.dot_dimension_numbers<[1], [0], [0], [1], [0, 0, 1, 1], [], []>} : vector<256x128xbf16>, vector<128x128xbf16>, vector<256x128xf32> -> vector<256x128xf32>
    %20 = arith.addf %13, %19 : vector<256x128xf32>
    %c0_15 = arith.constant 0 : index
    %c2 = arith.constant 2 : index
    %c0_16 = arith.constant 0 : index
    %21 = vector.load %arg1[%c0_15, %c2, %c0_16] : memref<1x296x128xf32, #tpu.memory_space<vmem>>, vector<1x256x128xf32>
    %22 = vector.shape_cast %21 : vector<1x256x128xf32> to vector<256x128xf32>
    %c0_17 = arith.constant 0 : index
    %c0_18 = arith.constant 0 : index
    %23 = vector.load %arg3[%c0_17, %c0_18] : memref<256x1xf32, #tpu.memory_space<vmem>>, vector<256x1xf32>
    %24 = vector.broadcast %23 : vector<256x1xf32> to vector<256x128xf32>
    %25 = arith.mulf %22, %24 : vector<256x128xf32>
    %26 = arith.truncf %25 : vector<256x128xf32> to vector<256x128xbf16>
    %c2_19 = arith.constant 2 : index
    %c0_20 = arith.constant 0 : index
    %c0_21 = arith.constant 0 : index
    %27 = vector.load %arg4[%c2_19, %c0_20, %c0_21] : memref<9x128x128xbf16, #tpu.memory_space<vmem>>, vector<1x128x128xbf16>
    %28 = vector.shape_cast %27 : vector<1x128x128xbf16> to vector<128x128xbf16>
    %cst_22 = arith.constant dense<0.000000e+00> : vector<256x128xf32>
    %29 = tpu.matmul %26, %28, %cst_22 {dimension_numbers = #tpu.dot_dimension_numbers<[1], [0], [0], [1], [0, 0, 1, 1], [], []>} : vector<256x128xbf16>, vector<128x128xbf16>, vector<256x128xf32> -> vector<256x128xf32>
    %30 = arith.addf %20, %29 : vector<256x128xf32>
    %c0_23 = arith.constant 0 : index
    %c16 = arith.constant 16 : index
    %c0_24 = arith.constant 0 : index
    %31 = vector.load %arg1[%c0_23, %c16, %c0_24] : memref<1x296x128xf32, #tpu.memory_space<vmem>>, vector<1x256x128xf32>
    %32 = vector.shape_cast %31 : vector<1x256x128xf32> to vector<256x128xf32>
    %c0_25 = arith.constant 0 : index
    %c0_26 = arith.constant 0 : index
    %33 = vector.load %arg2[%c0_25, %c0_26] : memref<256x1xf32, #tpu.memory_space<vmem>>, vector<256x1xf32>
    %34 = vector.broadcast %33 : vector<256x1xf32> to vector<256x128xf32>
    %35 = arith.mulf %32, %34 : vector<256x128xf32>
    %36 = arith.truncf %35 : vector<256x128xf32> to vector<256x128xbf16>
    %c3 = arith.constant 3 : index
    %c0_27 = arith.constant 0 : index
    %c0_28 = arith.constant 0 : index
    %37 = vector.load %arg4[%c3, %c0_27, %c0_28] : memref<9x128x128xbf16, #tpu.memory_space<vmem>>, vector<1x128x128xbf16>
    %38 = vector.shape_cast %37 : vector<1x128x128xbf16> to vector<128x128xbf16>
    %cst_29 = arith.constant dense<0.000000e+00> : vector<256x128xf32>
    %39 = tpu.matmul %36, %38, %cst_29 {dimension_numbers = #tpu.dot_dimension_numbers<[1], [0], [0], [1], [0, 0, 1, 1], [], []>} : vector<256x128xbf16>, vector<128x128xbf16>, vector<256x128xf32> -> vector<256x128xf32>
    %40 = arith.addf %30, %39 : vector<256x128xf32>
    %c0_30 = arith.constant 0 : index
    %c17 = arith.constant 17 : index
    %c0_31 = arith.constant 0 : index
    %41 = vector.load %arg1[%c0_30, %c17, %c0_31] : memref<1x296x128xf32, #tpu.memory_space<vmem>>, vector<1x256x128xf32>
    %42 = vector.shape_cast %41 : vector<1x256x128xf32> to vector<256x128xf32>
    %43 = arith.truncf %42 : vector<256x128xf32> to vector<256x128xbf16>
    %c4 = arith.constant 4 : index
    %c0_32 = arith.constant 0 : index
    %c0_33 = arith.constant 0 : index
    %44 = vector.load %arg4[%c4, %c0_32, %c0_33] : memref<9x128x128xbf16, #tpu.memory_space<vmem>>, vector<1x128x128xbf16>
    %45 = vector.shape_cast %44 : vector<1x128x128xbf16> to vector<128x128xbf16>
    %cst_34 = arith.constant dense<0.000000e+00> : vector<256x128xf32>
    %46 = tpu.matmul %43, %45, %cst_34 {dimension_numbers = #tpu.dot_dimension_numbers<[1], [0], [0], [1], [0, 0, 1, 1], [], []>} : vector<256x128xbf16>, vector<128x128xbf16>, vector<256x128xf32> -> vector<256x128xf32>
    %47 = arith.addf %40, %46 : vector<256x128xf32>
    %c0_35 = arith.constant 0 : index
    %c18 = arith.constant 18 : index
    %c0_36 = arith.constant 0 : index
    %48 = vector.load %arg1[%c0_35, %c18, %c0_36] : memref<1x296x128xf32, #tpu.memory_space<vmem>>, vector<1x256x128xf32>
    %49 = vector.shape_cast %48 : vector<1x256x128xf32> to vector<256x128xf32>
    %c0_37 = arith.constant 0 : index
    %c0_38 = arith.constant 0 : index
    %50 = vector.load %arg3[%c0_37, %c0_38] : memref<256x1xf32, #tpu.memory_space<vmem>>, vector<256x1xf32>
    %51 = vector.broadcast %50 : vector<256x1xf32> to vector<256x128xf32>
    %52 = arith.mulf %49, %51 : vector<256x128xf32>
    %53 = arith.truncf %52 : vector<256x128xf32> to vector<256x128xbf16>
    %c5 = arith.constant 5 : index
    %c0_39 = arith.constant 0 : index
    %c0_40 = arith.constant 0 : index
    %54 = vector.load %arg4[%c5, %c0_39, %c0_40] : memref<9x128x128xbf16, #tpu.memory_space<vmem>>, vector<1x128x128xbf16>
    %55 = vector.shape_cast %54 : vector<1x128x128xbf16> to vector<128x128xbf16>
    %cst_41 = arith.constant dense<0.000000e+00> : vector<256x128xf32>
    %56 = tpu.matmul %53, %55, %cst_41 {dimension_numbers = #tpu.dot_dimension_numbers<[1], [0], [0], [1], [0, 0, 1, 1], [], []>} : vector<256x128xbf16>, vector<128x128xbf16>, vector<256x128xf32> -> vector<256x128xf32>
    %57 = arith.addf %47, %56 : vector<256x128xf32>
    %c0_42 = arith.constant 0 : index
    %c32 = arith.constant 32 : index
    %c0_43 = arith.constant 0 : index
    %58 = vector.load %arg1[%c0_42, %c32, %c0_43] : memref<1x296x128xf32, #tpu.memory_space<vmem>>, vector<1x256x128xf32>
    %59 = vector.shape_cast %58 : vector<1x256x128xf32> to vector<256x128xf32>
    %c0_44 = arith.constant 0 : index
    %c0_45 = arith.constant 0 : index
    %60 = vector.load %arg2[%c0_44, %c0_45] : memref<256x1xf32, #tpu.memory_space<vmem>>, vector<256x1xf32>
    %61 = vector.broadcast %60 : vector<256x1xf32> to vector<256x128xf32>
    %62 = arith.mulf %59, %61 : vector<256x128xf32>
    %63 = arith.truncf %62 : vector<256x128xf32> to vector<256x128xbf16>
    %c6 = arith.constant 6 : index
    %c0_46 = arith.constant 0 : index
    %c0_47 = arith.constant 0 : index
    %64 = vector.load %arg4[%c6, %c0_46, %c0_47] : memref<9x128x128xbf16, #tpu.memory_space<vmem>>, vector<1x128x128xbf16>
    %65 = vector.shape_cast %64 : vector<1x128x128xbf16> to vector<128x128xbf16>
    %cst_48 = arith.constant dense<0.000000e+00> : vector<256x128xf32>
    %66 = tpu.matmul %63, %65, %cst_48 {dimension_numbers = #tpu.dot_dimension_numbers<[1], [0], [0], [1], [0, 0, 1, 1], [], []>} : vector<256x128xbf16>, vector<128x128xbf16>, vector<256x128xf32> -> vector<256x128xf32>
    %67 = arith.addf %57, %66 : vector<256x128xf32>
    %c0_49 = arith.constant 0 : index
    %c33 = arith.constant 33 : index
    %c0_50 = arith.constant 0 : index
    %68 = vector.load %arg1[%c0_49, %c33, %c0_50] : memref<1x296x128xf32, #tpu.memory_space<vmem>>, vector<1x256x128xf32>
    %69 = vector.shape_cast %68 : vector<1x256x128xf32> to vector<256x128xf32>
    %70 = arith.truncf %69 : vector<256x128xf32> to vector<256x128xbf16>
    %c7 = arith.constant 7 : index
    %c0_51 = arith.constant 0 : index
    %c0_52 = arith.constant 0 : index
    %71 = vector.load %arg4[%c7, %c0_51, %c0_52] : memref<9x128x128xbf16, #tpu.memory_space<vmem>>, vector<1x128x128xbf16>
    %72 = vector.shape_cast %71 : vector<1x128x128xbf16> to vector<128x128xbf16>
    %cst_53 = arith.constant dense<0.000000e+00> : vector<256x128xf32>
    %73 = tpu.matmul %70, %72, %cst_53 {dimension_numbers = #tpu.dot_dimension_numbers<[1], [0], [0], [1], [0, 0, 1, 1], [], []>} : vector<256x128xbf16>, vector<128x128xbf16>, vector<256x128xf32> -> vector<256x128xf32>
    %74 = arith.addf %67, %73 : vector<256x128xf32>
    %c0_54 = arith.constant 0 : index
    %c34 = arith.constant 34 : index
    %c0_55 = arith.constant 0 : index
    %75 = vector.load %arg1[%c0_54, %c34, %c0_55] : memref<1x296x128xf32, #tpu.memory_space<vmem>>, vector<1x256x128xf32>
    %76 = vector.shape_cast %75 : vector<1x256x128xf32> to vector<256x128xf32>
    %c0_56 = arith.constant 0 : index
    %c0_57 = arith.constant 0 : index
    %77 = vector.load %arg3[%c0_56, %c0_57] : memref<256x1xf32, #tpu.memory_space<vmem>>, vector<256x1xf32>
    %78 = vector.broadcast %77 : vector<256x1xf32> to vector<256x128xf32>
    %79 = arith.mulf %76, %78 : vector<256x128xf32>
    %80 = arith.truncf %79 : vector<256x128xf32> to vector<256x128xbf16>
    %c8 = arith.constant 8 : index
    %c0_58 = arith.constant 0 : index
    %c0_59 = arith.constant 0 : index
    %81 = vector.load %arg4[%c8, %c0_58, %c0_59] : memref<9x128x128xbf16, #tpu.memory_space<vmem>>, vector<1x128x128xbf16>
    %82 = vector.shape_cast %81 : vector<1x128x128xbf16> to vector<128x128xbf16>
    %cst_60 = arith.constant dense<0.000000e+00> : vector<256x128xf32>
    %83 = tpu.matmul %80, %82, %cst_60 {dimension_numbers = #tpu.dot_dimension_numbers<[1], [0], [0], [1], [0, 0, 1, 1], [], []>} : vector<256x128xbf16>, vector<128x128xbf16>, vector<256x128xf32> -> vector<256x128xf32>
    %84 = arith.addf %74, %83 : vector<256x128xf32>
    %c0_61 = arith.constant 0 : index
    %c0_62 = arith.constant 0 : index
    %85 = vector.load %arg5[%c0_61, %c0_62] : memref<256x128xf32, #tpu.memory_space<vmem>>, vector<256x128xf32>
    tpu.vector_store %arg5[%c0_61, %c0_62], %84 {strides = array<i32>} : memref<256x128xf32, #tpu.memory_space<vmem>>, vector<256x128xf32>,
    %c0_63 = arith.constant 0 : index
    %c0_64 = arith.constant 0 : index
    %86 = vector.load %arg6[%c0_63, %c0_64] : memref<2x128xf32, #tpu.memory_space<vmem>>, vector<1x128xf32>
    %cst_65 = arith.constant dense<0.000000e+00> : vector<128xf32>
    %87 = vector.multi_reduction <add>, %84, %cst_65 [0] : vector<256x128xf32> to vector<128xf32>
    %88 = vector.shape_cast %87 : vector<128xf32> to vector<1x128xf32>
    %89 = arith.addf %86, %88 : vector<1x128xf32>
    %c0_66 = arith.constant 0 : index
    %c0_67 = arith.constant 0 : index
    %90 = vector.load %arg6[%c0_66, %c0_67] : memref<2x128xf32, #tpu.memory_space<vmem>>, vector<1x128xf32>
    tpu.vector_store %arg6[%c0_66, %c0_67], %89 {strides = array<i32>} : memref<2x128xf32, #tpu.memory_space<vmem>>, vector<1x128xf32>,
    %c1_68 = arith.constant 1 : index
    %c0_69 = arith.constant 0 : index
    %91 = vector.load %arg6[%c1_68, %c0_69] : memref<2x128xf32, #tpu.memory_space<vmem>>, vector<1x128xf32>
    %92 = arith.mulf %84, %84 : vector<256x128xf32>
    %cst_70 = arith.constant dense<0.000000e+00> : vector<128xf32>
    %93 = vector.multi_reduction <add>, %92, %cst_70 [0] : vector<256x128xf32> to vector<128xf32>
    %94 = vector.shape_cast %93 : vector<128xf32> to vector<1x128xf32>
    %95 = arith.addf %91, %94 : vector<1x128xf32>
    %c1_71 = arith.constant 1 : index
    %c0_72 = arith.constant 0 : index
    %96 = vector.load %arg6[%c1_71, %c0_72] : memref<2x128xf32, #tpu.memory_space<vmem>>, vector<1x128xf32>
    tpu.vector_store %arg6[%c1_71, %c0_72], %95 {strides = array<i32>} : memref<2x128xf32, #tpu.memory_space<vmem>>, vector<1x128xf32>,
    return
  }
  func.func @transform_0(%arg0: i32) -> (i32, i32, i32) {
    %c0_i32 = arith.constant 0 : i32
    %c0_i32_0 = arith.constant 0 : i32
    %c0_i32_1 = arith.constant 0 : i32
    return %arg0, %c0_i32, %c0_i32_0 : i32, i32, i32
  }
  func.func @transform_1(%arg0: i32) -> (i32, i32) {
    %c0_i32 = arith.constant 0 : i32
    %c0_i32_0 = arith.constant 0 : i32
    %c0_i32_1 = arith.constant 0 : i32
    return %c0_i32, %c0_i32_0 : i32, i32
  }
  func.func @transform_2(%arg0: i32) -> (i32, i32) {
    %c0_i32 = arith.constant 0 : i32
    %c0_i32_0 = arith.constant 0 : i32
    %c0_i32_1 = arith.constant 0 : i32
    return %c0_i32, %c0_i32_0 : i32, i32
  }
  func.func @transform_3(%arg0: i32) -> (i32, i32, i32) {
    %c0_i32 = arith.constant 0 : i32
    %c0_i32_0 = arith.constant 0 : i32
    %c0_i32_1 = arith.constant 0 : i32
    %c0_i32_2 = arith.constant 0 : i32
    return %c0_i32, %c0_i32_0, %c0_i32_1 : i32, i32, i32
  }
  func.func @transform_4(%arg0: i32) -> (i32, i32) {
    %c0_i32 = arith.constant 0 : i32
    %c0_i32_0 = arith.constant 0 : i32
    return %arg0, %c0_i32 : i32, i32
  }
  func.func @transform_5(%arg0: i32) -> (i32, i32) {
    %c0_i32 = arith.constant 0 : i32
    %c0_i32_0 = arith.constant 0 : i32
    %c0_i32_1 = arith.constant 0 : i32
    return %c0_i32, %c0_i32_0 : i32, i32
  }
}

module attributes {stable_mosaic.version = 11 : i64} {
  func.func @_pass2_bn1_relu_conv1x1_stats(%arg0: i32, %arg1: memref<256x128xf32, #tpu.memory_space<vmem>>, %arg2: memref<2x128xf32, #tpu.memory_space<vmem>>, %arg3: memref<128x128xbf16, #tpu.memory_space<vmem>>, %arg4: memref<2x128xf32, #tpu.memory_space<vmem>>) attributes {dimension_semantics = [#tpu.dimension_semantics<arbitrary>], iteration_bounds = array<i64: 2>, scalar_prefetch = 0 : i64, scratch_operands = 0 : i64, tpu.core_type = #tpu.core_type<tc>, window_params = [{transform_indices = @transform_0, window_bounds = array<i64: 256, 128>}, {pipeline_mode = #tpu.pipeline_mode<synchronous>, transform_indices = @transform_1, window_bounds = array<i64: 2, 128>}, {pipeline_mode = #tpu.pipeline_mode<synchronous>, transform_indices = @transform_2, window_bounds = array<i64: 128, 128>}, {pipeline_mode = #tpu.pipeline_mode<synchronous>, transform_indices = @transform_3, window_bounds = array<i64: 2, 128>}]} {
    %c0_i32 = arith.constant 0 : i32
    %0 = arith.cmpi eq, %arg0, %c0_i32 : i32
    %1 = arith.extui %0 : i1 to i32
    %c0_i32_0 = arith.constant 0 : i32
    %2 = arith.cmpi ne, %1, %c0_i32_0 : i32
    scf.if %2 {
      %cst_18 = arith.constant 0.000000e+00 : f32
      %26 = vector.broadcast %cst_18 : f32 to vector<2x128xf32>
      %c0_19 = arith.constant 0 : index
      %c0_20 = arith.constant 0 : index
      %27 = vector.load %arg4[%c0_19, %c0_20] : memref<2x128xf32, #tpu.memory_space<vmem>>, vector<2x128xf32>
      tpu.vector_store %arg4[%c0_19, %c0_20], %26 {strides = array<i32>} : memref<2x128xf32, #tpu.memory_space<vmem>>, vector<2x128xf32>,
    } else {
    }
    %c0 = arith.constant 0 : index
    %c0_1 = arith.constant 0 : index
    %3 = vector.load %arg1[%c0, %c0_1] : memref<256x128xf32, #tpu.memory_space<vmem>>, vector<256x128xf32>
    %c0_2 = arith.constant 0 : index
    %c0_3 = arith.constant 0 : index
    %4 = vector.load %arg2[%c0_2, %c0_3] : memref<2x128xf32, #tpu.memory_space<vmem>>, vector<1x128xf32>
    %5 = vector.broadcast %4 : vector<1x128xf32> to vector<256x128xf32>
    %6 = arith.mulf %3, %5 : vector<256x128xf32>
    %c1 = arith.constant 1 : index
    %c0_4 = arith.constant 0 : index
    %7 = vector.load %arg2[%c1, %c0_4] : memref<2x128xf32, #tpu.memory_space<vmem>>, vector<1x128xf32>
    %8 = vector.broadcast %7 : vector<1x128xf32> to vector<256x128xf32>
    %9 = arith.addf %6, %8 : vector<256x128xf32>
    %cst = arith.constant 0.000000e+00 : f32
    %10 = vector.broadcast %cst : f32 to vector<256x128xf32>
    %11 = arith.maximumf %9, %10 : vector<256x128xf32>
    %12 = arith.truncf %11 : vector<256x128xf32> to vector<256x128xbf16>
    %c0_5 = arith.constant 0 : index
    %c0_6 = arith.constant 0 : index
    %13 = vector.load %arg3[%c0_5, %c0_6] : memref<128x128xbf16, #tpu.memory_space<vmem>>, vector<128x128xbf16>
    %cst_7 = arith.constant dense<0.000000e+00> : vector<256x128xf32>
    %14 = tpu.matmul %12, %13, %cst_7 {dimension_numbers = #tpu.dot_dimension_numbers<[1], [0], [0], [1], [0, 0, 1, 1], [], []>} : vector<256x128xbf16>, vector<128x128xbf16>, vector<256x128xf32> -> vector<256x128xf32>
    %c0_8 = arith.constant 0 : index
    %c0_9 = arith.constant 0 : index
    %15 = vector.load %arg4[%c0_8, %c0_9] : memref<2x128xf32, #tpu.memory_space<vmem>>, vector<1x128xf32>
    %cst_10 = arith.constant dense<0.000000e+00> : vector<128xf32>
    %16 = vector.multi_reduction <add>, %14, %cst_10 [0] : vector<256x128xf32> to vector<128xf32>
    %17 = vector.shape_cast %16 : vector<128xf32> to vector<1x128xf32>
    %18 = arith.addf %15, %17 : vector<1x128xf32>
    %c0_11 = arith.constant 0 : index
    %c0_12 = arith.constant 0 : index
    %19 = vector.load %arg4[%c0_11, %c0_12] : memref<2x128xf32, #tpu.memory_space<vmem>>, vector<1x128xf32>
    tpu.vector_store %arg4[%c0_11, %c0_12], %18 {strides = array<i32>} : memref<2x128xf32, #tpu.memory_space<vmem>>, vector<1x128xf32>,
    %c1_13 = arith.constant 1 : index
    %c0_14 = arith.constant 0 : index
    %20 = vector.load %arg4[%c1_13, %c0_14] : memref<2x128xf32, #tpu.memory_space<vmem>>, vector<1x128xf32>
    %21 = arith.mulf %14, %14 : vector<256x128xf32>
    %cst_15 = arith.constant dense<0.000000e+00> : vector<128xf32>
    %22 = vector.multi_reduction <add>, %21, %cst_15 [0] : vector<256x128xf32> to vector<128xf32>
    %23 = vector.shape_cast %22 : vector<128xf32> to vector<1x128xf32>
    %24 = arith.addf %20, %23 : vector<1x128xf32>
    %c1_16 = arith.constant 1 : index
    %c0_17 = arith.constant 0 : index
    %25 = vector.load %arg4[%c1_16, %c0_17] : memref<2x128xf32, #tpu.memory_space<vmem>>, vector<1x128xf32>
    tpu.vector_store %arg4[%c1_16, %c0_17], %24 {strides = array<i32>} : memref<2x128xf32, #tpu.memory_space<vmem>>, vector<1x128xf32>,
    return
  }
  func.func @transform_0(%arg0: i32) -> (i32, i32) {
    %c0_i32 = arith.constant 0 : i32
    %c0_i32_0 = arith.constant 0 : i32
    return %arg0, %c0_i32 : i32, i32
  }
  func.func @transform_1(%arg0: i32) -> (i32, i32) {
    %c0_i32 = arith.constant 0 : i32
    %c0_i32_0 = arith.constant 0 : i32
    %c0_i32_1 = arith.constant 0 : i32
    return %c0_i32, %c0_i32_0 : i32, i32
  }
  func.func @transform_2(%arg0: i32) -> (i32, i32) {
    %c0_i32 = arith.constant 0 : i32
    %c0_i32_0 = arith.constant 0 : i32
    %c0_i32_1 = arith.constant 0 : i32
    return %c0_i32, %c0_i32_0 : i32, i32
  }
  func.func @transform_3(%arg0: i32) -> (i32, i32) {
    %c0_i32 = arith.constant 0 : i32
    %c0_i32_0 = arith.constant 0 : i32
    %c0_i32_1 = arith.constant 0 : i32
    return %c0_i32, %c0_i32_0 : i32, i32
  }
}

module attributes {stable_mosaic.version = 11 : i64} {
  func.func @_pass3_finalize(%arg0: i32, %arg1: memref<256x128xf32, #tpu.memory_space<vmem>>, %arg2: memref<256x128xf32, #tpu.memory_space<vmem>>, %arg3: memref<2x128xf32, #tpu.memory_space<vmem>>, %arg4: memref<2x128xf32, #tpu.memory_space<vmem>>, %arg5: memref<128x128xbf16, #tpu.memory_space<vmem>>, %arg6: memref<256x128xf32, #tpu.memory_space<vmem>>) attributes {dimension_semantics = [#tpu.dimension_semantics<parallel>], iteration_bounds = array<i64: 2>, scalar_prefetch = 0 : i64, scratch_operands = 0 : i64, tpu.core_type = #tpu.core_type<tc>, window_params = [{transform_indices = @transform_0, window_bounds = array<i64: 256, 128>}, {transform_indices = @transform_1, window_bounds = array<i64: 256, 128>}, {pipeline_mode = #tpu.pipeline_mode<synchronous>, transform_indices = @transform_2, window_bounds = array<i64: 2, 128>}, {pipeline_mode = #tpu.pipeline_mode<synchronous>, transform_indices = @transform_3, window_bounds = array<i64: 2, 128>}, {pipeline_mode = #tpu.pipeline_mode<synchronous>, transform_indices = @transform_4, window_bounds = array<i64: 128, 128>}, {transform_indices = @transform_5, window_bounds = array<i64: 256, 128>}]} {
    %c0 = arith.constant 0 : index
    %c0_0 = arith.constant 0 : index
    %0 = vector.load %arg1[%c0, %c0_0] : memref<256x128xf32, #tpu.memory_space<vmem>>, vector<256x128xf32>
    %c0_1 = arith.constant 0 : index
    %c0_2 = arith.constant 0 : index
    %1 = vector.load %arg3[%c0_1, %c0_2] : memref<2x128xf32, #tpu.memory_space<vmem>>, vector<1x128xf32>
    %2 = vector.broadcast %1 : vector<1x128xf32> to vector<256x128xf32>
    %3 = arith.mulf %0, %2 : vector<256x128xf32>
    %c1 = arith.constant 1 : index
    %c0_3 = arith.constant 0 : index
    %4 = vector.load %arg3[%c1, %c0_3] : memref<2x128xf32, #tpu.memory_space<vmem>>, vector<1x128xf32>
    %5 = vector.broadcast %4 : vector<1x128xf32> to vector<256x128xf32>
    %6 = arith.addf %3, %5 : vector<256x128xf32>
    %cst = arith.constant 0.000000e+00 : f32
    %7 = vector.broadcast %cst : f32 to vector<256x128xf32>
    %8 = arith.maximumf %6, %7 : vector<256x128xf32>
    %9 = arith.truncf %8 : vector<256x128xf32> to vector<256x128xbf16>
    %c0_4 = arith.constant 0 : index
    %c0_5 = arith.constant 0 : index
    %10 = vector.load %arg5[%c0_4, %c0_5] : memref<128x128xbf16, #tpu.memory_space<vmem>>, vector<128x128xbf16>
    %cst_6 = arith.constant dense<0.000000e+00> : vector<256x128xf32>
    %11 = tpu.matmul %9, %10, %cst_6 {dimension_numbers = #tpu.dot_dimension_numbers<[1], [0], [0], [1], [0, 0, 1, 1], [], []>} : vector<256x128xbf16>, vector<128x128xbf16>, vector<256x128xf32> -> vector<256x128xf32>
    %c0_7 = arith.constant 0 : index
    %c0_8 = arith.constant 0 : index
    %12 = vector.load %arg2[%c0_7, %c0_8] : memref<256x128xf32, #tpu.memory_space<vmem>>, vector<256x128xf32>
    %c0_9 = arith.constant 0 : index
    %c0_10 = arith.constant 0 : index
    %13 = vector.load %arg4[%c0_9, %c0_10] : memref<2x128xf32, #tpu.memory_space<vmem>>, vector<1x128xf32>
    %14 = vector.broadcast %13 : vector<1x128xf32> to vector<256x128xf32>
    %15 = arith.mulf %11, %14 : vector<256x128xf32>
    %c1_11 = arith.constant 1 : index
    %c0_12 = arith.constant 0 : index
    %16 = vector.load %arg4[%c1_11, %c0_12] : memref<2x128xf32, #tpu.memory_space<vmem>>, vector<1x128xf32>
    %17 = vector.broadcast %16 : vector<1x128xf32> to vector<256x128xf32>
    %18 = arith.addf %15, %17 : vector<256x128xf32>
    %19 = arith.addf %12, %18 : vector<256x128xf32>
    %c0_13 = arith.constant 0 : index
    %c0_14 = arith.constant 0 : index
    %20 = vector.load %arg6[%c0_13, %c0_14] : memref<256x128xf32, #tpu.memory_space<vmem>>, vector<256x128xf32>
    tpu.vector_store %arg6[%c0_13, %c0_14], %19 {strides = array<i32>} : memref<256x128xf32, #tpu.memory_space<vmem>>, vector<256x128xf32>,
    return
  }
  func.func @transform_0(%arg0: i32) -> (i32, i32) {
    %c0_i32 = arith.constant 0 : i32
    %c0_i32_0 = arith.constant 0 : i32
    return %arg0, %c0_i32 : i32, i32
  }
  func.func @transform_1(%arg0: i32) -> (i32, i32) {
    %c0_i32 = arith.constant 0 : i32
    %c0_i32_0 = arith.constant 0 : i32
    return %arg0, %c0_i32 : i32, i32
  }
  func.func @transform_2(%arg0: i32) -> (i32, i32) {
    %c0_i32 = arith.constant 0 : i32
    %c0_i32_0 = arith.constant 0 : i32
    %c0_i32_1 = arith.constant 0 : i32
    return %c0_i32, %c0_i32_0 : i32, i32
  }
  func.func @transform_3(%arg0: i32) -> (i32, i32) {
    %c0_i32 = arith.constant 0 : i32
    %c0_i32_0 = arith.constant 0 : i32
    %c0_i32_1 = arith.constant 0 : i32
    return %c0_i32, %c0_i32_0 : i32, i32
  }
  func.func @transform_4(%arg0: i32) -> (i32, i32) {
    %c0_i32 = arith.constant 0 : i32
    %c0_i32_0 = arith.constant 0 : i32
    %c0_i32_1 = arith.constant 0 : i32
    return %c0_i32, %c0_i32_0 : i32, i32
  }
  func.func @transform_5(%arg0: i32) -> (i32, i32) {
    %c0_i32 = arith.constant 0 : i32
    %c0_i32_0 = arith.constant 0 : i32
    return %arg0, %c0_i32 : i32, i32
  }
}

</mosaic_0001>

<llo_original>
// kernel: resblock_forward.4
$region0: #{resblock_forward.4}
  #allocation0 [shape = 'u32[]', space=smem, size = 0x4, offset = 0x4, fixed_abs, tag = 'smem constant byte address 0x4 - core index']
  #allocation1 [shape = 'u32[144,128]{1,0:T(1,128)}', space=vmem, size = 0x12000, scoped, tag = 'internal scratch']
  %s0 = inlined_call_operand.vmem [shape: f32[512,128], index: 0, kind: input, shape index: {}]
  %s1 = inlined_call_operand.vmem [shape: f32[2,128], index: 1, kind: input, shape index: {}]
  %s2 = inlined_call_operand.vmem [shape: bf16[128,128], index: 2, kind: input, shape index: {}]
  %s3 = inlined_call_operand.vmem [shape: f32[2,128], index: 3, kind: output, shape index: {}]
  %s4 = sld [smem:[#allocation0]]
  $region49: #{resblock_forward.4} parent=0
    _
  %s6 = ssub.s32 1, %s4
  %s7 = scalar_select 0, %s6, %s4
  loop: start=0, step=1, limit=4
  $region2: #{resblock_forward.4} parent=0 // loop_pre_header
    _
  $region3: #{resblock_forward.4} parent=0 // loop_header
    %s9 = sphi 0, %s13
    %p10 = scmp.ge.s32.totalorder %s9, 4
    %s19 = sphi 0, %s21
    %s22 = sphi 0, %s19
    %s23 = sphi 0, %s22
    %s39 = sphi 0, %s23
    %s43 = sphi 0, %s43
    %s45 = sphi 0, %s43
    %s46 = sphi 0, %s45
    %s60 = sphi 0, %s46
    %s64 = sphi 0, %s64
    %s66 = sphi 0, %s64
    %s67 = sphi 0, %s66
    %s81 = sphi 0, %s67
    %s85 = sphi 0, %s85
    %s87 = sphi 0, %s85
    %s88 = sphi 0, %s87
    %s102 = sphi 0, %s88
  $region4: #{resblock_forward.4} parent=0 // loop_header_branch
    %12 = sbr.rel (%p10) target = $region8
  $region5: #{resblock_forward.4} parent=0 // loop_body
    %s14 = ssub.s32 %s9, 1
    %s15 = ssub.s32 %s9, 2
    %s16 = sadd.s32 %s9, 1
    %s17 = ssub.s32 %s9, %s16
    %p18 = scmp.eq.s32.totalorder %s17, 0
    %s20 = sadd.s32 %s19, 1
    %s21 = scalar_select %p18, %s19, %s20
    %p24 = pneg %p18
    %p25 = scmp.eq.s32.totalorder %s9, 1
    %p26 = por %p24, %p25
    %p27 = scmp.ne.s32.totalorder %s19, %s22
    %p28 = scmp.eq.s32.totalorder %s9, 0
    %p29 = por %p27, %p28
    %p30 = scmp.ne.s32.totalorder %s19, %s22
    %p31 = scmp.eq.s32.totalorder %s14, 1
    %p32 = por %p30, %p31
    %p33 = scmp.ne.s32.totalorder %s22, %s23
    %p34 = scmp.eq.s32.totalorder %s14, 0
    %p35 = por %p33, %p34
    %p36 = scmp.ne.s32.totalorder %s22, %s23
    %p37 = scmp.eq.s32.totalorder %s15, 1
    %p38 = por %p36, %p37
    %p40 = scmp.ne.s32.totalorder %s23, %s39
    %p41 = scmp.eq.s32.totalorder %s15, 0
    %p42 = por %p40, %p41
    %s44 = sadd.s32 %s43, 1
    %p47 = scmp.eq.s32.totalorder %s9, 1
    %p48 = scmp.ne.s32.totalorder %s43, %s45
    %p49 = scmp.eq.s32.totalorder %s9, 0
    %p50 = por %p48, %p49
    %p51 = scmp.ne.s32.totalorder %s43, %s45
    %p52 = scmp.eq.s32.totalorder %s14, 1
    %p53 = por %p51, %p52
    %p54 = scmp.ne.s32.totalorder %s45, %s46
    %p55 = scmp.eq.s32.totalorder %s14, 0
    %p56 = por %p54, %p55
    %p57 = scmp.ne.s32.totalorder %s45, %s46
    %p58 = scmp.eq.s32.totalorder %s15, 1
    %p59 = por %p57, %p58
    %p61 = scmp.ne.s32.totalorder %s46, %s60
    %p62 = scmp.eq.s32.totalorder %s15, 0
    %p63 = por %p61, %p62
    %s65 = sadd.s32 %s64, 1
    %p68 = scmp.eq.s32.totalorder %s9, 1
    %p69 = scmp.ne.s32.totalorder %s64, %s66
    %p70 = scmp.eq.s32.totalorder %s9, 0
    %p71 = por %p69, %p70
    %p72 = scmp.ne.s32.totalorder %s64, %s66
    %p73 = scmp.eq.s32.totalorder %s14, 1
    %p74 = por %p72, %p73
    %p75 = scmp.ne.s32.totalorder %s66, %s67
    %p76 = scmp.eq.s32.totalorder %s14, 0
    %p77 = por %p75, %p76
    %p78 = scmp.ne.s32.totalorder %s66, %s67
    %p79 = scmp.eq.s32.totalorder %s15, 1
    %p80 = por %p78, %p79
    %p82 = scmp.ne.s32.totalorder %s67, %s81
    %p83 = scmp.eq.s32.totalorder %s15, 0
    %p84 = por %p82, %p83
    %s86 = sadd.s32 %s85, 1
    %p89 = scmp.eq.s32.totalorder %s9, 1
    %p90 = scmp.ne.s32.totalorder %s85, %s87
    %p91 = scmp.eq.s32.totalorder %s9, 0
    %p92 = por %p90, %p91
    %p93 = scmp.ne.s32.totalorder %s85, %s87
    %p94 = scmp.eq.s32.totalorder %s14, 1
    %p95 = por %p93, %p94
    %p96 = scmp.ne.s32.totalorder %s87, %s88
    %p97 = scmp.eq.s32.totalorder %s14, 0
    %p98 = por %p96, %p97
    %p99 = scmp.ne.s32.totalorder %s87, %s88
    %p100 = scmp.eq.s32.totalorder %s15, 1
    %p101 = por %p99, %p100
    %p103 = scmp.ne.s32.totalorder %s88, %s102
    %p104 = scmp.eq.s32.totalorder %s15, 0
    %p105 = por %p103, %p104
    %p106 = scmp.le.s32.totalorder 1, %s9
    %p107 = scmp.lt.s32.totalorder %s9, 3
    %p108 = pnand %p106, %p107
    %p109 = pneg %p108
    // Predicated region
    $region9: #{resblock_forward.4} parent=5 // pred_check
      _
    $region10: #{resblock_forward.4} parent=5 // pred_check_branch
      %111 = sbr.rel (%p108) target = $region12
    $region11: #{resblock_forward.4} parent=5 // pred_region
      %s112 = ssub.s32 %s9, 1
      // Predicated region
      $region13: #{resblock_forward.4} parent=11 // pred_check
        %p113 = pneg %p56
      $region14: #{resblock_forward.4} parent=11 // pred_check_branch
        %115 = sbr.rel (%p113) target = $region16
      $region15: #{resblock_forward.4} parent=11 // pred_region
        _
      $region16: #{resblock_forward.4} parent=11 // pred_fallthru
        _
      // Predicated region
      $region17: #{resblock_forward.4} parent=11 // pred_check
        %p116 = pneg %p77
      $region18: #{resblock_forward.4} parent=11 // pred_check_branch
        %118 = sbr.rel (%p116) target = $region20
      $region19: #{resblock_forward.4} parent=11 // pred_region
        _
      $region20: #{resblock_forward.4} parent=11 // pred_fallthru
        _
    $region12: #{resblock_forward.4} parent=5 // pred_fallthru
      _
    %p119 = scmp.lt.s32.totalorder %s9, 2
    // Predicated region
    $region21: #{resblock_forward.4} parent=5 // pred_check
      %p120 = pneg %p119
    $region22: #{resblock_forward.4} parent=5 // pred_check_branch
      %122 = sbr.rel (%p120) target = $region24
    $region23: #{resblock_forward.4} parent=5 // pred_region
      // Predicated region
      $region25: #{resblock_forward.4} parent=23 // pred_check
        %p123 = pneg %p29
      $region26: #{resblock_forward.4} parent=23 // pred_check_branch
        %125 = sbr.rel (%p123) target = $region28
      $region27: #{resblock_forward.4} parent=23 // pred_region
        %s126 = smul.u32 32, %s9
        %p127 = scmp.lt.s32.totalorder %s126, 63
        %s128 = scalar_select %p127, %s126, 63
        %s129 = smul.addr %s128, 8
        %s130 = scalar_lea.vmem %s0, %s129
        %s131 = smul.u32 32, %s9
      $region28: #{resblock_forward.4} parent=23 // pred_fallthru
        _
    $region24: #{resblock_forward.4} parent=5 // pred_fallthru
      _
    %p132 = scmp.le.s32.totalorder 1, %s9
    %p133 = scmp.lt.s32.totalorder %s9, 3
    %p134 = pnand %p132, %p133
    %p135 = pneg %p134
    // Predicated region
    $region29: #{resblock_forward.4} parent=5 // pred_check
      _
    $region30: #{resblock_forward.4} parent=5 // pred_check_branch
      %137 = sbr.rel (%p134) target = $region32
    $region31: #{resblock_forward.4} parent=5 // pred_region
      %s138 = ssub.s32 %s9, 1
      %s139 = smul.u32 32, %s14
      %p140 = scmp.lt.s32.totalorder %s139, 63
      %s141 = scalar_select %p140, %s139, 63
      %s142 = smul.addr %s141, 8
      %s143 = scalar_lea.vmem %s0, %s142
      %p144 = pneg %p35
      %p145 = pneg %p32
      %p146 = pneg %p56
      %p147 = pneg %p53
      %p148 = pneg %p77
      %p149 = pneg %p74
      %p150 = pneg %p98
      %p151 = pneg %p95
      %s152 = smul.u32 32, %s14
      %p153 = scmp.lt.s32.totalorder %s152, 63
      %s154 = scalar_select %p153, %s152, 63
      %s155 = smul.addr %s154, 8
      %s156 = scalar_lea.vmem %s0, %s155
      %s157 = smul.u32 32, %s14
      %p159 = scmp.eq.s32.totalorder %s14, 0
      // Predicated region
      $region33: #{resblock_forward.4} parent=31 // pred_check
        %p160 = pneg %p159
      $region34: #{resblock_forward.4} parent=31 // pred_check_branch
        %162 = sbr.rel (%p160) target = $region36
      $region35: #{resblock_forward.4} parent=31 // pred_region
        %163 = vst [vmem:[%s3] sm:$0x3] 0.0
      $region36: #{resblock_forward.4} parent=31 // pred_fallthru
        _
      %v164 = vld [vmem:[%s156] sm:$0xff]
      %v165 = vld [vmem:[%s156 + $0x8] sm:$0xff]
      %v166 = vld [vmem:[%s156 + $0x10] sm:$0xff]
      %v167 = vld [vmem:[%s156 + $0x18] sm:$0xff]
      %v168 = vld [vmem:[%s156 + $0x20] sm:$0xff]
      %v169 = vld [vmem:[%s156 + $0x28] sm:$0xff]
      %v170 = vld [vmem:[%s156 + $0x30] sm:$0xff]
      %v171 = vld [vmem:[%s156 + $0x38] sm:$0xff]
      %v172 = vld [vmem:[%s156 + $0x40] sm:$0xff]
      %v173 = vld [vmem:[%s156 + $0x48] sm:$0xff]
      %v174 = vld [vmem:[%s156 + $0x50] sm:$0xff]
      %v175 = vld [vmem:[%s156 + $0x58] sm:$0xff]
      %v176 = vld [vmem:[%s156 + $0x60] sm:$0xff]
      %v177 = vld [vmem:[%s156 + $0x68] sm:$0xff]
      %v178 = vld [vmem:[%s156 + $0x70] sm:$0xff]
      %v179 = vld [vmem:[%s156 + $0x78] sm:$0xff]
      %v180 = vld [vmem:[%s156 + $0x80] sm:$0xff]
      %v181 = vld [vmem:[%s156 + $0x88] sm:$0xff]
      %v182 = vld [vmem:[%s156 + $0x90] sm:$0xff]
      %v183 = vld [vmem:[%s156 + $0x98] sm:$0xff]
      %v184 = vld [vmem:[%s156 + $0xa0] sm:$0xff]
      %v185 = vld [vmem:[%s156 + $0xa8] sm:$0xff]
      %v186 = vld [vmem:[%s156 + $0xb0] sm:$0xff]
      %v187 = vld [vmem:[%s156 + $0xb8] sm:$0xff]
      %v188 = vld [vmem:[%s156 + $0xc0] sm:$0xff]
      %v189 = vld [vmem:[%s156 + $0xc8] sm:$0xff]
      %v190 = vld [vmem:[%s156 + $0xd0] sm:$0xff]
      %v191 = vld [vmem:[%s156 + $0xd8] sm:$0xff]
      %v192 = vld [vmem:[%s156 + $0xe0] sm:$0xff]
      %v193 = vld [vmem:[%s156 + $0xe8] sm:$0xff]
      %v194 = vld [vmem:[%s156 + $0xf0] sm:$0xff]
      %v195 = vld [vmem:[%s156 + $0xf8] sm:$0xff]
      %v196 = vld [vmem:[%s1] sm:$0x1]
      %v197 = vlaneseq
      %v198 = vshrl.u32 %v197, 7
      %v199 = vsub.s32 0, %v198
      %v200 = vrot.slane %v196, %v199
      %v201 = vmul.f32 %v164, %v200
      %v202 = vmul.f32 %v165, %v200
      %v203 = vmul.f32 %v166, %v200
      %v204 = vmul.f32 %v167, %v200
      %v205 = vmul.f32 %v168, %v200
      %v206 = vmul.f32 %v169, %v200
      %v207 = vmul.f32 %v170, %v200
      %v208 = vmul.f32 %v171, %v200
      %v209 = vmul.f32 %v172, %v200
      %v210 = vmul.f32 %v173, %v200
      %v211 = vmul.f32 %v174, %v200
      %v212 = vmul.f32 %v175, %v200
      %v213 = vmul.f32 %v176, %v200
      %v214 = vmul.f32 %v177, %v200
      %v215 = vmul.f32 %v178, %v200
      %v216 = vmul.f32 %v179, %v200
      %v217 = vmul.f32 %v180, %v200
      %v218 = vmul.f32 %v181, %v200
      %v219 = vmul.f32 %v182, %v200
      %v220 = vmul.f32 %v183, %v200
      %v221 = vmul.f32 %v184, %v200
      %v222 = vmul.f32 %v185, %v200
      %v223 = vmul.f32 %v186, %v200
      %v224 = vmul.f32 %v187, %v200
      %v225 = vmul.f32 %v188, %v200
      %v226 = vmul.f32 %v189, %v200
      %v227 = vmul.f32 %v190, %v200
      %v228 = vmul.f32 %v191, %v200
      %v229 = vmul.f32 %v192, %v200
      %v230 = vmul.f32 %v193, %v200
      %v231 = vmul.f32 %v194, %v200
      %v232 = vmul.f32 %v195, %v200
      %v233 = vld [vmem:[%s1 + $0x1] sm:$0x1]
      %v234 = vlaneseq
      %v235 = vshrl.u32 %v234, 7
      %v236 = vsub.s32 0, %v235
      %v237 = vrot.slane %v233, %v236
      %v238 = vadd.f32 %v201, %v237
      %v239 = vadd.f32 %v202, %v237
      %v240 = vadd.f32 %v203, %v237
      %v241 = vadd.f32 %v204, %v237
      %v242 = vadd.f32 %v205, %v237
      %v243 = vadd.f32 %v206, %v237
      %v244 = vadd.f32 %v207, %v237
      %v245 = vadd.f32 %v208, %v237
      %v246 = vadd.f32 %v209, %v237
      %v247 = vadd.f32 %v210, %v237
      %v248 = vadd.f32 %v211, %v237
      %v249 = vadd.f32 %v212, %v237
      %v250 = vadd.f32 %v213, %v237
      %v251 = vadd.f32 %v214, %v237
      %v252 = vadd.f32 %v215, %v237
      %v253 = vadd.f32 %v216, %v237
      %v254 = vadd.f32 %v217, %v237
      %v255 = vadd.f32 %v218, %v237
      %v256 = vadd.f32 %v219, %v237
      %v257 = vadd.f32 %v220, %v237
      %v258 = vadd.f32 %v221, %v237
      %v259 = vadd.f32 %v222, %v237
      %v260 = vadd.f32 %v223, %v237
      %v261 = vadd.f32 %v224, %v237
      %v262 = vadd.f32 %v225, %v237
      %v263 = vadd.f32 %v226, %v237
      %v264 = vadd.f32 %v227, %v237
      %v265 = vadd.f32 %v228, %v237
      %v266 = vadd.f32 %v229, %v237
      %v267 = vadd.f32 %v230, %v237
      %v268 = vadd.f32 %v231, %v237
      %v269 = vadd.f32 %v232, %v237
      %v270 = vmax.f32 %v238, 0.0
      %v271 = vmax.f32 %v239, 0.0
      %v272 = vmax.f32 %v240, 0.0
      %v273 = vmax.f32 %v241, 0.0
      %v274 = vmax.f32 %v242, 0.0
      %v275 = vmax.f32 %v243, 0.0
      %v276 = vmax.f32 %v244, 0.0
      %v277 = vmax.f32 %v245, 0.0
      %v278 = vmax.f32 %v246, 0.0
      %v279 = vmax.f32 %v247, 0.0
      %v280 = vmax.f32 %v248, 0.0
      %v281 = vmax.f32 %v249, 0.0
      %v282 = vmax.f32 %v250, 0.0
      %v283 = vmax.f32 %v251, 0.0
      %v284 = vmax.f32 %v252, 0.0
      %v285 = vmax.f32 %v253, 0.0
      %v286 = vmax.f32 %v254, 0.0
      %v287 = vmax.f32 %v255, 0.0
      %v288 = vmax.f32 %v256, 0.0
      %v289 = vmax.f32 %v257, 0.0
      %v290 = vmax.f32 %v258, 0.0
      %v291 = vmax.f32 %v259, 0.0
      %v292 = vmax.f32 %v260, 0.0
      %v293 = vmax.f32 %v261, 0.0
      %v294 = vmax.f32 %v262, 0.0
      %v295 = vmax.f32 %v263, 0.0
      %v296 = vmax.f32 %v264, 0.0
      %v297 = vmax.f32 %v265, 0.0
      %v298 = vmax.f32 %v266, 0.0
      %v299 = vmax.f32 %v267, 0.0
      %v300 = vmax.f32 %v268, 0.0
      %v301 = vmax.f32 %v269, 0.0
      %v302 = vpack.c.bf16 %v271, %v270
      %v303 = vpack.c.bf16 %v273, %v272
      %v304 = vpack.c.bf16 %v275, %v274
      %v305 = vpack.c.bf16 %v277, %v276
      %v306 = vpack.c.bf16 %v279, %v278
      %v307 = vpack.c.bf16 %v281, %v280
      %v308 = vpack.c.bf16 %v283, %v282
      %v309 = vpack.c.bf16 %v285, %v284
      %v310 = vpack.c.bf16 %v287, %v286
      %v311 = vpack.c.bf16 %v289, %v288
      %v312 = vpack.c.bf16 %v291, %v290
      %v313 = vpack.c.bf16 %v293, %v292
      %v314 = vpack.c.bf16 %v295, %v294
      %v315 = vpack.c.bf16 %v297, %v296
      %v316 = vpack.c.bf16 %v299, %v298
      %v317 = vpack.c.bf16 %v301, %v300
      %v318 = vld [vmem:[%s2] sm:$0xf]
      %v319 = vld [vmem:[%s2 + $0x4] sm:$0xf]
      %v320 = vld [vmem:[%s2 + $0x8] sm:$0xf]
      %v321 = vld [vmem:[%s2 + $0xc] sm:$0xf]
      %v322 = vld [vmem:[%s2 + $0x10] sm:$0xf]
      %v323 = vld [vmem:[%s2 + $0x14] sm:$0xf]
      %v324 = vld [vmem:[%s2 + $0x18] sm:$0xf]
      %v325 = vld [vmem:[%s2 + $0x1c] sm:$0xf]
      %v326 = vld [vmem:[%s2 + $0x20] sm:$0xf]
      %v327 = vld [vmem:[%s2 + $0x24] sm:$0xf]
      %v328 = vld [vmem:[%s2 + $0x28] sm:$0xf]
      %v329 = vld [vmem:[%s2 + $0x2c] sm:$0xf]
      %v330 = vld [vmem:[%s2 + $0x30] sm:$0xf]
      %v331 = vld [vmem:[%s2 + $0x34] sm:$0xf]
      %v332 = vld [vmem:[%s2 + $0x38] sm:$0xf]
      %v333 = vld [vmem:[%s2 + $0x3c] sm:$0xf]
      %v350 = vunpack.c.l.b16 %v318
      %v351 = vunpack.c.l.b16 %v319
      %v352 = vunpack.c.l.b16 %v320
      %v353 = vunpack.c.l.b16 %v321
      %v354 = vunpack.c.l.b16 %v322
      %v355 = vunpack.c.l.b16 %v323
      %v356 = vunpack.c.l.b16 %v324
      %v357 = vunpack.c.l.b16 %v325
      %v358 = vunpack.c.l.b16 %v326
      %v359 = vunpack.c.l.b16 %v327
      %v360 = vunpack.c.l.b16 %v328
      %v361 = vunpack.c.l.b16 %v329
      %v362 = vunpack.c.l.b16 %v330
      %v363 = vunpack.c.l.b16 %v331
      %v364 = vunpack.c.l.b16 %v332
      %v365 = vunpack.c.l.b16 %v333
      %v366 = vpack.c.b16 %v351, %v350
      %v367 = vpack.c.b16 %v353, %v352
      %v368 = vpack.c.b16 %v355, %v354
      %v369 = vpack.c.b16 %v357, %v356
      %v370 = vpack.c.b16 %v359, %v358
      %v371 = vpack.c.b16 %v361, %v360
      %v372 = vpack.c.b16 %v363, %v362
      %v373 = vpack.c.b16 %v365, %v364
      %382 = vmatprep.subr.bf16.mxu0 0
      %383 = vmatpush1.bf16.msra.mxu0 %v366
      %384 = vmatprep.subr.bf16.mxu0 0
      %385 = vmatpush1.bf16.msra.mxu0 %v367
      %386 = vmatprep.subr.bf16.mxu0 0
      %387 = vmatpush1.bf16.msra.mxu0 %v368
      %388 = vmatprep.subr.bf16.mxu0 0
      %389 = vmatpush1.bf16.msra.mxu0 %v369
      %390 = vmatprep.subr.bf16.mxu0 0
      %391 = vmatpush1.bf16.msra.mxu0 %v370
      %392 = vmatprep.subr.bf16.mxu0 0
      %393 = vmatpush1.bf16.msra.mxu0 %v371
      %394 = vmatprep.subr.bf16.mxu0 0
      %395 = vmatpush1.bf16.msra.mxu0 %v372
      %396 = vmatprep.subr.bf16.mxu0 0
      %397 = vmatpush1.bf16.msra.mxu0 %v373
      %398 = vmatprep.subr.bf16.mxu0 0
      %399 = vmatpush1.bf16.msra.mxu0 0
      %400 = vmatprep.subr.bf16.mxu0 0
      %401 = vmatpush1.bf16.msra.mxu0 0
      %402 = vmatprep.subr.bf16.mxu0 0
      %403 = vmatpush1.bf16.msra.mxu0 0
      %404 = vmatprep.subr.bf16.mxu0 0
      %405 = vmatpush1.bf16.msra.mxu0 0
      %406 = vmatprep.subr.bf16.mxu0 0
      %407 = vmatpush1.bf16.msra.mxu0 0
      %408 = vmatprep.subr.bf16.mxu0 0
      %409 = vmatpush1.bf16.msra.mxu0 0
      %410 = vmatprep.subr.bf16.mxu0 0
      %411 = vmatpush1.bf16.msra.mxu0 0
      %412 = vmatprep.subr.bf16.mxu0 0
      %413 = vmatpush1.bf16.msra.mxu0 0
      %414 = vmatprep.mubr.bf16.mxu0 0
      %415 = vmatmul.mubr.bf16.gmra.mrb[0].mxu0 %v302
      %v416 = vpop.f32.mrb[0].mxu0
      %v417 = vadd.f32 0.0, %v416
      %v418 = vpop.f32.mrb[0].mxu0
      %v419 = vpop.f32.mrb[0].mxu0
      %v420 = vadd.f32 0.0, %v419
      %v421 = vpop.f32.mrb[0].mxu0
      %422 = vmatprep.mubr.bf16.mxu0 0
      %423 = vmatmul.mubr.bf16.gmra.mrb[0].mxu0 %v303
      %v424 = vpop.f32.mrb[0].mxu0
      %v425 = vadd.f32 0.0, %v424
      %v426 = vpop.f32.mrb[0].mxu0
      %v427 = vpop.f32.mrb[0].mxu0
      %v428 = vadd.f32 0.0, %v427
      %v429 = vpop.f32.mrb[0].mxu0
      %430 = vmatprep.mubr.bf16.mxu0 0
      %431 = vmatmul.mubr.bf16.gmra.mrb[0].mxu0 %v304
      %v432 = vpop.f32.mrb[0].mxu0
      %v433 = vadd.f32 0.0, %v432
      %v434 = vpop.f32.mrb[0].mxu0
      %v435 = vpop.f32.mrb[0].mxu0
      %v436 = vadd.f32 0.0, %v435
      %v437 = vpop.f32.mrb[0].mxu0
      %438 = vmatprep.mubr.bf16.mxu0 0
      %439 = vmatmul.mubr.bf16.gmra.mrb[0].mxu0 %v305
      %v440 = vpop.f32.mrb[0].mxu0
      %v441 = vadd.f32 0.0, %v440
      %v442 = vpop.f32.mrb[0].mxu0
      %v443 = vpop.f32.mrb[0].mxu0
      %v444 = vadd.f32 0.0, %v443
      %v445 = vpop.f32.mrb[0].mxu0
      %446 = vmatprep.mubr.bf16.mxu0 0
      %447 = vmatmul.mubr.bf16.gmra.mrb[0].mxu0 %v306
      %v448 = vpop.f32.mrb[0].mxu0
      %v449 = vadd.f32 0.0, %v448
      %v450 = vpop.f32.mrb[0].mxu0
      %v451 = vpop.f32.mrb[0].mxu0
      %v452 = vadd.f32 0.0, %v451
      %v453 = vpop.f32.mrb[0].mxu0
      %454 = vmatprep.mubr.bf16.mxu0 0
      %455 = vmatmul.mubr.bf16.gmra.mrb[0].mxu0 %v307
      %v456 = vpop.f32.mrb[0].mxu0
      %v457 = vadd.f32 0.0, %v456
      %v458 = vpop.f32.mrb[0].mxu0
      %v459 = vpop.f32.mrb[0].mxu0
      %v460 = vadd.f32 0.0, %v459
      %v461 = vpop.f32.mrb[0].mxu0
      %462 = vmatprep.mubr.bf16.mxu0 0
      %463 = vmatmul.mubr.bf16.gmra.mrb[0].mxu0 %v308
      %v464 = vpop.f32.mrb[0].mxu0
      %v465 = vadd.f32 0.0, %v464
      %v466 = vpop.f32.mrb[0].mxu0
      %v467 = vpop.f32.mrb[0].mxu0
      %v468 = vadd.f32 0.0, %v467
      %v469 = vpop.f32.mrb[0].mxu0
      %470 = vmatprep.mubr.bf16.mxu0 0
      %471 = vmatmul.mubr.bf16.gmra.mrb[0].mxu0 %v309
      %v472 = vpop.f32.mrb[0].mxu0
      %v473 = vadd.f32 0.0, %v472
      %v474 = vpop.f32.mrb[0].mxu0
      %v475 = vpop.f32.mrb[0].mxu0
      %v476 = vadd.f32 0.0, %v475
      %v477 = vpop.f32.mrb[0].mxu0
      %478 = vmatprep.mubr.bf16.mxu0 0
      %479 = vmatmul.mubr.bf16.gmra.mrb[0].mxu0 %v310
      %v480 = vpop.f32.mrb[0].mxu0
      %v481 = vadd.f32 0.0, %v480
      %v482 = vpop.f32.mrb[0].mxu0
      %v483 = vpop.f32.mrb[0].mxu0
      %v484 = vadd.f32 0.0, %v483
      %v485 = vpop.f32.mrb[0].mxu0
      %486 = vmatprep.mubr.bf16.mxu0 0
      %487 = vmatmul.mubr.bf16.gmra.mrb[0].mxu0 %v311
      %v488 = vpop.f32.mrb[0].mxu0
      %v489 = vadd.f32 0.0, %v488
      %v490 = vpop.f32.mrb[0].mxu0
      %v491 = vpop.f32.mrb[0].mxu0
      %v492 = vadd.f32 0.0, %v491
      %v493 = vpop.f32.mrb[0].mxu0
      %494 = vmatprep.mubr.bf16.mxu0 0
      %495 = vmatmul.mubr.bf16.gmra.mrb[0].mxu0 %v312
      %v496 = vpop.f32.mrb[0].mxu0
      %v497 = vadd.f32 0.0, %v496
      %v498 = vpop.f32.mrb[0].mxu0
      %v499 = vpop.f32.mrb[0].mxu0
      %v500 = vadd.f32 0.0, %v499
      %v501 = vpop.f32.mrb[0].mxu0
      %502 = vmatprep.mubr.bf16.mxu0 0
      %503 = vmatmul.mubr.bf16.gmra.mrb[0].mxu0 %v313
      %v504 = vpop.f32.mrb[0].mxu0
      %v505 = vadd.f32 0.0, %v504
      %v506 = vpop.f32.mrb[0].mxu0
      %v507 = vpop.f32.mrb[0].mxu0
      %v508 = vadd.f32 0.0, %v507
      %v509 = vpop.f32.mrb[0].mxu0
      %510 = vmatprep.mubr.bf16.mxu0 0
      %511 = vmatmul.mubr.bf16.gmra.mrb[0].mxu0 %v314
      %v512 = vpop.f32.mrb[0].mxu0
      %v513 = vadd.f32 0.0, %v512
      %v514 = vpop.f32.mrb[0].mxu0
      %v515 = vpop.f32.mrb[0].mxu0
      %v516 = vadd.f32 0.0, %v515
      %v517 = vpop.f32.mrb[0].mxu0
      %518 = vmatprep.mubr.bf16.mxu0 0
      %519 = vmatmul.mubr.bf16.gmra.mrb[0].mxu0 %v315
      %v520 = vpop.f32.mrb[0].mxu0
      %v521 = vadd.f32 0.0, %v520
      %v522 = vpop.f32.mrb[0].mxu0
      %v523 = vpop.f32.mrb[0].mxu0
      %v524 = vadd.f32 0.0, %v523
      %v525 = vpop.f32.mrb[0].mxu0
      %526 = vmatprep.mubr.bf16.mxu0 0
      %527 = vmatmul.mubr.bf16.gmra.mrb[0].mxu0 %v316
      %v528 = vpop.f32.mrb[0].mxu0
      %v529 = vadd.f32 0.0, %v528
      %v530 = vpop.f32.mrb[0].mxu0
      %v531 = vpop.f32.mrb[0].mxu0
      %v532 = vadd.f32 0.0, %v531
      %v533 = vpop.f32.mrb[0].mxu0
      %534 = vmatprep.mubr.bf16.mxu0 0
      %535 = vmatmul.mubr.bf16.gmra.mrb[0].mxu0 %v317
      %v536 = vpop.f32.mrb[0].mxu0
      %v537 = vadd.f32 0.0, %v536
      %v538 = vpop.f32.mrb[0].mxu0
      %v539 = vpop.f32.mrb[0].mxu0
      %v540 = vadd.f32 0.0, %v539
      %v541 = vpop.f32.mrb[0].mxu0
      %542 = vdwg.mxu0
      %v543 = vld [vmem:[%s3] sm:$0x1]
      %v544 = vadd.f32 %v417, %v420
      %v545 = vadd.f32 %v544, %v425
      %v546 = vadd.f32 %v545, %v428
      %v547 = vadd.f32 %v546, %v433
      %v548 = vadd.f32 %v547, %v436
      %v549 = vadd.f32 %v548, %v441
      %v550 = vadd.f32 %v549, %v444
      %v551 = vadd.f32 %v550, %v449
      %v552 = vadd.f32 %v551, %v452
      %v553 = vadd.f32 %v552, %v457
      %v554 = vadd.f32 %v553, %v460
      %v555 = vadd.f32 %v554, %v465
      %v556 = vadd.f32 %v555, %v468
      %v557 = vadd.f32 %v556, %v473
      %v558 = vadd.f32 %v557, %v476
      %v559 = vadd.f32 %v558, %v481
      %v560 = vadd.f32 %v559, %v484
      %v561 = vadd.f32 %v560, %v489
      %v562 = vadd.f32 %v561, %v492
      %v563 = vadd.f32 %v562, %v497
      %v564 = vadd.f32 %v563, %v500
      %v565 = vadd.f32 %v564, %v505
      %v566 = vadd.f32 %v565, %v508
      %v567 = vadd.f32 %v566, %v513
      %v568 = vadd.f32 %v567, %v516
      %v569 = vadd.f32 %v568, %v521
      %v570 = vadd.f32 %v569, %v524
      %v571 = vadd.f32 %v570, %v529
      %v572 = vadd.f32 %v571, %v532
      %v573 = vadd.f32 %v572, %v537
      %v574 = vadd.f32 %v573, %v540
      %v575 = vrot.slane %v574, 4
      %v576 = vadd.f32 %v574, %v575
      %v577 = vrot.slane %v576, 2
      %v578 = vadd.f32 %v576, %v577
      %v579 = vrot.slane %v578, 1
      %v580 = vadd.f32 %v578, %v579
      %v581 = vadd.f32 %v543, %v580
      %582 = vst [vmem:[%s3] sm:$0x1] %v581
      %v583 = vld [vmem:[%s3 + $0x1] sm:$0x1]
      %v584 = vmul.f32 %v417, %v417
      %v585 = vmul.f32 %v420, %v420
      %v586 = vmul.f32 %v425, %v425
      %v587 = vmul.f32 %v428, %v428
      %v588 = vmul.f32 %v433, %v433
      %v589 = vmul.f32 %v436, %v436
      %v590 = vmul.f32 %v441, %v441
      %v591 = vmul.f32 %v444, %v444
      %v592 = vmul.f32 %v449, %v449
      %v593 = vmul.f32 %v452, %v452
      %v594 = vmul.f32 %v457, %v457
      %v595 = vmul.f32 %v460, %v460
      %v596 = vmul.f32 %v465, %v465
      %v597 = vmul.f32 %v468, %v468
      %v598 = vmul.f32 %v473, %v473
      %v599 = vmul.f32 %v476, %v476
      %v600 = vmul.f32 %v481, %v481
      %v601 = vmul.f32 %v484, %v484
      %v602 = vmul.f32 %v489, %v489
      %v603 = vmul.f32 %v492, %v492
      %v604 = vmul.f32 %v497, %v497
      %v605 = vmul.f32 %v500, %v500
      %v606 = vmul.f32 %v505, %v505
      %v607 = vmul.f32 %v508, %v508
      %v608 = vmul.f32 %v513, %v513
      %v609 = vmul.f32 %v516, %v516
      %v610 = vmul.f32 %v521, %v521
      %v611 = vmul.f32 %v524, %v524
      %v612 = vmul.f32 %v529, %v529
      %v613 = vmul.f32 %v532, %v532
      %v614 = vmul.f32 %v537, %v537
      %v615 = vmul.f32 %v540, %v540
      %v616 = vadd.f32 %v584, %v585
      %v617 = vadd.f32 %v616, %v586
      %v618 = vadd.f32 %v617, %v587
      %v619 = vadd.f32 %v618, %v588
      %v620 = vadd.f32 %v619, %v589
      %v621 = vadd.f32 %v620, %v590
      %v622 = vadd.f32 %v621, %v591
      %v623 = vadd.f32 %v622, %v592
      %v624 = vadd.f32 %v623, %v593
      %v625 = vadd.f32 %v624, %v594
      %v626 = vadd.f32 %v625, %v595
      %v627 = vadd.f32 %v626, %v596
      %v628 = vadd.f32 %v627, %v597
      %v629 = vadd.f32 %v628, %v598
      %v630 = vadd.f32 %v629, %v599
      %v631 = vadd.f32 %v630, %v600
      %v632 = vadd.f32 %v631, %v601
      %v633 = vadd.f32 %v632, %v602
      %v634 = vadd.f32 %v633, %v603
      %v635 = vadd.f32 %v634, %v604
      %v636 = vadd.f32 %v635, %v605
      %v637 = vadd.f32 %v636, %v606
      %v638 = vadd.f32 %v637, %v607
      %v639 = vadd.f32 %v638, %v608
      %v640 = vadd.f32 %v639, %v609
      %v641 = vadd.f32 %v640, %v610
      %v642 = vadd.f32 %v641, %v611
      %v643 = vadd.f32 %v642, %v612
      %v644 = vadd.f32 %v643, %v613
      %v645 = vadd.f32 %v644, %v614
      %v646 = vadd.f32 %v645, %v615
      %v647 = vrot.slane %v646, 4
      %v648 = vadd.f32 %v646, %v647
      %v649 = vrot.slane %v648, 2
      %v650 = vadd.f32 %v648, %v649
      %v651 = vrot.slane %v650, 1
      %v652 = vadd.f32 %v650, %v651
      %v653 = vadd.f32 %v583, %v652
      %654 = vst [vmem:[%s3 + $0x1] sm:$0x1] %v653
      // Predicated region
      $region37: #{resblock_forward.4} parent=31 // pred_check
        %p655 = pneg %p95
      $region38: #{resblock_forward.4} parent=31 // pred_check_branch
        %657 = sbr.rel (%p655) target = $region40
      $region39: #{resblock_forward.4} parent=31 // pred_region
        _
      $region40: #{resblock_forward.4} parent=31 // pred_fallthru
        _
      // Predicated region
      $region41: #{resblock_forward.4} parent=31 // pred_check
        %p658 = pneg %p95
      $region42: #{resblock_forward.4} parent=31 // pred_check_branch
        %660 = sbr.rel (%p658) target = $region44
      $region43: #{resblock_forward.4} parent=31 // pred_region
        _
      $region44: #{resblock_forward.4} parent=31 // pred_fallthru
        _
    $region32: #{resblock_forward.4} parent=5 // pred_fallthru
      _
    %p661 = scmp.le.s32.totalorder 2, %s9
    // Predicated region
    $region45: #{resblock_forward.4} parent=5 // pred_check
      %p662 = pneg %p661
    $region46: #{resblock_forward.4} parent=5 // pred_check_branch
      %664 = sbr.rel (%p662) target = $region48
    $region47: #{resblock_forward.4} parent=5 // pred_region
      %s665 = ssub.s32 %s9, 2
    $region48: #{resblock_forward.4} parent=5 // pred_fallthru
      _
  $region6: #{resblock_forward.4} parent=0 // loop_footer
    %s13 = sadd.s32 1, %s9
  $region7: #{resblock_forward.4} parent=0 // loop_footer_branch
    %8 = sbr.rel target = $region3
  $region8: #{resblock_forward.4} parent=0 // loop_exit
    _

// kernel: resblock_forward.5
$region0: #{resblock_forward.5}
  #allocation0 [shape = 'u32[]', space=smem, size = 0x4, offset = 0x4, fixed_abs, tag = 'smem constant byte address 0x4 - core index']
  #allocation1 [shape = 'u32[144,128]{1,0:T(1,128)}', space=vmem, size = 0x12000, scoped, tag = 'internal scratch']
  %s0 = inlined_call_operand.vmem [shape: f32[512,128], index: 0, kind: input, shape index: {}]
  %s1 = inlined_call_operand.vmem [shape: f32[512,128], index: 1, kind: input, shape index: {}]
  %s2 = inlined_call_operand.vmem [shape: f32[2,128], index: 2, kind: input, shape index: {}]
  %s3 = inlined_call_operand.vmem [shape: f32[2,128], index: 3, kind: input, shape index: {}]
  %s4 = inlined_call_operand.vmem [shape: bf16[128,128], index: 4, kind: input, shape index: {}]
  %s5 = inlined_call_operand.vmem [shape: f32[512,128], index: 5, kind: output, shape index: {}]
  %s6 = sld [smem:[#allocation0]]
  $region53: #{resblock_forward.5} parent=0
    _
  %s8 = ssub.s32 1, %s6
  %s9 = scalar_select 0, %s8, %s6
  loop: start=0, step=1, limit=4
  $region2: #{resblock_forward.5} parent=0 // loop_pre_header
    _
  $region3: #{resblock_forward.5} parent=0 // loop_header
    %s11 = sphi 0, %s15
    %p12 = scmp.ge.s32.totalorder %s11, 4
    %s21 = sphi 0, %s23
    %s24 = sphi 0, %s21
    %s25 = sphi 0, %s24
    %s41 = sphi 0, %s25
    %s47 = sphi 0, %s49
    %s50 = sphi 0, %s47
    %s51 = sphi 0, %s50
    %s67 = sphi 0, %s51
    %s71 = sphi 0, %s71
    %s73 = sphi 0, %s71
    %s74 = sphi 0, %s73
    %s88 = sphi 0, %s74
    %s92 = sphi 0, %s92
    %s94 = sphi 0, %s92
    %s95 = sphi 0, %s94
    %s109 = sphi 0, %s95
    %s113 = sphi 0, %s113
    %s115 = sphi 0, %s113
    %s116 = sphi 0, %s115
    %s130 = sphi 0, %s116
    %s136 = sphi 0, %s138
    %s139 = sphi 0, %s136
    %s140 = sphi 0, %s139
    %s156 = sphi 0, %s140
  $region4: #{resblock_forward.5} parent=0 // loop_header_branch
    %14 = sbr.rel (%p12) target = $region8
  $region5: #{resblock_forward.5} parent=0 // loop_body
    %s16 = ssub.s32 %s11, 1
    %s17 = ssub.s32 %s11, 2
    %s18 = sadd.s32 %s11, 1
    %s19 = ssub.s32 %s11, %s18
    %p20 = scmp.eq.s32.totalorder %s19, 0
    %s22 = sadd.s32 %s21, 1
    %s23 = scalar_select %p20, %s21, %s22
    %p26 = pneg %p20
    %p27 = scmp.eq.s32.totalorder %s11, 1
    %p28 = por %p26, %p27
    %p29 = scmp.ne.s32.totalorder %s21, %s24
    %p30 = scmp.eq.s32.totalorder %s11, 0
    %p31 = por %p29, %p30
    %p32 = scmp.ne.s32.totalorder %s21, %s24
    %p33 = scmp.eq.s32.totalorder %s16, 1
    %p34 = por %p32, %p33
    %p35 = scmp.ne.s32.totalorder %s24, %s25
    %p36 = scmp.eq.s32.totalorder %s16, 0
    %p37 = por %p35, %p36
    %p38 = scmp.ne.s32.totalorder %s24, %s25
    %p39 = scmp.eq.s32.totalorder %s17, 1
    %p40 = por %p38, %p39
    %p42 = scmp.ne.s32.totalorder %s25, %s41
    %p43 = scmp.eq.s32.totalorder %s17, 0
    %p44 = por %p42, %p43
    %s45 = ssub.s32 %s11, %s18
    %p46 = scmp.eq.s32.totalorder %s45, 0
    %s48 = sadd.s32 %s47, 1
    %s49 = scalar_select %p46, %s47, %s48
    %p52 = pneg %p46
    %p53 = scmp.eq.s32.totalorder %s11, 1
    %p54 = por %p52, %p53
    %p55 = scmp.ne.s32.totalorder %s47, %s50
    %p56 = scmp.eq.s32.totalorder %s11, 0
    %p57 = por %p55, %p56
    %p58 = scmp.ne.s32.totalorder %s47, %s50
    %p59 = scmp.eq.s32.totalorder %s16, 1
    %p60 = por %p58, %p59
    %p61 = scmp.ne.s32.totalorder %s50, %s51
    %p62 = scmp.eq.s32.totalorder %s16, 0
    %p63 = por %p61, %p62
    %p64 = scmp.ne.s32.totalorder %s50, %s51
    %p65 = scmp.eq.s32.totalorder %s17, 1
    %p66 = por %p64, %p65
    %p68 = scmp.ne.s32.totalorder %s51, %s67
    %p69 = scmp.eq.s32.totalorder %s17, 0
    %p70 = por %p68, %p69
    %s72 = sadd.s32 %s71, 1
    %p75 = scmp.eq.s32.totalorder %s11, 1
    %p76 = scmp.ne.s32.totalorder %s71, %s73
    %p77 = scmp.eq.s32.totalorder %s11, 0
    %p78 = por %p76, %p77
    %p79 = scmp.ne.s32.totalorder %s71, %s73
    %p80 = scmp.eq.s32.totalorder %s16, 1
    %p81 = por %p79, %p80
    %p82 = scmp.ne.s32.totalorder %s73, %s74
    %p83 = scmp.eq.s32.totalorder %s16, 0
    %p84 = por %p82, %p83
    %p85 = scmp.ne.s32.totalorder %s73, %s74
    %p86 = scmp.eq.s32.totalorder %s17, 1
    %p87 = por %p85, %p86
    %p89 = scmp.ne.s32.totalorder %s74, %s88
    %p90 = scmp.eq.s32.totalorder %s17, 0
    %p91 = por %p89, %p90
    %s93 = sadd.s32 %s92, 1
    %p96 = scmp.eq.s32.totalorder %s11, 1
    %p97 = scmp.ne.s32.totalorder %s92, %s94
    %p98 = scmp.eq.s32.totalorder %s11, 0
    %p99 = por %p97, %p98
    %p100 = scmp.ne.s32.totalorder %s92, %s94
    %p101 = scmp.eq.s32.totalorder %s16, 1
    %p102 = por %p100, %p101
    %p103 = scmp.ne.s32.totalorder %s94, %s95
    %p104 = scmp.eq.s32.totalorder %s16, 0
    %p105 = por %p103, %p104
    %p106 = scmp.ne.s32.totalorder %s94, %s95
    %p107 = scmp.eq.s32.totalorder %s17, 1
    %p108 = por %p106, %p107
    %p110 = scmp.ne.s32.totalorder %s95, %s109
    %p111 = scmp.eq.s32.totalorder %s17, 0
    %p112 = por %p110, %p111
    %s114 = sadd.s32 %s113, 1
    %p117 = scmp.eq.s32.totalorder %s11, 1
    %p118 = scmp.ne.s32.totalorder %s113, %s115
    %p119 = scmp.eq.s32.totalorder %s11, 0
    %p120 = por %p118, %p119
    %p121 = scmp.ne.s32.totalorder %s113, %s115
    %p122 = scmp.eq.s32.totalorder %s16, 1
    %p123 = por %p121, %p122
    %p124 = scmp.ne.s32.totalorder %s115, %s116
    %p125 = scmp.eq.s32.totalorder %s16, 0
    %p126 = por %p124, %p125
    %p127 = scmp.ne.s32.totalorder %s115, %s116
    %p128 = scmp.eq.s32.totalorder %s17, 1
    %p129 = por %p127, %p128
    %p131 = scmp.ne.s32.totalorder %s116, %s130
    %p132 = scmp.eq.s32.totalorder %s17, 0
    %p133 = por %p131, %p132
    %s134 = ssub.s32 %s11, %s18
    %p135 = scmp.eq.s32.totalorder %s134, 0
    %s137 = sadd.s32 %s136, 1
    %s138 = scalar_select %p135, %s136, %s137
    %p141 = pneg %p135
    %p142 = scmp.eq.s32.totalorder %s11, 1
    %p143 = por %p141, %p142
    %p144 = scmp.ne.s32.totalorder %s136, %s139
    %p145 = scmp.eq.s32.totalorder %s11, 0
    %p146 = por %p144, %p145
    %p147 = scmp.ne.s32.totalorder %s136, %s139
    %p148 = scmp.eq.s32.totalorder %s16, 1
    %p149 = por %p147, %p148
    %p150 = scmp.ne.s32.totalorder %s139, %s140
    %p151 = scmp.eq.s32.totalorder %s16, 0
    %p152 = por %p150, %p151
    %p153 = scmp.ne.s32.totalorder %s139, %s140
    %p154 = scmp.eq.s32.totalorder %s17, 1
    %p155 = por %p153, %p154
    %p157 = scmp.ne.s32.totalorder %s140, %s156
    %p158 = scmp.eq.s32.totalorder %s17, 0
    %p159 = por %p157, %p158
    %p160 = scmp.le.s32.totalorder 1, %s11
    %p161 = scmp.lt.s32.totalorder %s11, 3
    %p162 = pnand %p160, %p161
    %p163 = pneg %p162
    // Predicated region
    $region9: #{resblock_forward.5} parent=5 // pred_check
      _
    $region10: #{resblock_forward.5} parent=5 // pred_check_branch
      %165 = sbr.rel (%p162) target = $region12
    $region11: #{resblock_forward.5} parent=5 // pred_region
      %s166 = ssub.s32 %s11, 1
      // Predicated region
      $region13: #{resblock_forward.5} parent=11 // pred_check
        %p167 = pneg %p84
      $region14: #{resblock_forward.5} parent=11 // pred_check_branch
        %169 = sbr.rel (%p167) target = $region16
      $region15: #{resblock_forward.5} parent=11 // pred_region
        _
      $region16: #{resblock_forward.5} parent=11 // pred_fallthru
        _
      // Predicated region
      $region17: #{resblock_forward.5} parent=11 // pred_check
        %p170 = pneg %p105
      $region18: #{resblock_forward.5} parent=11 // pred_check_branch
        %172 = sbr.rel (%p170) target = $region20
      $region19: #{resblock_forward.5} parent=11 // pred_region
        _
      $region20: #{resblock_forward.5} parent=11 // pred_fallthru
        _
      // Predicated region
      $region21: #{resblock_forward.5} parent=11 // pred_check
        %p173 = pneg %p126
      $region22: #{resblock_forward.5} parent=11 // pred_check_branch
        %175 = sbr.rel (%p173) target = $region24
      $region23: #{resblock_forward.5} parent=11 // pred_region
        _
      $region24: #{resblock_forward.5} parent=11 // pred_fallthru
        _
    $region12: #{resblock_forward.5} parent=5 // pred_fallthru
      _
    %p176 = scmp.lt.s32.totalorder %s11, 2
    // Predicated region
    $region25: #{resblock_forward.5} parent=5 // pred_check
      %p177 = pneg %p176
    $region26: #{resblock_forward.5} parent=5 // pred_check_branch
      %179 = sbr.rel (%p177) target = $region28
    $region27: #{resblock_forward.5} parent=5 // pred_region
      // Predicated region
      $region29: #{resblock_forward.5} parent=27 // pred_check
        %p180 = pneg %p31
      $region30: #{resblock_forward.5} parent=27 // pred_check_branch
        %182 = sbr.rel (%p180) target = $region32
      $region31: #{resblock_forward.5} parent=27 // pred_region
        %s183 = smul.u32 32, %s11
        %p184 = scmp.lt.s32.totalorder %s183, 63
        %s185 = scalar_select %p184, %s183, 63
        %s186 = smul.addr %s185, 8
        %s187 = scalar_lea.vmem %s0, %s186
        %s188 = smul.u32 32, %s11
      $region32: #{resblock_forward.5} parent=27 // pred_fallthru
        _
      // Predicated region
      $region33: #{resblock_forward.5} parent=27 // pred_check
        %p189 = pneg %p57
      $region34: #{resblock_forward.5} parent=27 // pred_check_branch
        %191 = sbr.rel (%p189) target = $region36
      $region35: #{resblock_forward.5} parent=27 // pred_region
        %s192 = smul.u32 32, %s11
        %p193 = scmp.lt.s32.totalorder %s192, 63
        %s194 = scalar_select %p193, %s192, 63
        %s195 = smul.addr %s194, 8
        %s196 = scalar_lea.vmem %s1, %s195
        %s197 = smul.u32 32, %s11
      $region36: #{resblock_forward.5} parent=27 // pred_fallthru
        _
    $region28: #{resblock_forward.5} parent=5 // pred_fallthru
      _
    %p198 = scmp.le.s32.totalorder 1, %s11
    %p199 = scmp.lt.s32.totalorder %s11, 3
    %p200 = pnand %p198, %p199
    %p201 = pneg %p200
    // Predicated region
    $region37: #{resblock_forward.5} parent=5 // pred_check
      _
    $region38: #{resblock_forward.5} parent=5 // pred_check_branch
      %203 = sbr.rel (%p200) target = $region40
    $region39: #{resblock_forward.5} parent=5 // pred_region
      %s204 = ssub.s32 %s11, 1
      %s205 = smul.u32 32, %s16
      %p206 = scmp.lt.s32.totalorder %s205, 63
      %s207 = scalar_select %p206, %s205, 63
      %s208 = smul.addr %s207, 8
      %s209 = scalar_lea.vmem %s0, %s208
      %p210 = pneg %p37
      %p211 = pneg %p34
      %s212 = smul.u32 32, %s16
      %p213 = scmp.lt.s32.totalorder %s212, 63
      %s214 = scalar_select %p213, %s212, 63
      %s215 = smul.addr %s214, 8
      %s216 = scalar_lea.vmem %s1, %s215
      %p217 = pneg %p63
      %p218 = pneg %p60
      %p219 = pneg %p84
      %p220 = pneg %p81
      %p221 = pneg %p105
      %p222 = pneg %p102
      %p223 = pneg %p126
      %p224 = pneg %p123
      %p225 = pneg %p152
      %p226 = pneg %p149
      %s227 = smul.u32 32, %s16
      %p228 = scmp.lt.s32.totalorder %s227, 63
      %s229 = scalar_select %p228, %s227, 63
      %s230 = smul.addr %s229, 8
      %s231 = scalar_lea.vmem %s5, %s230
      %s232 = smul.u32 32, %s16
      %p233 = scmp.lt.s32.totalorder %s232, 63
      %s234 = scalar_select %p233, %s232, 63
      %s235 = smul.addr %s234, 8
      %s236 = scalar_lea.vmem %s0, %s235
      %s237 = smul.u32 32, %s16
      %s238 = smul.u32 32, %s16
      %p239 = scmp.lt.s32.totalorder %s238, 63
      %s240 = scalar_select %p239, %s238, 63
      %s241 = smul.addr %s240, 8
      %s242 = scalar_lea.vmem %s1, %s241
      %s243 = smul.u32 32, %s16
      %s244 = smul.u32 32, %s16
      %p245 = scmp.lt.s32.totalorder %s244, 63
      %s246 = scalar_select %p245, %s244, 63
      %s247 = smul.addr %s246, 8
      %s248 = scalar_lea.vmem %s5, %s247
      %s249 = smul.u32 32, %s16
      %v251 = vld [vmem:[%s236] sm:$0xff]
      %v252 = vld [vmem:[%s236 + $0x8] sm:$0xff]
      %v253 = vld [vmem:[%s236 + $0x10] sm:$0xff]
      %v254 = vld [vmem:[%s236 + $0x18] sm:$0xff]
      %v255 = vld [vmem:[%s236 + $0x20] sm:$0xff]
      %v256 = vld [vmem:[%s236 + $0x28] sm:$0xff]
      %v257 = vld [vmem:[%s236 + $0x30] sm:$0xff]
      %v258 = vld [vmem:[%s236 + $0x38] sm:$0xff]
      %v259 = vld [vmem:[%s236 + $0x40] sm:$0xff]
      %v260 = vld [vmem:[%s236 + $0x48] sm:$0xff]
      %v261 = vld [vmem:[%s236 + $0x50] sm:$0xff]
      %v262 = vld [vmem:[%s236 + $0x58] sm:$0xff]
      %v263 = vld [vmem:[%s236 + $0x60] sm:$0xff]
      %v264 = vld [vmem:[%s236 + $0x68] sm:$0xff]
      %v265 = vld [vmem:[%s236 + $0x70] sm:$0xff]
      %v266 = vld [vmem:[%s236 + $0x78] sm:$0xff]
      %v267 = vld [vmem:[%s236 + $0x80] sm:$0xff]
      %v268 = vld [vmem:[%s236 + $0x88] sm:$0xff]
      %v269 = vld [vmem:[%s236 + $0x90] sm:$0xff]
      %v270 = vld [vmem:[%s236 + $0x98] sm:$0xff]
      %v271 = vld [vmem:[%s236 + $0xa0] sm:$0xff]
      %v272 = vld [vmem:[%s236 + $0xa8] sm:$0xff]
      %v273 = vld [vmem:[%s236 + $0xb0] sm:$0xff]
      %v274 = vld [vmem:[%s236 + $0xb8] sm:$0xff]
      %v275 = vld [vmem:[%s236 + $0xc0] sm:$0xff]
      %v276 = vld [vmem:[%s236 + $0xc8] sm:$0xff]
      %v277 = vld [vmem:[%s236 + $0xd0] sm:$0xff]
      %v278 = vld [vmem:[%s236 + $0xd8] sm:$0xff]
      %v279 = vld [vmem:[%s236 + $0xe0] sm:$0xff]
      %v280 = vld [vmem:[%s236 + $0xe8] sm:$0xff]
      %v281 = vld [vmem:[%s236 + $0xf0] sm:$0xff]
      %v282 = vld [vmem:[%s236 + $0xf8] sm:$0xff]
      %v283 = vld [vmem:[%s2] sm:$0x1]
      %v284 = vlaneseq
      %v285 = vshrl.u32 %v284, 7
      %v286 = vsub.s32 0, %v285
      %v287 = vrot.slane %v283, %v286
      %v288 = vmul.f32 %v251, %v287
      %v289 = vmul.f32 %v252, %v287
      %v290 = vmul.f32 %v253, %v287
      %v291 = vmul.f32 %v254, %v287
      %v292 = vmul.f32 %v255, %v287
      %v293 = vmul.f32 %v256, %v287
      %v294 = vmul.f32 %v257, %v287
      %v295 = vmul.f32 %v258, %v287
      %v296 = vmul.f32 %v259, %v287
      %v297 = vmul.f32 %v260, %v287
      %v298 = vmul.f32 %v261, %v287
      %v299 = vmul.f32 %v262, %v287
      %v300 = vmul.f32 %v263, %v287
      %v301 = vmul.f32 %v264, %v287
      %v302 = vmul.f32 %v265, %v287
      %v303 = vmul.f32 %v266, %v287
      %v304 = vmul.f32 %v267, %v287
      %v305 = vmul.f32 %v268, %v287
      %v306 = vmul.f32 %v269, %v287
      %v307 = vmul.f32 %v270, %v287
      %v308 = vmul.f32 %v271, %v287
      %v309 = vmul.f32 %v272, %v287
      %v310 = vmul.f32 %v273, %v287
      %v311 = vmul.f32 %v274, %v287
      %v312 = vmul.f32 %v275, %v287
      %v313 = vmul.f32 %v276, %v287
      %v314 = vmul.f32 %v277, %v287
      %v315 = vmul.f32 %v278, %v287
      %v316 = vmul.f32 %v279, %v287
      %v317 = vmul.f32 %v280, %v287
      %v318 = vmul.f32 %v281, %v287
      %v319 = vmul.f32 %v282, %v287
      %v320 = vld [vmem:[%s2 + $0x1] sm:$0x1]
      %v321 = vlaneseq
      %v322 = vshrl.u32 %v321, 7
      %v323 = vsub.s32 0, %v322
      %v324 = vrot.slane %v320, %v323
      %v325 = vadd.f32 %v288, %v324
      %v326 = vadd.f32 %v289, %v324
      %v327 = vadd.f32 %v290, %v324
      %v328 = vadd.f32 %v291, %v324
      %v329 = vadd.f32 %v292, %v324
      %v330 = vadd.f32 %v293, %v324
      %v331 = vadd.f32 %v294, %v324
      %v332 = vadd.f32 %v295, %v324
      %v333 = vadd.f32 %v296, %v324
      %v334 = vadd.f32 %v297, %v324
      %v335 = vadd.f32 %v298, %v324
      %v336 = vadd.f32 %v299, %v324
      %v337 = vadd.f32 %v300, %v324
      %v338 = vadd.f32 %v301, %v324
      %v339 = vadd.f32 %v302, %v324
      %v340 = vadd.f32 %v303, %v324
      %v341 = vadd.f32 %v304, %v324
      %v342 = vadd.f32 %v305, %v324
      %v343 = vadd.f32 %v306, %v324
      %v344 = vadd.f32 %v307, %v324
      %v345 = vadd.f32 %v308, %v324
      %v346 = vadd.f32 %v309, %v324
      %v347 = vadd.f32 %v310, %v324
      %v348 = vadd.f32 %v311, %v324
      %v349 = vadd.f32 %v312, %v324
      %v350 = vadd.f32 %v313, %v324
      %v351 = vadd.f32 %v314, %v324
      %v352 = vadd.f32 %v315, %v324
      %v353 = vadd.f32 %v316, %v324
      %v354 = vadd.f32 %v317, %v324
      %v355 = vadd.f32 %v318, %v324
      %v356 = vadd.f32 %v319, %v324
      %v357 = vmax.f32 %v325, 0.0
      %v358 = vmax.f32 %v326, 0.0
      %v359 = vmax.f32 %v327, 0.0
      %v360 = vmax.f32 %v328, 0.0
      %v361 = vmax.f32 %v329, 0.0
      %v362 = vmax.f32 %v330, 0.0
      %v363 = vmax.f32 %v331, 0.0
      %v364 = vmax.f32 %v332, 0.0
      %v365 = vmax.f32 %v333, 0.0
      %v366 = vmax.f32 %v334, 0.0
      %v367 = vmax.f32 %v335, 0.0
      %v368 = vmax.f32 %v336, 0.0
      %v369 = vmax.f32 %v337, 0.0
      %v370 = vmax.f32 %v338, 0.0
      %v371 = vmax.f32 %v339, 0.0
      %v372 = vmax.f32 %v340, 0.0
      %v373 = vmax.f32 %v341, 0.0
      %v374 = vmax.f32 %v342, 0.0
      %v375 = vmax.f32 %v343, 0.0
      %v376 = vmax.f32 %v344, 0.0
      %v377 = vmax.f32 %v345, 0.0
      %v378 = vmax.f32 %v346, 0.0
      %v379 = vmax.f32 %v347, 0.0
      %v380 = vmax.f32 %v348, 0.0
      %v381 = vmax.f32 %v349, 0.0
      %v382 = vmax.f32 %v350, 0.0
      %v383 = vmax.f32 %v351, 0.0
      %v384 = vmax.f32 %v352, 0.0
      %v385 = vmax.f32 %v353, 0.0
      %v386 = vmax.f32 %v354, 0.0
      %v387 = vmax.f32 %v355, 0.0
      %v388 = vmax.f32 %v356, 0.0
      %v389 = vpack.c.bf16 %v358, %v357
      %v390 = vpack.c.bf16 %v360, %v359
      %v391 = vpack.c.bf16 %v362, %v361
      %v392 = vpack.c.bf16 %v364, %v363
      %v393 = vpack.c.bf16 %v366, %v365
      %v394 = vpack.c.bf16 %v368, %v367
      %v395 = vpack.c.bf16 %v370, %v369
      %v396 = vpack.c.bf16 %v372, %v371
      %v397 = vpack.c.bf16 %v374, %v373
      %v398 = vpack.c.bf16 %v376, %v375
      %v399 = vpack.c.bf16 %v378, %v377
      %v400 = vpack.c.bf16 %v380, %v379
      %v401 = vpack.c.bf16 %v382, %v381
      %v402 = vpack.c.bf16 %v384, %v383
      %v403 = vpack.c.bf16 %v386, %v385
      %v404 = vpack.c.bf16 %v388, %v387
      %v405 = vld [vmem:[%s4] sm:$0xf]
      %v406 = vld [vmem:[%s4 + $0x4] sm:$0xf]
      %v407 = vld [vmem:[%s4 + $0x8] sm:$0xf]
      %v408 = vld [vmem:[%s4 + $0xc] sm:$0xf]
      %v409 = vld [vmem:[%s4 + $0x10] sm:$0xf]
      %v410 = vld [vmem:[%s4 + $0x14] sm:$0xf]
      %v411 = vld [vmem:[%s4 + $0x18] sm:$0xf]
      %v412 = vld [vmem:[%s4 + $0x1c] sm:$0xf]
      %v413 = vld [vmem:[%s4 + $0x20] sm:$0xf]
      %v414 = vld [vmem:[%s4 + $0x24] sm:$0xf]
      %v415 = vld [vmem:[%s4 + $0x28] sm:$0xf]
      %v416 = vld [vmem:[%s4 + $0x2c] sm:$0xf]
      %v417 = vld [vmem:[%s4 + $0x30] sm:$0xf]
      %v418 = vld [vmem:[%s4 + $0x34] sm:$0xf]
      %v419 = vld [vmem:[%s4 + $0x38] sm:$0xf]
      %v420 = vld [vmem:[%s4 + $0x3c] sm:$0xf]
      %v437 = vunpack.c.l.b16 %v405
      %v438 = vunpack.c.l.b16 %v406
      %v439 = vunpack.c.l.b16 %v407
      %v440 = vunpack.c.l.b16 %v408
      %v441 = vunpack.c.l.b16 %v409
      %v442 = vunpack.c.l.b16 %v410
      %v443 = vunpack.c.l.b16 %v411
      %v444 = vunpack.c.l.b16 %v412
      %v445 = vunpack.c.l.b16 %v413
      %v446 = vunpack.c.l.b16 %v414
      %v447 = vunpack.c.l.b16 %v415
      %v448 = vunpack.c.l.b16 %v416
      %v449 = vunpack.c.l.b16 %v417
      %v450 = vunpack.c.l.b16 %v418
      %v451 = vunpack.c.l.b16 %v419
      %v452 = vunpack.c.l.b16 %v420
      %v453 = vpack.c.b16 %v438, %v437
      %v454 = vpack.c.b16 %v440, %v439
      %v455 = vpack.c.b16 %v442, %v441
      %v456 = vpack.c.b16 %v444, %v443
      %v457 = vpack.c.b16 %v446, %v445
      %v458 = vpack.c.b16 %v448, %v447
      %v459 = vpack.c.b16 %v450, %v449
      %v460 = vpack.c.b16 %v452, %v451
      %469 = vmatprep.subr.bf16.mxu0 0
      %470 = vmatpush1.bf16.msra.mxu0 %v453
      %471 = vmatprep.subr.bf16.mxu0 0
      %472 = vmatpush1.bf16.msra.mxu0 %v454
      %473 = vmatprep.subr.bf16.mxu0 0
      %474 = vmatpush1.bf16.msra.mxu0 %v455
      %475 = vmatprep.subr.bf16.mxu0 0
      %476 = vmatpush1.bf16.msra.mxu0 %v456
      %477 = vmatprep.subr.bf16.mxu0 0
      %478 = vmatpush1.bf16.msra.mxu0 %v457
      %479 = vmatprep.subr.bf16.mxu0 0
      %480 = vmatpush1.bf16.msra.mxu0 %v458
      %481 = vmatprep.subr.bf16.mxu0 0
      %482 = vmatpush1.bf16.msra.mxu0 %v459
      %483 = vmatprep.subr.bf16.mxu0 0
      %484 = vmatpush1.bf16.msra.mxu0 %v460
      %485 = vmatprep.subr.bf16.mxu0 0
      %486 = vmatpush1.bf16.msra.mxu0 0
      %487 = vmatprep.subr.bf16.mxu0 0
      %488 = vmatpush1.bf16.msra.mxu0 0
      %489 = vmatprep.subr.bf16.mxu0 0
      %490 = vmatpush1.bf16.msra.mxu0 0
      %491 = vmatprep.subr.bf16.mxu0 0
      %492 = vmatpush1.bf16.msra.mxu0 0
      %493 = vmatprep.subr.bf16.mxu0 0
      %494 = vmatpush1.bf16.msra.mxu0 0
      %495 = vmatprep.subr.bf16.mxu0 0
      %496 = vmatpush1.bf16.msra.mxu0 0
      %497 = vmatprep.subr.bf16.mxu0 0
      %498 = vmatpush1.bf16.msra.mxu0 0
      %499 = vmatprep.subr.bf16.mxu0 0
      %500 = vmatpush1.bf16.msra.mxu0 0
      %501 = vmatprep.mubr.bf16.mxu0 0
      %502 = vmatmul.mubr.bf16.gmra.mrb[0].mxu0 %v389
      %v503 = vpop.f32.mrb[0].mxu0
      %v504 = vadd.f32 0.0, %v503
      %v505 = vpop.f32.mrb[0].mxu0
      %v506 = vpop.f32.mrb[0].mxu0
      %v507 = vadd.f32 0.0, %v506
      %v508 = vpop.f32.mrb[0].mxu0
      %509 = vmatprep.mubr.bf16.mxu0 0
      %510 = vmatmul.mubr.bf16.gmra.mrb[0].mxu0 %v390
      %v511 = vpop.f32.mrb[0].mxu0
      %v512 = vadd.f32 0.0, %v511
      %v513 = vpop.f32.mrb[0].mxu0
      %v514 = vpop.f32.mrb[0].mxu0
      %v515 = vadd.f32 0.0, %v514
      %v516 = vpop.f32.mrb[0].mxu0
      %517 = vmatprep.mubr.bf16.mxu0 0
      %518 = vmatmul.mubr.bf16.gmra.mrb[0].mxu0 %v391
      %v519 = vpop.f32.mrb[0].mxu0
      %v520 = vadd.f32 0.0, %v519
      %v521 = vpop.f32.mrb[0].mxu0
      %v522 = vpop.f32.mrb[0].mxu0
      %v523 = vadd.f32 0.0, %v522
      %v524 = vpop.f32.mrb[0].mxu0
      %525 = vmatprep.mubr.bf16.mxu0 0
      %526 = vmatmul.mubr.bf16.gmra.mrb[0].mxu0 %v392
      %v527 = vpop.f32.mrb[0].mxu0
      %v528 = vadd.f32 0.0, %v527
      %v529 = vpop.f32.mrb[0].mxu0
      %v530 = vpop.f32.mrb[0].mxu0
      %v531 = vadd.f32 0.0, %v530
      %v532 = vpop.f32.mrb[0].mxu0
      %533 = vmatprep.mubr.bf16.mxu0 0
      %534 = vmatmul.mubr.bf16.gmra.mrb[0].mxu0 %v393
      %v535 = vpop.f32.mrb[0].mxu0
      %v536 = vadd.f32 0.0, %v535
      %v537 = vpop.f32.mrb[0].mxu0
      %v538 = vpop.f32.mrb[0].mxu0
      %v539 = vadd.f32 0.0, %v538
      %v540 = vpop.f32.mrb[0].mxu0
      %541 = vmatprep.mubr.bf16.mxu0 0
      %542 = vmatmul.mubr.bf16.gmra.mrb[0].mxu0 %v394
      %v543 = vpop.f32.mrb[0].mxu0
      %v544 = vadd.f32 0.0, %v543
      %v545 = vpop.f32.mrb[0].mxu0
      %v546 = vpop.f32.mrb[0].mxu0
      %v547 = vadd.f32 0.0, %v546
      %v548 = vpop.f32.mrb[0].mxu0
      %549 = vmatprep.mubr.bf16.mxu0 0
      %550 = vmatmul.mubr.bf16.gmra.mrb[0].mxu0 %v395
      %v551 = vpop.f32.mrb[0].mxu0
      %v552 = vadd.f32 0.0, %v551
      %v553 = vpop.f32.mrb[0].mxu0
      %v554 = vpop.f32.mrb[0].mxu0
      %v555 = vadd.f32 0.0, %v554
      %v556 = vpop.f32.mrb[0].mxu0
      %557 = vmatprep.mubr.bf16.mxu0 0
      %558 = vmatmul.mubr.bf16.gmra.mrb[0].mxu0 %v396
      %v559 = vpop.f32.mrb[0].mxu0
      %v560 = vadd.f32 0.0, %v559
      %v561 = vpop.f32.mrb[0].mxu0
      %v562 = vpop.f32.mrb[0].mxu0
      %v563 = vadd.f32 0.0, %v562
      %v564 = vpop.f32.mrb[0].mxu0
      %565 = vmatprep.mubr.bf16.mxu0 0
      %566 = vmatmul.mubr.bf16.gmra.mrb[0].mxu0 %v397
      %v567 = vpop.f32.mrb[0].mxu0
      %v568 = vadd.f32 0.0, %v567
      %v569 = vpop.f32.mrb[0].mxu0
      %v570 = vpop.f32.mrb[0].mxu0
      %v571 = vadd.f32 0.0, %v570
      %v572 = vpop.f32.mrb[0].mxu0
      %573 = vmatprep.mubr.bf16.mxu0 0
      %574 = vmatmul.mubr.bf16.gmra.mrb[0].mxu0 %v398
      %v575 = vpop.f32.mrb[0].mxu0
      %v576 = vadd.f32 0.0, %v575
      %v577 = vpop.f32.mrb[0].mxu0
      %v578 = vpop.f32.mrb[0].mxu0
      %v579 = vadd.f32 0.0, %v578
      %v580 = vpop.f32.mrb[0].mxu0
      %581 = vmatprep.mubr.bf16.mxu0 0
      %582 = vmatmul.mubr.bf16.gmra.mrb[0].mxu0 %v399
      %v583 = vpop.f32.mrb[0].mxu0
      %v584 = vadd.f32 0.0, %v583
      %v585 = vpop.f32.mrb[0].mxu0
      %v586 = vpop.f32.mrb[0].mxu0
      %v587 = vadd.f32 0.0, %v586
      %v588 = vpop.f32.mrb[0].mxu0
      %589 = vmatprep.mubr.bf16.mxu0 0
      %590 = vmatmul.mubr.bf16.gmra.mrb[0].mxu0 %v400
      %v591 = vpop.f32.mrb[0].mxu0
      %v592 = vadd.f32 0.0, %v591
      %v593 = vpop.f32.mrb[0].mxu0
      %v594 = vpop.f32.mrb[0].mxu0
      %v595 = vadd.f32 0.0, %v594
      %v596 = vpop.f32.mrb[0].mxu0
      %597 = vmatprep.mubr.bf16.mxu0 0
      %598 = vmatmul.mubr.bf16.gmra.mrb[0].mxu0 %v401
      %v599 = vpop.f32.mrb[0].mxu0
      %v600 = vadd.f32 0.0, %v599
      %v601 = vpop.f32.mrb[0].mxu0
      %v602 = vpop.f32.mrb[0].mxu0
      %v603 = vadd.f32 0.0, %v602
      %v604 = vpop.f32.mrb[0].mxu0
      %605 = vmatprep.mubr.bf16.mxu0 0
      %606 = vmatmul.mubr.bf16.gmra.mrb[0].mxu0 %v402
      %v607 = vpop.f32.mrb[0].mxu0
      %v608 = vadd.f32 0.0, %v607
      %v609 = vpop.f32.mrb[0].mxu0
      %v610 = vpop.f32.mrb[0].mxu0
      %v611 = vadd.f32 0.0, %v610
      %v612 = vpop.f32.mrb[0].mxu0
      %613 = vmatprep.mubr.bf16.mxu0 0
      %614 = vmatmul.mubr.bf16.gmra.mrb[0].mxu0 %v403
      %v615 = vpop.f32.mrb[0].mxu0
      %v616 = vadd.f32 0.0, %v615
      %v617 = vpop.f32.mrb[0].mxu0
      %v618 = vpop.f32.mrb[0].mxu0
      %v619 = vadd.f32 0.0, %v618
      %v620 = vpop.f32.mrb[0].mxu0
      %621 = vmatprep.mubr.bf16.mxu0 0
      %622 = vmatmul.mubr.bf16.gmra.mrb[0].mxu0 %v404
      %v623 = vpop.f32.mrb[0].mxu0
      %v624 = vadd.f32 0.0, %v623
      %v625 = vpop.f32.mrb[0].mxu0
      %v626 = vpop.f32.mrb[0].mxu0
      %v627 = vadd.f32 0.0, %v626
      %v628 = vpop.f32.mrb[0].mxu0
      %629 = vdwg.mxu0
      %v630 = vld [vmem:[%s242] sm:$0xff]
      %v631 = vld [vmem:[%s242 + $0x8] sm:$0xff]
      %v632 = vld [vmem:[%s242 + $0x10] sm:$0xff]
      %v633 = vld [vmem:[%s242 + $0x18] sm:$0xff]
      %v634 = vld [vmem:[%s242 + $0x20] sm:$0xff]
      %v635 = vld [vmem:[%s242 + $0x28] sm:$0xff]
      %v636 = vld [vmem:[%s242 + $0x30] sm:$0xff]
      %v637 = vld [vmem:[%s242 + $0x38] sm:$0xff]
      %v638 = vld [vmem:[%s242 + $0x40] sm:$0xff]
      %v639 = vld [vmem:[%s242 + $0x48] sm:$0xff]
      %v640 = vld [vmem:[%s242 + $0x50] sm:$0xff]
      %v641 = vld [vmem:[%s242 + $0x58] sm:$0xff]
      %v642 = vld [vmem:[%s242 + $0x60] sm:$0xff]
      %v643 = vld [vmem:[%s242 + $0x68] sm:$0xff]
      %v644 = vld [vmem:[%s242 + $0x70] sm:$0xff]
      %v645 = vld [vmem:[%s242 + $0x78] sm:$0xff]
      %v646 = vld [vmem:[%s242 + $0x80] sm:$0xff]
      %v647 = vld [vmem:[%s242 + $0x88] sm:$0xff]
      %v648 = vld [vmem:[%s242 + $0x90] sm:$0xff]
      %v649 = vld [vmem:[%s242 + $0x98] sm:$0xff]
      %v650 = vld [vmem:[%s242 + $0xa0] sm:$0xff]
      %v651 = vld [vmem:[%s242 + $0xa8] sm:$0xff]
      %v652 = vld [vmem:[%s242 + $0xb0] sm:$0xff]
      %v653 = vld [vmem:[%s242 + $0xb8] sm:$0xff]
      %v654 = vld [vmem:[%s242 + $0xc0] sm:$0xff]
      %v655 = vld [vmem:[%s242 + $0xc8] sm:$0xff]
      %v656 = vld [vmem:[%s242 + $0xd0] sm:$0xff]
      %v657 = vld [vmem:[%s242 + $0xd8] sm:$0xff]
      %v658 = vld [vmem:[%s242 + $0xe0] sm:$0xff]
      %v659 = vld [vmem:[%s242 + $0xe8] sm:$0xff]
      %v660 = vld [vmem:[%s242 + $0xf0] sm:$0xff]
      %v661 = vld [vmem:[%s242 + $0xf8] sm:$0xff]
      %v662 = vld [vmem:[%s3] sm:$0x1]
      %v663 = vlaneseq
      %v664 = vshrl.u32 %v663, 7
      %v665 = vsub.s32 0, %v664
      %v666 = vrot.slane %v662, %v665
      %v667 = vmul.f32 %v504, %v666
      %v668 = vmul.f32 %v507, %v666
      %v669 = vmul.f32 %v512, %v666
      %v670 = vmul.f32 %v515, %v666
      %v671 = vmul.f32 %v520, %v666
      %v672 = vmul.f32 %v523, %v666
      %v673 = vmul.f32 %v528, %v666
      %v674 = vmul.f32 %v531, %v666
      %v675 = vmul.f32 %v536, %v666
      %v676 = vmul.f32 %v539, %v666
      %v677 = vmul.f32 %v544, %v666
      %v678 = vmul.f32 %v547, %v666
      %v679 = vmul.f32 %v552, %v666
      %v680 = vmul.f32 %v555, %v666
      %v681 = vmul.f32 %v560, %v666
      %v682 = vmul.f32 %v563, %v666
      %v683 = vmul.f32 %v568, %v666
      %v684 = vmul.f32 %v571, %v666
      %v685 = vmul.f32 %v576, %v666
      %v686 = vmul.f32 %v579, %v666
      %v687 = vmul.f32 %v584, %v666
      %v688 = vmul.f32 %v587, %v666
      %v689 = vmul.f32 %v592, %v666
      %v690 = vmul.f32 %v595, %v666
      %v691 = vmul.f32 %v600, %v666
      %v692 = vmul.f32 %v603, %v666
      %v693 = vmul.f32 %v608, %v666
      %v694 = vmul.f32 %v611, %v666
      %v695 = vmul.f32 %v616, %v666
      %v696 = vmul.f32 %v619, %v666
      %v697 = vmul.f32 %v624, %v666
      %v698 = vmul.f32 %v627, %v666
      %v699 = vld [vmem:[%s3 + $0x1] sm:$0x1]
      %v700 = vlaneseq
      %v701 = vshrl.u32 %v700, 7
      %v702 = vsub.s32 0, %v701
      %v703 = vrot.slane %v699, %v702
      %v704 = vadd.f32 %v667, %v703
      %v705 = vadd.f32 %v668, %v703
      %v706 = vadd.f32 %v669, %v703
      %v707 = vadd.f32 %v670, %v703
      %v708 = vadd.f32 %v671, %v703
      %v709 = vadd.f32 %v672, %v703
      %v710 = vadd.f32 %v673, %v703
      %v711 = vadd.f32 %v674, %v703
      %v712 = vadd.f32 %v675, %v703
      %v713 = vadd.f32 %v676, %v703
      %v714 = vadd.f32 %v677, %v703
      %v715 = vadd.f32 %v678, %v703
      %v716 = vadd.f32 %v679, %v703
      %v717 = vadd.f32 %v680, %v703
      %v718 = vadd.f32 %v681, %v703
      %v719 = vadd.f32 %v682, %v703
      %v720 = vadd.f32 %v683, %v703
      %v721 = vadd.f32 %v684, %v703
      %v722 = vadd.f32 %v685, %v703
      %v723 = vadd.f32 %v686, %v703
      %v724 = vadd.f32 %v687, %v703
      %v725 = vadd.f32 %v688, %v703
      %v726 = vadd.f32 %v689, %v703
      %v727 = vadd.f32 %v690, %v703
      %v728 = vadd.f32 %v691, %v703
      %v729 = vadd.f32 %v692, %v703
      %v730 = vadd.f32 %v693, %v703
      %v731 = vadd.f32 %v694, %v703
      %v732 = vadd.f32 %v695, %v703
      %v733 = vadd.f32 %v696, %v703
      %v734 = vadd.f32 %v697, %v703
      %v735 = vadd.f32 %v698, %v703
      %v736 = vadd.f32 %v630, %v704
      %v737 = vadd.f32 %v631, %v705
      %v738 = vadd.f32 %v632, %v706
      %v739 = vadd.f32 %v633, %v707
      %v740 = vadd.f32 %v634, %v708
      %v741 = vadd.f32 %v635, %v709
      %v742 = vadd.f32 %v636, %v710
      %v743 = vadd.f32 %v637, %v711
      %v744 = vadd.f32 %v638, %v712
      %v745 = vadd.f32 %v639, %v713
      %v746 = vadd.f32 %v640, %v714
      %v747 = vadd.f32 %v641, %v715
      %v748 = vadd.f32 %v642, %v716
      %v749 = vadd.f32 %v643, %v717
      %v750 = vadd.f32 %v644, %v718
      %v751 = vadd.f32 %v645, %v719
      %v752 = vadd.f32 %v646, %v720
      %v753 = vadd.f32 %v647, %v721
      %v754 = vadd.f32 %v648, %v722
      %v755 = vadd.f32 %v649, %v723
      %v756 = vadd.f32 %v650, %v724
      %v757 = vadd.f32 %v651, %v725
      %v758 = vadd.f32 %v652, %v726
      %v759 = vadd.f32 %v653, %v727
      %v760 = vadd.f32 %v654, %v728
      %v761 = vadd.f32 %v655, %v729
      %v762 = vadd.f32 %v656, %v730
      %v763 = vadd.f32 %v657, %v731
      %v764 = vadd.f32 %v658, %v732
      %v765 = vadd.f32 %v659, %v733
      %v766 = vadd.f32 %v660, %v734
      %v767 = vadd.f32 %v661, %v735
      %768 = vst [vmem:[%s248] sm:$0xff] %v736
      %769 = vst [vmem:[%s248 + $0x8] sm:$0xff] %v737
      %770 = vst [vmem:[%s248 + $0x10] sm:$0xff] %v738
      %771 = vst [vmem:[%s248 + $0x18] sm:$0xff] %v739
      %772 = vst [vmem:[%s248 + $0x20] sm:$0xff] %v740
      %773 = vst [vmem:[%s248 + $0x28] sm:$0xff] %v741
      %774 = vst [vmem:[%s248 + $0x30] sm:$0xff] %v742
      %775 = vst [vmem:[%s248 + $0x38] sm:$0xff] %v743
      %776 = vst [vmem:[%s248 + $0x40] sm:$0xff] %v744
      %777 = vst [vmem:[%s248 + $0x48] sm:$0xff] %v745
      %778 = vst [vmem:[%s248 + $0x50] sm:$0xff] %v746
      %779 = vst [vmem:[%s248 + $0x58] sm:$0xff] %v747
      %780 = vst [vmem:[%s248 + $0x60] sm:$0xff] %v748
      %781 = vst [vmem:[%s248 + $0x68] sm:$0xff] %v749
      %782 = vst [vmem:[%s248 + $0x70] sm:$0xff] %v750
      %783 = vst [vmem:[%s248 + $0x78] sm:$0xff] %v751
      %784 = vst [vmem:[%s248 + $0x80] sm:$0xff] %v752
      %785 = vst [vmem:[%s248 + $0x88] sm:$0xff] %v753
      %786 = vst [vmem:[%s248 + $0x90] sm:$0xff] %v754
      %787 = vst [vmem:[%s248 + $0x98] sm:$0xff] %v755
      %788 = vst [vmem:[%s248 + $0xa0] sm:$0xff] %v756
      %789 = vst [vmem:[%s248 + $0xa8] sm:$0xff] %v757
      %790 = vst [vmem:[%s248 + $0xb0] sm:$0xff] %v758
      %791 = vst [vmem:[%s248 + $0xb8] sm:$0xff] %v759
      %792 = vst [vmem:[%s248 + $0xc0] sm:$0xff] %v760
      %793 = vst [vmem:[%s248 + $0xc8] sm:$0xff] %v761
      %794 = vst [vmem:[%s248 + $0xd0] sm:$0xff] %v762
      %795 = vst [vmem:[%s248 + $0xd8] sm:$0xff] %v763
      %796 = vst [vmem:[%s248 + $0xe0] sm:$0xff] %v764
      %797 = vst [vmem:[%s248 + $0xe8] sm:$0xff] %v765
      %798 = vst [vmem:[%s248 + $0xf0] sm:$0xff] %v766
      %799 = vst [vmem:[%s248 + $0xf8] sm:$0xff] %v767
      %s800 = smul.u32 32, %s16
      %p801 = scmp.lt.s32.totalorder %s800, 63
      %s802 = scalar_select %p801, %s800, 63
      %s803 = smul.addr %s802, 8
      %s804 = scalar_lea.vmem %s5, %s803
      // Predicated region
      $region41: #{resblock_forward.5} parent=39 // pred_check
        %p805 = pneg %p149
      $region42: #{resblock_forward.5} parent=39 // pred_check_branch
        %807 = sbr.rel (%p805) target = $region44
      $region43: #{resblock_forward.5} parent=39 // pred_region
        %s808 = smul.u32 32, %s16
      $region44: #{resblock_forward.5} parent=39 // pred_fallthru
        _
    $region40: #{resblock_forward.5} parent=5 // pred_fallthru
      _
    %p809 = scmp.le.s32.totalorder 2, %s11
    // Predicated region
    $region45: #{resblock_forward.5} parent=5 // pred_check
      %p810 = pneg %p809
    $region46: #{resblock_forward.5} parent=5 // pred_check_branch
      %812 = sbr.rel (%p810) target = $region48
    $region47: #{resblock_forward.5} parent=5 // pred_region
      %s813 = ssub.s32 %s11, 2
      // Predicated region
      $region49: #{resblock_forward.5} parent=47 // pred_check
        %p814 = pneg %p155
      $region50: #{resblock_forward.5} parent=47 // pred_check_branch
        %816 = sbr.rel (%p814) target = $region52
      $region51: #{resblock_forward.5} parent=47 // pred_region
        %s817 = smul.u32 32, %s17
        %p818 = scmp.lt.s32.totalorder %s817, 63
        %s819 = scalar_select %p818, %s817, 63
        %s820 = smul.addr %s819, 8
        %s821 = scalar_lea.vmem %s5, %s820
      $region52: #{resblock_forward.5} parent=47 // pred_fallthru
        _
    $region48: #{resblock_forward.5} parent=5 // pred_fallthru
      _
  $region6: #{resblock_forward.5} parent=0 // loop_footer
    %s15 = sadd.s32 1, %s11
  $region7: #{resblock_forward.5} parent=0 // loop_footer_branch
    %10 = sbr.rel target = $region3
  $region8: #{resblock_forward.5} parent=0 // loop_exit
    _

// kernel: resblock_forward.3
$region0: #{resblock_forward.3}
  #allocation0 [shape = 'u32[]', space=smem, size = 0x4, offset = 0x4, fixed_abs, tag = 'smem constant byte address 0x4 - core index']
  #allocation1 [shape = 'u32[144,128]{1,0:T(1,128)}', space=vmem, size = 0x12000, scoped, tag = 'internal scratch']
  %s0 = inlined_call_operand.vmem [shape: f32[2,296,128], index: 0, kind: input, shape index: {}]
  %s1 = inlined_call_operand.vmem [shape: f32[256,1], index: 1, kind: input, shape index: {}]
  %s2 = inlined_call_operand.vmem [shape: f32[256,1], index: 2, kind: input, shape index: {}]
  %s3 = inlined_call_operand.vmem [shape: bf16[9,128,128], index: 3, kind: input, shape index: {}]
  %s4 = inlined_call_operand.vmem [shape: f32[512,128], index: 4, kind: output, shape index: {0}]
  %s5 = inlined_call_operand.vmem [shape: f32[2,128], index: 5, kind: output, shape index: {1}]
  %6 = xla_tuple %s4, %s5
  %s7 = sld [smem:[#allocation0]]
  $region61: #{resblock_forward.3} parent=0
    _
  %s9 = ssub.s32 1, %s7
  %s10 = scalar_select 0, %s9, %s7
  loop: start=0, step=1, limit=4
  $region2: #{resblock_forward.3} parent=0 // loop_pre_header
    _
  $region3: #{resblock_forward.3} parent=0 // loop_header
    %s12 = sphi 0, %s16
    %p13 = scmp.ge.s32.totalorder %s12, 4
    %s22 = sphi 0, %s24
    %s25 = sphi 0, %s22
    %s26 = sphi 0, %s25
    %s42 = sphi 0, %s26
    %s46 = sphi 0, %s46
    %s48 = sphi 0, %s46
    %s49 = sphi 0, %s48
    %s63 = sphi 0, %s49
    %s67 = sphi 0, %s67
    %s69 = sphi 0, %s67
    %s70 = sphi 0, %s69
    %s84 = sphi 0, %s70
    %s88 = sphi 0, %s88
    %s90 = sphi 0, %s88
    %s91 = sphi 0, %s90
    %s105 = sphi 0, %s91
    %s111 = sphi 0, %s113
    %s114 = sphi 0, %s111
    %s115 = sphi 0, %s114
    %s131 = sphi 0, %s115
    %s135 = sphi 0, %s135
    %s137 = sphi 0, %s135
    %s138 = sphi 0, %s137
    %s152 = sphi 0, %s138
  $region4: #{resblock_forward.3} parent=0 // loop_header_branch
    %15 = sbr.rel (%p13) target = $region8
  $region5: #{resblock_forward.3} parent=0 // loop_body
    %s17 = ssub.s32 %s12, 1
    %s18 = ssub.s32 %s12, 2
    %s19 = sadd.s32 %s12, 1
    %s20 = ssub.s32 %s12, %s19
    %p21 = scmp.eq.s32.totalorder %s20, 0
    %s23 = sadd.s32 %s22, 1
    %s24 = scalar_select %p21, %s22, %s23
    %p27 = pneg %p21
    %p28 = scmp.eq.s32.totalorder %s12, 1
    %p29 = por %p27, %p28
    %p30 = scmp.ne.s32.totalorder %s22, %s25
    %p31 = scmp.eq.s32.totalorder %s12, 0
    %p32 = por %p30, %p31
    %p33 = scmp.ne.s32.totalorder %s22, %s25
    %p34 = scmp.eq.s32.totalorder %s17, 1
    %p35 = por %p33, %p34
    %p36 = scmp.ne.s32.totalorder %s25, %s26
    %p37 = scmp.eq.s32.totalorder %s17, 0
    %p38 = por %p36, %p37
    %p39 = scmp.ne.s32.totalorder %s25, %s26
    %p40 = scmp.eq.s32.totalorder %s18, 1
    %p41 = por %p39, %p40
    %p43 = scmp.ne.s32.totalorder %s26, %s42
    %p44 = scmp.eq.s32.totalorder %s18, 0
    %p45 = por %p43, %p44
    %s47 = sadd.s32 %s46, 1
    %p50 = scmp.eq.s32.totalorder %s12, 1
    %p51 = scmp.ne.s32.totalorder %s46, %s48
    %p52 = scmp.eq.s32.totalorder %s12, 0
    %p53 = por %p51, %p52
    %p54 = scmp.ne.s32.totalorder %s46, %s48
    %p55 = scmp.eq.s32.totalorder %s17, 1
    %p56 = por %p54, %p55
    %p57 = scmp.ne.s32.totalorder %s48, %s49
    %p58 = scmp.eq.s32.totalorder %s17, 0
    %p59 = por %p57, %p58
    %p60 = scmp.ne.s32.totalorder %s48, %s49
    %p61 = scmp.eq.s32.totalorder %s18, 1
    %p62 = por %p60, %p61
    %p64 = scmp.ne.s32.totalorder %s49, %s63
    %p65 = scmp.eq.s32.totalorder %s18, 0
    %p66 = por %p64, %p65
    %s68 = sadd.s32 %s67, 1
    %p71 = scmp.eq.s32.totalorder %s12, 1
    %p72 = scmp.ne.s32.totalorder %s67, %s69
    %p73 = scmp.eq.s32.totalorder %s12, 0
    %p74 = por %p72, %p73
    %p75 = scmp.ne.s32.totalorder %s67, %s69
    %p76 = scmp.eq.s32.totalorder %s17, 1
    %p77 = por %p75, %p76
    %p78 = scmp.ne.s32.totalorder %s69, %s70
    %p79 = scmp.eq.s32.totalorder %s17, 0
    %p80 = por %p78, %p79
    %p81 = scmp.ne.s32.totalorder %s69, %s70
    %p82 = scmp.eq.s32.totalorder %s18, 1
    %p83 = por %p81, %p82
    %p85 = scmp.ne.s32.totalorder %s70, %s84
    %p86 = scmp.eq.s32.totalorder %s18, 0
    %p87 = por %p85, %p86
    %s89 = sadd.s32 %s88, 1
    %p92 = scmp.eq.s32.totalorder %s12, 1
    %p93 = scmp.ne.s32.totalorder %s88, %s90
    %p94 = scmp.eq.s32.totalorder %s12, 0
    %p95 = por %p93, %p94
    %p96 = scmp.ne.s32.totalorder %s88, %s90
    %p97 = scmp.eq.s32.totalorder %s17, 1
    %p98 = por %p96, %p97
    %p99 = scmp.ne.s32.totalorder %s90, %s91
    %p100 = scmp.eq.s32.totalorder %s17, 0
    %p101 = por %p99, %p100
    %p102 = scmp.ne.s32.totalorder %s90, %s91
    %p103 = scmp.eq.s32.totalorder %s18, 1
    %p104 = por %p102, %p103
    %p106 = scmp.ne.s32.totalorder %s91, %s105
    %p107 = scmp.eq.s32.totalorder %s18, 0
    %p108 = por %p106, %p107
    %s109 = ssub.s32 %s12, %s19
    %p110 = scmp.eq.s32.totalorder %s109, 0
    %s112 = sadd.s32 %s111, 1
    %s113 = scalar_select %p110, %s111, %s112
    %p116 = pneg %p110
    %p117 = scmp.eq.s32.totalorder %s12, 1
    %p118 = por %p116, %p117
    %p119 = scmp.ne.s32.totalorder %s111, %s114
    %p120 = scmp.eq.s32.totalorder %s12, 0
    %p121 = por %p119, %p120
    %p122 = scmp.ne.s32.totalorder %s111, %s114
    %p123 = scmp.eq.s32.totalorder %s17, 1
    %p124 = por %p122, %p123
    %p125 = scmp.ne.s32.totalorder %s114, %s115
    %p126 = scmp.eq.s32.totalorder %s17, 0
    %p127 = por %p125, %p126
    %p128 = scmp.ne.s32.totalorder %s114, %s115
    %p129 = scmp.eq.s32.totalorder %s18, 1
    %p130 = por %p128, %p129
    %p132 = scmp.ne.s32.totalorder %s115, %s131
    %p133 = scmp.eq.s32.totalorder %s18, 0
    %p134 = por %p132, %p133
    %s136 = sadd.s32 %s135, 1
    %p139 = scmp.eq.s32.totalorder %s12, 1
    %p140 = scmp.ne.s32.totalorder %s135, %s137
    %p141 = scmp.eq.s32.totalorder %s12, 0
    %p142 = por %p140, %p141
    %p143 = scmp.ne.s32.totalorder %s135, %s137
    %p144 = scmp.eq.s32.totalorder %s17, 1
    %p145 = por %p143, %p144
    %p146 = scmp.ne.s32.totalorder %s137, %s138
    %p147 = scmp.eq.s32.totalorder %s17, 0
    %p148 = por %p146, %p147
    %p149 = scmp.ne.s32.totalorder %s137, %s138
    %p150 = scmp.eq.s32.totalorder %s18, 1
    %p151 = por %p149, %p150
    %p153 = scmp.ne.s32.totalorder %s138, %s152
    %p154 = scmp.eq.s32.totalorder %s18, 0
    %p155 = por %p153, %p154
    %p156 = scmp.le.s32.totalorder 1, %s12
    %p157 = scmp.lt.s32.totalorder %s12, 3
    %p158 = pnand %p156, %p157
    %p159 = pneg %p158
    // Predicated region
    $region9: #{resblock_forward.3} parent=5 // pred_check
      _
    $region10: #{resblock_forward.3} parent=5 // pred_check_branch
      %161 = sbr.rel (%p158) target = $region12
    $region11: #{resblock_forward.3} parent=5 // pred_region
      %s162 = ssub.s32 %s12, 1
      // Predicated region
      $region13: #{resblock_forward.3} parent=11 // pred_check
        %p163 = pneg %p59
      $region14: #{resblock_forward.3} parent=11 // pred_check_branch
        %165 = sbr.rel (%p163) target = $region16
      $region15: #{resblock_forward.3} parent=11 // pred_region
        _
      $region16: #{resblock_forward.3} parent=11 // pred_fallthru
        _
      // Predicated region
      $region17: #{resblock_forward.3} parent=11 // pred_check
        %p166 = pneg %p80
      $region18: #{resblock_forward.3} parent=11 // pred_check_branch
        %168 = sbr.rel (%p166) target = $region20
      $region19: #{resblock_forward.3} parent=11 // pred_region
        _
      $region20: #{resblock_forward.3} parent=11 // pred_fallthru
        _
      // Predicated region
      $region21: #{resblock_forward.3} parent=11 // pred_check
        %p169 = pneg %p101
      $region22: #{resblock_forward.3} parent=11 // pred_check_branch
        %171 = sbr.rel (%p169) target = $region24
      $region23: #{resblock_forward.3} parent=11 // pred_region
        _
      $region24: #{resblock_forward.3} parent=11 // pred_fallthru
        _
    $region12: #{resblock_forward.3} parent=5 // pred_fallthru
      _
    %p172 = scmp.lt.s32.totalorder %s12, 2
    // Predicated region
    $region25: #{resblock_forward.3} parent=5 // pred_check
      %p173 = pneg %p172
    $region26: #{resblock_forward.3} parent=5 // pred_check_branch
      %175 = sbr.rel (%p173) target = $region28
    $region27: #{resblock_forward.3} parent=5 // pred_region
      // Predicated region
      $region29: #{resblock_forward.3} parent=27 // pred_check
        %p176 = pneg %p32
      $region30: #{resblock_forward.3} parent=27 // pred_check_branch
        %178 = sbr.rel (%p176) target = $region32
      $region31: #{resblock_forward.3} parent=27 // pred_region
        %p179 = scmp.lt.s32.totalorder %s12, 1
        %s180 = scalar_select %p179, %s12, 1
        %s181 = smul.addr %s180, 37
        %s182 = smul.addr %s181, 8
        %s183 = scalar_lea.vmem %s0, %s182
      $region32: #{resblock_forward.3} parent=27 // pred_fallthru
        _
    $region28: #{resblock_forward.3} parent=5 // pred_fallthru
      _
    %p184 = scmp.le.s32.totalorder 1, %s12
    %p185 = scmp.lt.s32.totalorder %s12, 3
    %p186 = pnand %p184, %p185
    %p187 = pneg %p186
    // Predicated region
    $region33: #{resblock_forward.3} parent=5 // pred_check
      _
    $region34: #{resblock_forward.3} parent=5 // pred_check_branch
      %189 = sbr.rel (%p186) target = $region36
    $region35: #{resblock_forward.3} parent=5 // pred_region
      %s190 = ssub.s32 %s12, 1
      %p191 = scmp.lt.s32.totalorder %s17, 1
      %s192 = scalar_select %p191, %s17, 1
      %s193 = smul.addr %s192, 37
      %s194 = smul.addr %s193, 8
      %s195 = scalar_lea.vmem %s0, %s194
      %p196 = pneg %p38
      %p197 = pneg %p35
      %p198 = pneg %p59
      %p199 = pneg %p56
      %p200 = pneg %p80
      %p201 = pneg %p77
      %p202 = pneg %p101
      %p203 = pneg %p98
      %p204 = pneg %p127
      %p205 = pneg %p124
      %s206 = smul.u32 32, %s17
      %p207 = scmp.lt.s32.totalorder %s206, 63
      %s208 = scalar_select %p207, %s206, 63
      %s209 = smul.addr %s208, 8
      %s210 = scalar_lea.vmem %s4, %s209
      %p211 = pneg %p148
      %p212 = pneg %p145
      %p213 = scmp.lt.s32.totalorder %s17, 1
      %s214 = scalar_select %p213, %s17, 1
      %s215 = smul.addr %s214, 37
      %s216 = smul.addr %s215, 8
      %s217 = scalar_lea.vmem %s0, %s216
      %s218 = smul.u32 32, %s17
      %p219 = scmp.lt.s32.totalorder %s218, 63
      %s220 = scalar_select %p219, %s218, 63
      %s221 = smul.addr %s220, 8
      %s222 = scalar_lea.vmem %s4, %s221
      %s223 = smul.u32 32, %s17
      %p225 = scmp.eq.s32.totalorder %s17, 0
      // Predicated region
      $region37: #{resblock_forward.3} parent=35 // pred_check
        %p226 = pneg %p225
      $region38: #{resblock_forward.3} parent=35 // pred_check_branch
        %228 = sbr.rel (%p226) target = $region40
      $region39: #{resblock_forward.3} parent=35 // pred_region
        %229 = vst [vmem:[%s5] sm:$0x3] 0.0
      $region40: #{resblock_forward.3} parent=35 // pred_fallthru
        _
      %v230 = vld [vmem:[%s217] sm:$0xff]
      %v231 = vld [vmem:[%s217 + $0x8] sm:$0xff]
      %v232 = vld [vmem:[%s217 + $0x10] sm:$0xff]
      %v233 = vld [vmem:[%s217 + $0x18] sm:$0xff]
      %v234 = vld [vmem:[%s217 + $0x20] sm:$0xff]
      %v235 = vld [vmem:[%s217 + $0x28] sm:$0xff]
      %v236 = vld [vmem:[%s217 + $0x30] sm:$0xff]
      %v237 = vld [vmem:[%s217 + $0x38] sm:$0xff]
      %v238 = vld [vmem:[%s217 + $0x40] sm:$0xff]
      %v239 = vld [vmem:[%s217 + $0x48] sm:$0xff]
      %v240 = vld [vmem:[%s217 + $0x50] sm:$0xff]
      %v241 = vld [vmem:[%s217 + $0x58] sm:$0xff]
      %v242 = vld [vmem:[%s217 + $0x60] sm:$0xff]
      %v243 = vld [vmem:[%s217 + $0x68] sm:$0xff]
      %v244 = vld [vmem:[%s217 + $0x70] sm:$0xff]
      %v245 = vld [vmem:[%s217 + $0x78] sm:$0xff]
      %v246 = vld [vmem:[%s217 + $0x80] sm:$0xff]
      %v247 = vld [vmem:[%s217 + $0x88] sm:$0xff]
      %v248 = vld [vmem:[%s217 + $0x90] sm:$0xff]
      %v249 = vld [vmem:[%s217 + $0x98] sm:$0xff]
      %v250 = vld [vmem:[%s217 + $0xa0] sm:$0xff]
      %v251 = vld [vmem:[%s217 + $0xa8] sm:$0xff]
      %v252 = vld [vmem:[%s217 + $0xb0] sm:$0xff]
      %v253 = vld [vmem:[%s217 + $0xb8] sm:$0xff]
      %v254 = vld [vmem:[%s217 + $0xc0] sm:$0xff]
      %v255 = vld [vmem:[%s217 + $0xc8] sm:$0xff]
      %v256 = vld [vmem:[%s217 + $0xd0] sm:$0xff]
      %v257 = vld [vmem:[%s217 + $0xd8] sm:$0xff]
      %v258 = vld [vmem:[%s217 + $0xe0] sm:$0xff]
      %v259 = vld [vmem:[%s217 + $0xe8] sm:$0xff]
      %v260 = vld [vmem:[%s217 + $0xf0] sm:$0xff]
      %v261 = vld [vmem:[%s217 + $0xf8] sm:$0xff]
      %v262 = vld [vmem:[%s1] sm:$0xff]
      %v263 = vld [vmem:[%s1 + $0x8] sm:$0xff]
      %v264 = vld [vmem:[%s1 + $0x10] sm:$0xff]
      %v265 = vld [vmem:[%s1 + $0x18] sm:$0xff]
      %v266 = vld [vmem:[%s1 + $0x20] sm:$0xff]
      %v267 = vld [vmem:[%s1 + $0x28] sm:$0xff]
      %v268 = vld [vmem:[%s1 + $0x30] sm:$0xff]
      %v269 = vld [vmem:[%s1 + $0x38] sm:$0xff]
      %v270 = vld [vmem:[%s1 + $0x40] sm:$0xff]
      %v271 = vld [vmem:[%s1 + $0x48] sm:$0xff]
      %v272 = vld [vmem:[%s1 + $0x50] sm:$0xff]
      %v273 = vld [vmem:[%s1 + $0x58] sm:$0xff]
      %v274 = vld [vmem:[%s1 + $0x60] sm:$0xff]
      %v275 = vld [vmem:[%s1 + $0x68] sm:$0xff]
      %v276 = vld [vmem:[%s1 + $0x70] sm:$0xff]
      %v277 = vld [vmem:[%s1 + $0x78] sm:$0xff]
      %v278 = vld [vmem:[%s1 + $0x80] sm:$0xff]
      %v279 = vld [vmem:[%s1 + $0x88] sm:$0xff]
      %v280 = vld [vmem:[%s1 + $0x90] sm:$0xff]
      %v281 = vld [vmem:[%s1 + $0x98] sm:$0xff]
      %v282 = vld [vmem:[%s1 + $0xa0] sm:$0xff]
      %v283 = vld [vmem:[%s1 + $0xa8] sm:$0xff]
      %v284 = vld [vmem:[%s1 + $0xb0] sm:$0xff]
      %v285 = vld [vmem:[%s1 + $0xb8] sm:$0xff]
      %v286 = vld [vmem:[%s1 + $0xc0] sm:$0xff]
      %v287 = vld [vmem:[%s1 + $0xc8] sm:$0xff]
      %v288 = vld [vmem:[%s1 + $0xd0] sm:$0xff]
      %v289 = vld [vmem:[%s1 + $0xd8] sm:$0xff]
      %v290 = vld [vmem:[%s1 + $0xe0] sm:$0xff]
      %v291 = vld [vmem:[%s1 + $0xe8] sm:$0xff]
      %v292 = vld [vmem:[%s1 + $0xf0] sm:$0xff]
      %v293 = vld [vmem:[%s1 + $0xf8] sm:$0xff]
      %295 = vset.pattern.permute.xlu0 0
      %296 = vperm.xlu0 %295, %v262
      %v297 = vpop.permute.xlu0 %296
      %300 = vset.pattern.permute.xlu0 0
      %301 = vperm.xlu0 %300, %v263
      %v302 = vpop.permute.xlu0 %301
      %305 = vset.pattern.permute.xlu0 0
      %306 = vperm.xlu0 %305, %v264
      %v307 = vpop.permute.xlu0 %306
      %310 = vset.pattern.permute.xlu0 0
      %311 = vperm.xlu0 %310, %v265
      %v312 = vpop.permute.xlu0 %311
      %315 = vset.pattern.permute.xlu0 0
      %316 = vperm.xlu0 %315, %v266
      %v317 = vpop.permute.xlu0 %316
      %320 = vset.pattern.permute.xlu0 0
      %321 = vperm.xlu0 %320, %v267
      %v322 = vpop.permute.xlu0 %321
      %325 = vset.pattern.permute.xlu0 0
      %326 = vperm.xlu0 %325, %v268
      %v327 = vpop.permute.xlu0 %326
      %330 = vset.pattern.permute.xlu0 0
      %331 = vperm.xlu0 %330, %v269
      %v332 = vpop.permute.xlu0 %331
      %335 = vset.pattern.permute.xlu0 0
      %336 = vperm.xlu0 %335, %v270
      %v337 = vpop.permute.xlu0 %336
      %340 = vset.pattern.permute.xlu0 0
      %341 = vperm.xlu0 %340, %v271
      %v342 = vpop.permute.xlu0 %341
      %345 = vset.pattern.permute.xlu0 0
      %346 = vperm.xlu0 %345, %v272
      %v347 = vpop.permute.xlu0 %346
      %350 = vset.pattern.permute.xlu0 0
      %351 = vperm.xlu0 %350, %v273
      %v352 = vpop.permute.xlu0 %351
      %355 = vset.pattern.permute.xlu0 0
      %356 = vperm.xlu0 %355, %v274
      %v357 = vpop.permute.xlu0 %356
      %360 = vset.pattern.permute.xlu0 0
      %361 = vperm.xlu0 %360, %v275
      %v362 = vpop.permute.xlu0 %361
      %365 = vset.pattern.permute.xlu0 0
      %366 = vperm.xlu0 %365, %v276
      %v367 = vpop.permute.xlu0 %366
      %370 = vset.pattern.permute.xlu0 0
      %371 = vperm.xlu0 %370, %v277
      %v372 = vpop.permute.xlu0 %371
      %375 = vset.pattern.permute.xlu0 0
      %376 = vperm.xlu0 %375, %v278
      %v377 = vpop.permute.xlu0 %376
      %380 = vset.pattern.permute.xlu0 0
      %381 = vperm.xlu0 %380, %v279
      %v382 = vpop.permute.xlu0 %381
      %385 = vset.pattern.permute.xlu0 0
      %386 = vperm.xlu0 %385, %v280
      %v387 = vpop.permute.xlu0 %386
      %390 = vset.pattern.permute.xlu0 0
      %391 = vperm.xlu0 %390, %v281
      %v392 = vpop.permute.xlu0 %391
      %395 = vset.pattern.permute.xlu0 0
      %396 = vperm.xlu0 %395, %v282
      %v397 = vpop.permute.xlu0 %396
      %400 = vset.pattern.permute.xlu0 0
      %401 = vperm.xlu0 %400, %v283
      %v402 = vpop.permute.xlu0 %401
      %405 = vset.pattern.permute.xlu0 0
      %406 = vperm.xlu0 %405, %v284
      %v407 = vpop.permute.xlu0 %406
      %410 = vset.pattern.permute.xlu0 0
      %411 = vperm.xlu0 %410, %v285
      %v412 = vpop.permute.xlu0 %411
      %415 = vset.pattern.permute.xlu0 0
      %416 = vperm.xlu0 %415, %v286
      %v417 = vpop.permute.xlu0 %416
      %420 = vset.pattern.permute.xlu0 0
      %421 = vperm.xlu0 %420, %v287
      %v422 = vpop.permute.xlu0 %421
      %425 = vset.pattern.permute.xlu0 0
      %426 = vperm.xlu0 %425, %v288
      %v427 = vpop.permute.xlu0 %426
      %430 = vset.pattern.permute.xlu0 0
      %431 = vperm.xlu0 %430, %v289
      %v432 = vpop.permute.xlu0 %431
      %435 = vset.pattern.permute.xlu0 0
      %436 = vperm.xlu0 %435, %v290
      %v437 = vpop.permute.xlu0 %436
      %440 = vset.pattern.permute.xlu0 0
      %441 = vperm.xlu0 %440, %v291
      %v442 = vpop.permute.xlu0 %441
      %445 = vset.pattern.permute.xlu0 0
      %446 = vperm.xlu0 %445, %v292
      %v447 = vpop.permute.xlu0 %446
      %450 = vset.pattern.permute.xlu0 0
      %451 = vperm.xlu0 %450, %v293
      %v452 = vpop.permute.xlu0 %451
      %v454 = vmul.f32 %v230, %v297
      %v455 = vmul.f32 %v231, %v302
      %v456 = vmul.f32 %v232, %v307
      %v457 = vmul.f32 %v233, %v312
      %v458 = vmul.f32 %v234, %v317
      %v459 = vmul.f32 %v235, %v322
      %v460 = vmul.f32 %v236, %v327
      %v461 = vmul.f32 %v237, %v332
      %v462 = vmul.f32 %v238, %v337
      %v463 = vmul.f32 %v239, %v342
      %v464 = vmul.f32 %v240, %v347
      %v465 = vmul.f32 %v241, %v352
      %v466 = vmul.f32 %v242, %v357
      %v467 = vmul.f32 %v243, %v362
      %v468 = vmul.f32 %v244, %v367
      %v469 = vmul.f32 %v245, %v372
      %v470 = vmul.f32 %v246, %v377
      %v471 = vmul.f32 %v247, %v382
      %v472 = vmul.f32 %v248, %v387
      %v473 = vmul.f32 %v249, %v392
      %v474 = vmul.f32 %v250, %v397
      %v475 = vmul.f32 %v251, %v402
      %v476 = vmul.f32 %v252, %v407
      %v477 = vmul.f32 %v253, %v412
      %v478 = vmul.f32 %v254, %v417
      %v479 = vmul.f32 %v255, %v422
      %v480 = vmul.f32 %v256, %v427
      %v481 = vmul.f32 %v257, %v432
      %v482 = vmul.f32 %v258, %v437
      %v483 = vmul.f32 %v259, %v442
      %v484 = vmul.f32 %v260, %v447
      %v485 = vmul.f32 %v261, %v452
      %v486 = vpack.c.bf16 %v455, %v454
      %v487 = vpack.c.bf16 %v457, %v456
      %v488 = vpack.c.bf16 %v459, %v458
      %v489 = vpack.c.bf16 %v461, %v460
      %v490 = vpack.c.bf16 %v463, %v462
      %v491 = vpack.c.bf16 %v465, %v464
      %v492 = vpack.c.bf16 %v467, %v466
      %v493 = vpack.c.bf16 %v469, %v468
      %v494 = vpack.c.bf16 %v471, %v470
      %v495 = vpack.c.bf16 %v473, %v472
      %v496 = vpack.c.bf16 %v475, %v474
      %v497 = vpack.c.bf16 %v477, %v476
      %v498 = vpack.c.bf16 %v479, %v478
      %v499 = vpack.c.bf16 %v481, %v480
      %v500 = vpack.c.bf16 %v483, %v482
      %v501 = vpack.c.bf16 %v485, %v484
      %v502 = vld [vmem:[%s3] sm:$0xf]
      %v503 = vld [vmem:[%s3 + $0x4] sm:$0xf]
      %v504 = vld [vmem:[%s3 + $0x8] sm:$0xf]
      %v505 = vld [vmem:[%s3 + $0xc] sm:$0xf]
      %v506 = vld [vmem:[%s3 + $0x10] sm:$0xf]
      %v507 = vld [vmem:[%s3 + $0x14] sm:$0xf]
      %v508 = vld [vmem:[%s3 + $0x18] sm:$0xf]
      %v509 = vld [vmem:[%s3 + $0x1c] sm:$0xf]
      %v510 = vld [vmem:[%s3 + $0x20] sm:$0xf]
      %v511 = vld [vmem:[%s3 + $0x24] sm:$0xf]
      %v512 = vld [vmem:[%s3 + $0x28] sm:$0xf]
      %v513 = vld [vmem:[%s3 + $0x2c] sm:$0xf]
      %v514 = vld [vmem:[%s3 + $0x30] sm:$0xf]
      %v515 = vld [vmem:[%s3 + $0x34] sm:$0xf]
      %v516 = vld [vmem:[%s3 + $0x38] sm:$0xf]
      %v517 = vld [vmem:[%s3 + $0x3c] sm:$0xf]
      %v518 = vld [vmem:[%s217 + $0x1] sm:$0xff]
      %v519 = vld [vmem:[%s217 + $0x9] sm:$0xff]
      %v520 = vld [vmem:[%s217 + $0x11] sm:$0xff]
      %v521 = vld [vmem:[%s217 + $0x19] sm:$0xff]
      %v522 = vld [vmem:[%s217 + $0x21] sm:$0xff]
      %v523 = vld [vmem:[%s217 + $0x29] sm:$0xff]
      %v524 = vld [vmem:[%s217 + $0x31] sm:$0xff]
      %v525 = vld [vmem:[%s217 + $0x39] sm:$0xff]
      %v526 = vld [vmem:[%s217 + $0x41] sm:$0xff]
      %v527 = vld [vmem:[%s217 + $0x49] sm:$0xff]
      %v528 = vld [vmem:[%s217 + $0x51] sm:$0xff]
      %v529 = vld [vmem:[%s217 + $0x59] sm:$0xff]
      %v530 = vld [vmem:[%s217 + $0x61] sm:$0xff]
      %v531 = vld [vmem:[%s217 + $0x69] sm:$0xff]
      %v532 = vld [vmem:[%s217 + $0x71] sm:$0xff]
      %v533 = vld [vmem:[%s217 + $0x79] sm:$0xff]
      %v534 = vld [vmem:[%s217 + $0x81] sm:$0xff]
      %v535 = vld [vmem:[%s217 + $0x89] sm:$0xff]
      %v536 = vld [vmem:[%s217 + $0x91] sm:$0xff]
      %v537 = vld [vmem:[%s217 + $0x99] sm:$0xff]
      %v538 = vld [vmem:[%s217 + $0xa1] sm:$0xff]
      %v539 = vld [vmem:[%s217 + $0xa9] sm:$0xff]
      %v540 = vld [vmem:[%s217 + $0xb1] sm:$0xff]
      %v541 = vld [vmem:[%s217 + $0xb9] sm:$0xff]
      %v542 = vld [vmem:[%s217 + $0xc1] sm:$0xff]
      %v543 = vld [vmem:[%s217 + $0xc9] sm:$0xff]
      %v544 = vld [vmem:[%s217 + $0xd1] sm:$0xff]
      %v545 = vld [vmem:[%s217 + $0xd9] sm:$0xff]
      %v546 = vld [vmem:[%s217 + $0xe1] sm:$0xff]
      %v547 = vld [vmem:[%s217 + $0xe9] sm:$0xff]
      %v548 = vld [vmem:[%s217 + $0xf1] sm:$0xff]
      %v549 = vld [vmem:[%s217 + $0xf9] sm:$0xff]
      %v550 = vpack.c.bf16 %v519, %v518
      %v551 = vpack.c.bf16 %v521, %v520
      %v552 = vpack.c.bf16 %v523, %v522
      %v553 = vpack.c.bf16 %v525, %v524
      %v554 = vpack.c.bf16 %v527, %v526
      %v555 = vpack.c.bf16 %v529, %v528
      %v556 = vpack.c.bf16 %v531, %v530
      %v557 = vpack.c.bf16 %v533, %v532
      %v558 = vpack.c.bf16 %v535, %v534
      %v559 = vpack.c.bf16 %v537, %v536
      %v560 = vpack.c.bf16 %v539, %v538
      %v561 = vpack.c.bf16 %v541, %v540
      %v562 = vpack.c.bf16 %v543, %v542
      %v563 = vpack.c.bf16 %v545, %v544
      %v564 = vpack.c.bf16 %v547, %v546
      %v565 = vpack.c.bf16 %v549, %v548
      %s566 = scalar_lea.vmem %s3, 64
      %v567 = vld [vmem:[%s566] sm:$0xf]
      %v568 = vld [vmem:[%s566 + $0x4] sm:$0xf]
      %v569 = vld [vmem:[%s566 + $0x8] sm:$0xf]
      %v570 = vld [vmem:[%s566 + $0xc] sm:$0xf]
      %v571 = vld [vmem:[%s566 + $0x10] sm:$0xf]
      %v572 = vld [vmem:[%s566 + $0x14] sm:$0xf]
      %v573 = vld [vmem:[%s566 + $0x18] sm:$0xf]
      %v574 = vld [vmem:[%s566 + $0x1c] sm:$0xf]
      %v575 = vld [vmem:[%s566 + $0x20] sm:$0xf]
      %v576 = vld [vmem:[%s566 + $0x24] sm:$0xf]
      %v577 = vld [vmem:[%s566 + $0x28] sm:$0xf]
      %v578 = vld [vmem:[%s566 + $0x2c] sm:$0xf]
      %v579 = vld [vmem:[%s566 + $0x30] sm:$0xf]
      %v580 = vld [vmem:[%s566 + $0x34] sm:$0xf]
      %v581 = vld [vmem:[%s566 + $0x38] sm:$0xf]
      %v582 = vld [vmem:[%s566 + $0x3c] sm:$0xf]
      %v599 = vunpack.c.l.b16 %v567
      %v600 = vunpack.c.l.b16 %v568
      %v601 = vunpack.c.l.b16 %v569
      %v602 = vunpack.c.l.b16 %v570
      %v603 = vunpack.c.l.b16 %v571
      %v604 = vunpack.c.l.b16 %v572
      %v605 = vunpack.c.l.b16 %v573
      %v606 = vunpack.c.l.b16 %v574
      %v607 = vunpack.c.l.b16 %v575
      %v608 = vunpack.c.l.b16 %v576
      %v609 = vunpack.c.l.b16 %v577
      %v610 = vunpack.c.l.b16 %v578
      %v611 = vunpack.c.l.b16 %v579
      %v612 = vunpack.c.l.b16 %v580
      %v613 = vunpack.c.l.b16 %v581
      %v614 = vunpack.c.l.b16 %v582
      %v615 = vpack.c.b16 %v600, %v599
      %v616 = vpack.c.b16 %v602, %v601
      %v617 = vpack.c.b16 %v604, %v603
      %v618 = vpack.c.b16 %v606, %v605
      %v619 = vpack.c.b16 %v608, %v607
      %v620 = vpack.c.b16 %v610, %v609
      %v621 = vpack.c.b16 %v612, %v611
      %v622 = vpack.c.b16 %v614, %v613
      %631 = vmatprep.subr.bf16.mxu0 0
      %632 = vmatpush1.bf16.msra.mxu0 %v615
      %633 = vmatprep.subr.bf16.mxu0 0
      %634 = vmatpush1.bf16.msra.mxu0 %v616
      %635 = vmatprep.subr.bf16.mxu0 0
      %636 = vmatpush1.bf16.msra.mxu0 %v617
      %637 = vmatprep.subr.bf16.mxu0 0
      %638 = vmatpush1.bf16.msra.mxu0 %v618
      %639 = vmatprep.subr.bf16.mxu0 0
      %640 = vmatpush1.bf16.msra.mxu0 %v619
      %641 = vmatprep.subr.bf16.mxu0 0
      %642 = vmatpush1.bf16.msra.mxu0 %v620
      %643 = vmatprep.subr.bf16.mxu0 0
      %644 = vmatpush1.bf16.msra.mxu0 %v621
      %645 = vmatprep.subr.bf16.mxu0 0
      %646 = vmatpush1.bf16.msra.mxu0 %v622
      %647 = vmatprep.subr.bf16.mxu0 0
      %648 = vmatpush1.bf16.msra.mxu0 0
      %649 = vmatprep.subr.bf16.mxu0 0
      %650 = vmatpush1.bf16.msra.mxu0 0
      %651 = vmatprep.subr.bf16.mxu0 0
      %652 = vmatpush1.bf16.msra.mxu0 0
      %653 = vmatprep.subr.bf16.mxu0 0
      %654 = vmatpush1.bf16.msra.mxu0 0
      %655 = vmatprep.subr.bf16.mxu0 0
      %656 = vmatpush1.bf16.msra.mxu0 0
      %657 = vmatprep.subr.bf16.mxu0 0
      %658 = vmatpush1.bf16.msra.mxu0 0
      %659 = vmatprep.subr.bf16.mxu0 0
      %660 = vmatpush1.bf16.msra.mxu0 0
      %661 = vmatprep.subr.bf16.mxu0 0
      %662 = vmatpush1.bf16.msra.mxu0 0
      %663 = vmatprep.mubr.bf16.mxu0 0
      %664 = vmatmul.mubr.bf16.gmra.mrb[0].mxu0 %v550
      %v665 = vpop.f32.mrb[0].mxu0
      %v666 = vadd.f32 0.0, %v665
      %v667 = vpop.f32.mrb[0].mxu0
      %v668 = vpop.f32.mrb[0].mxu0
      %v669 = vadd.f32 0.0, %v668
      %v670 = vpop.f32.mrb[0].mxu0
      %671 = vmatprep.mubr.bf16.mxu0 0
      %672 = vmatmul.mubr.bf16.gmra.mrb[0].mxu0 %v551
      %v673 = vpop.f32.mrb[0].mxu0
      %v674 = vadd.f32 0.0, %v673
      %v675 = vpop.f32.mrb[0].mxu0
      %v676 = vpop.f32.mrb[0].mxu0
      %v677 = vadd.f32 0.0, %v676
      %v678 = vpop.f32.mrb[0].mxu0
      %679 = vmatprep.mubr.bf16.mxu0 0
      %680 = vmatmul.mubr.bf16.gmra.mrb[0].mxu0 %v552
      %v681 = vpop.f32.mrb[0].mxu0
      %v682 = vadd.f32 0.0, %v681
      %v683 = vpop.f32.mrb[0].mxu0
      %v684 = vpop.f32.mrb[0].mxu0
      %v685 = vadd.f32 0.0, %v684
      %v686 = vpop.f32.mrb[0].mxu0
      %687 = vmatprep.mubr.bf16.mxu0 0
      %688 = vmatmul.mubr.bf16.gmra.mrb[0].mxu0 %v553
      %v689 = vpop.f32.mrb[0].mxu0
      %v690 = vadd.f32 0.0, %v689
      %v691 = vpop.f32.mrb[0].mxu0
      %v692 = vpop.f32.mrb[0].mxu0
      %v693 = vadd.f32 0.0, %v692
      %v694 = vpop.f32.mrb[0].mxu0
      %695 = vmatprep.mubr.bf16.mxu0 0
      %696 = vmatmul.mubr.bf16.gmra.mrb[0].mxu0 %v554
      %v697 = vpop.f32.mrb[0].mxu0
      %v698 = vadd.f32 0.0, %v697
      %v699 = vpop.f32.mrb[0].mxu0
      %v700 = vpop.f32.mrb[0].mxu0
      %v701 = vadd.f32 0.0, %v700
      %v702 = vpop.f32.mrb[0].mxu0
      %703 = vmatprep.mubr.bf16.mxu0 0
      %704 = vmatmul.mubr.bf16.gmra.mrb[0].mxu0 %v555
      %v705 = vpop.f32.mrb[0].mxu0
      %v706 = vadd.f32 0.0, %v705
      %v707 = vpop.f32.mrb[0].mxu0
      %v708 = vpop.f32.mrb[0].mxu0
      %v709 = vadd.f32 0.0, %v708
      %v710 = vpop.f32.mrb[0].mxu0
      %711 = vmatprep.mubr.bf16.mxu0 0
      %712 = vmatmul.mubr.bf16.gmra.mrb[0].mxu0 %v556
      %v713 = vpop.f32.mrb[0].mxu0
      %v714 = vadd.f32 0.0, %v713
      %v715 = vpop.f32.mrb[0].mxu0
      %v716 = vpop.f32.mrb[0].mxu0
      %v717 = vadd.f32 0.0, %v716
      %v718 = vpop.f32.mrb[0].mxu0
      %719 = vmatprep.mubr.bf16.mxu0 0
      %720 = vmatmul.mubr.bf16.gmra.mrb[0].mxu0 %v557
      %v721 = vpop.f32.mrb[0].mxu0
      %v722 = vadd.f32 0.0, %v721
      %v723 = vpop.f32.mrb[0].mxu0
      %v724 = vpop.f32.mrb[0].mxu0
      %v725 = vadd.f32 0.0, %v724
      %v726 = vpop.f32.mrb[0].mxu0
      %727 = vmatprep.mubr.bf16.mxu0 0
      %728 = vmatmul.mubr.bf16.gmra.mrb[0].mxu0 %v558
      %v729 = vpop.f32.mrb[0].mxu0
      %v730 = vadd.f32 0.0, %v729
      %v731 = vpop.f32.mrb[0].mxu0
      %v732 = vpop.f32.mrb[0].mxu0
      %v733 = vadd.f32 0.0, %v732
      %v734 = vpop.f32.mrb[0].mxu0
      %735 = vmatprep.mubr.bf16.mxu0 0
      %736 = vmatmul.mubr.bf16.gmra.mrb[0].mxu0 %v559
      %v737 = vpop.f32.mrb[0].mxu0
      %v738 = vadd.f32 0.0, %v737
      %v739 = vpop.f32.mrb[0].mxu0
      %v740 = vpop.f32.mrb[0].mxu0
      %v741 = vadd.f32 0.0, %v740
      %v742 = vpop.f32.mrb[0].mxu0
      %743 = vmatprep.mubr.bf16.mxu0 0
      %744 = vmatmul.mubr.bf16.gmra.mrb[0].mxu0 %v560
      %v745 = vpop.f32.mrb[0].mxu0
      %v746 = vadd.f32 0.0, %v745
      %v747 = vpop.f32.mrb[0].mxu0
      %v748 = vpop.f32.mrb[0].mxu0
      %v749 = vadd.f32 0.0, %v748
      %v750 = vpop.f32.mrb[0].mxu0
      %751 = vmatprep.mubr.bf16.mxu0 0
      %752 = vmatmul.mubr.bf16.gmra.mrb[0].mxu0 %v561
      %v753 = vpop.f32.mrb[0].mxu0
      %v754 = vadd.f32 0.0, %v753
      %v755 = vpop.f32.mrb[0].mxu0
      %v756 = vpop.f32.mrb[0].mxu0
      %v757 = vadd.f32 0.0, %v756
      %v758 = vpop.f32.mrb[0].mxu0
      %759 = vmatprep.mubr.bf16.mxu0 0
      %760 = vmatmul.mubr.bf16.gmra.mrb[0].mxu0 %v562
      %v761 = vpop.f32.mrb[0].mxu0
      %v762 = vadd.f32 0.0, %v761
      %v763 = vpop.f32.mrb[0].mxu0
      %v764 = vpop.f32.mrb[0].mxu0
      %v765 = vadd.f32 0.0, %v764
      %v766 = vpop.f32.mrb[0].mxu0
      %767 = vmatprep.mubr.bf16.mxu0 0
      %768 = vmatmul.mubr.bf16.gmra.mrb[0].mxu0 %v563
      %v769 = vpop.f32.mrb[0].mxu0
      %v770 = vadd.f32 0.0, %v769
      %v771 = vpop.f32.mrb[0].mxu0
      %v772 = vpop.f32.mrb[0].mxu0
      %v773 = vadd.f32 0.0, %v772
      %v774 = vpop.f32.mrb[0].mxu0
      %775 = vmatprep.mubr.bf16.mxu0 0
      %776 = vmatmul.mubr.bf16.gmra.mrb[0].mxu0 %v564
      %v777 = vpop.f32.mrb[0].mxu0
      %v778 = vadd.f32 0.0, %v777
      %v779 = vpop.f32.mrb[0].mxu0
      %v780 = vpop.f32.mrb[0].mxu0
      %v781 = vadd.f32 0.0, %v780
      %v782 = vpop.f32.mrb[0].mxu0
      %783 = vmatprep.mubr.bf16.mxu0 0
      %784 = vmatmul.mubr.bf16.gmra.mrb[0].mxu0 %v565
      %v785 = vpop.f32.mrb[0].mxu0
      %v786 = vadd.f32 0.0, %v785
      %v787 = vpop.f32.mrb[0].mxu0
      %v788 = vpop.f32.mrb[0].mxu0
      %v789 = vadd.f32 0.0, %v788
      %v790 = vpop.f32.mrb[0].mxu0
      %791 = vdwg.mxu0
      %v808 = vunpack.c.l.b16 %v502
      %v809 = vunpack.c.l.b16 %v503
      %v810 = vunpack.c.l.b16 %v504
      %v811 = vunpack.c.l.b16 %v505
      %v812 = vunpack.c.l.b16 %v506
      %v813 = vunpack.c.l.b16 %v507
      %v814 = vunpack.c.l.b16 %v508
      %v815 = vunpack.c.l.b16 %v509
      %v816 = vunpack.c.l.b16 %v510
      %v817 = vunpack.c.l.b16 %v511
      %v818 = vunpack.c.l.b16 %v512
      %v819 = vunpack.c.l.b16 %v513
      %v820 = vunpack.c.l.b16 %v514
      %v821 = vunpack.c.l.b16 %v515
      %v822 = vunpack.c.l.b16 %v516
      %v823 = vunpack.c.l.b16 %v517
      %v824 = vpack.c.b16 %v809, %v808
      %v825 = vpack.c.b16 %v811, %v810
      %v826 = vpack.c.b16 %v813, %v812
      %v827 = vpack.c.b16 %v815, %v814
      %v828 = vpack.c.b16 %v817, %v816
      %v829 = vpack.c.b16 %v819, %v818
      %v830 = vpack.c.b16 %v821, %v820
      %v831 = vpack.c.b16 %v823, %v822
      %840 = vmatprep.subr.bf16.mxu0 0
      %841 = vmatpush1.bf16.msra.mxu0 %v824
      %842 = vmatprep.subr.bf16.mxu0 0
      %843 = vmatpush1.bf16.msra.mxu0 %v825
      %844 = vmatprep.subr.bf16.mxu0 0
      %845 = vmatpush1.bf16.msra.mxu0 %v826
      %846 = vmatprep.subr.bf16.mxu0 0
      %847 = vmatpush1.bf16.msra.mxu0 %v827
      %848 = vmatprep.subr.bf16.mxu0 0
      %849 = vmatpush1.bf16.msra.mxu0 %v828
      %850 = vmatprep.subr.bf16.mxu0 0
      %851 = vmatpush1.bf16.msra.mxu0 %v829
      %852 = vmatprep.subr.bf16.mxu0 0
      %853 = vmatpush1.bf16.msra.mxu0 %v830
      %854 = vmatprep.subr.bf16.mxu0 0
      %855 = vmatpush1.bf16.msra.mxu0 %v831
      %856 = vmatprep.subr.bf16.mxu0 0
      %857 = vmatpush1.bf16.msra.mxu0 0
      %858 = vmatprep.subr.bf16.mxu0 0
      %859 = vmatpush1.bf16.msra.mxu0 0
      %860 = vmatprep.subr.bf16.mxu0 0
      %861 = vmatpush1.bf16.msra.mxu0 0
      %862 = vmatprep.subr.bf16.mxu0 0
      %863 = vmatpush1.bf16.msra.mxu0 0
      %864 = vmatprep.subr.bf16.mxu0 0
      %865 = vmatpush1.bf16.msra.mxu0 0
      %866 = vmatprep.subr.bf16.mxu0 0
      %867 = vmatpush1.bf16.msra.mxu0 0
      %868 = vmatprep.subr.bf16.mxu0 0
      %869 = vmatpush1.bf16.msra.mxu0 0
      %870 = vmatprep.subr.bf16.mxu0 0
      %871 = vmatpush1.bf16.msra.mxu0 0
      %872 = vmatprep.mubr.bf16.mxu0 0
      %873 = vmatmul.mubr.bf16.gmra.mrb[0].mxu0 %v486
      %v874 = vpop.f32.mrb[0].mxu0
      %v875 = vadd.f32 %v666, %v874
      %v876 = vpop.f32.mrb[0].mxu0
      %v877 = vpop.f32.mrb[0].mxu0
      %v878 = vadd.f32 %v669, %v877
      %v879 = vpop.f32.mrb[0].mxu0
      %880 = vmatprep.mubr.bf16.mxu0 0
      %881 = vmatmul.mubr.bf16.gmra.mrb[0].mxu0 %v487
      %v882 = vpop.f32.mrb[0].mxu0
      %v883 = vadd.f32 %v674, %v882
      %v884 = vpop.f32.mrb[0].mxu0
      %v885 = vpop.f32.mrb[0].mxu0
      %v886 = vadd.f32 %v677, %v885
      %v887 = vpop.f32.mrb[0].mxu0
      %888 = vmatprep.mubr.bf16.mxu0 0
      %889 = vmatmul.mubr.bf16.gmra.mrb[0].mxu0 %v488
      %v890 = vpop.f32.mrb[0].mxu0
      %v891 = vadd.f32 %v682, %v890
      %v892 = vpop.f32.mrb[0].mxu0
      %v893 = vpop.f32.mrb[0].mxu0
      %v894 = vadd.f32 %v685, %v893
      %v895 = vpop.f32.mrb[0].mxu0
      %896 = vmatprep.mubr.bf16.mxu0 0
      %897 = vmatmul.mubr.bf16.gmra.mrb[0].mxu0 %v489
      %v898 = vpop.f32.mrb[0].mxu0
      %v899 = vadd.f32 %v690, %v898
      %v900 = vpop.f32.mrb[0].mxu0
      %v901 = vpop.f32.mrb[0].mxu0
      %v902 = vadd.f32 %v693, %v901
      %v903 = vpop.f32.mrb[0].mxu0
      %904 = vmatprep.mubr.bf16.mxu0 0
      %905 = vmatmul.mubr.bf16.gmra.mrb[0].mxu0 %v490
      %v906 = vpop.f32.mrb[0].mxu0
      %v907 = vadd.f32 %v698, %v906
      %v908 = vpop.f32.mrb[0].mxu0
      %v909 = vpop.f32.mrb[0].mxu0
      %v910 = vadd.f32 %v701, %v909
      %v911 = vpop.f32.mrb[0].mxu0
      %912 = vmatprep.mubr.bf16.mxu0 0
      %913 = vmatmul.mubr.bf16.gmra.mrb[0].mxu0 %v491
      %v914 = vpop.f32.mrb[0].mxu0
      %v915 = vadd.f32 %v706, %v914
      %v916 = vpop.f32.mrb[0].mxu0
      %v917 = vpop.f32.mrb[0].mxu0
      %v918 = vadd.f32 %v709, %v917
      %v919 = vpop.f32.mrb[0].mxu0
      %920 = vmatprep.mubr.bf16.mxu0 0
      %921 = vmatmul.mubr.bf16.gmra.mrb[0].mxu0 %v492
      %v922 = vpop.f32.mrb[0].mxu0
      %v923 = vadd.f32 %v714, %v922
      %v924 = vpop.f32.mrb[0].mxu0
      %v925 = vpop.f32.mrb[0].mxu0
      %v926 = vadd.f32 %v717, %v925
      %v927 = vpop.f32.mrb[0].mxu0
      %928 = vmatprep.mubr.bf16.mxu0 0
      %929 = vmatmul.mubr.bf16.gmra.mrb[0].mxu0 %v493
      %v930 = vpop.f32.mrb[0].mxu0
      %v931 = vadd.f32 %v722, %v930
      %v932 = vpop.f32.mrb[0].mxu0
      %v933 = vpop.f32.mrb[0].mxu0
      %v934 = vadd.f32 %v725, %v933
      %v935 = vpop.f32.mrb[0].mxu0
      %936 = vmatprep.mubr.bf16.mxu0 0
      %937 = vmatmul.mubr.bf16.gmra.mrb[0].mxu0 %v494
      %v938 = vpop.f32.mrb[0].mxu0
      %v939 = vadd.f32 %v730, %v938
      %v940 = vpop.f32.mrb[0].mxu0
      %v941 = vpop.f32.mrb[0].mxu0
      %v942 = vadd.f32 %v733, %v941
      %v943 = vpop.f32.mrb[0].mxu0
      %944 = vmatprep.mubr.bf16.mxu0 0
      %945 = vmatmul.mubr.bf16.gmra.mrb[0].mxu0 %v495
      %v946 = vpop.f32.mrb[0].mxu0
      %v947 = vadd.f32 %v738, %v946
      %v948 = vpop.f32.mrb[0].mxu0
      %v949 = vpop.f32.mrb[0].mxu0
      %v950 = vadd.f32 %v741, %v949
      %v951 = vpop.f32.mrb[0].mxu0
      %952 = vmatprep.mubr.bf16.mxu0 0
      %953 = vmatmul.mubr.bf16.gmra.mrb[0].mxu0 %v496
      %v954 = vpop.f32.mrb[0].mxu0
      %v955 = vadd.f32 %v746, %v954
      %v956 = vpop.f32.mrb[0].mxu0
      %v957 = vpop.f32.mrb[0].mxu0
      %v958 = vadd.f32 %v749, %v957
      %v959 = vpop.f32.mrb[0].mxu0
      %960 = vmatprep.mubr.bf16.mxu0 0
      %961 = vmatmul.mubr.bf16.gmra.mrb[0].mxu0 %v497
      %v962 = vpop.f32.mrb[0].mxu0
      %v963 = vadd.f32 %v754, %v962
      %v964 = vpop.f32.mrb[0].mxu0
      %v965 = vpop.f32.mrb[0].mxu0
      %v966 = vadd.f32 %v757, %v965
      %v967 = vpop.f32.mrb[0].mxu0
      %968 = vmatprep.mubr.bf16.mxu0 0
      %969 = vmatmul.mubr.bf16.gmra.mrb[0].mxu0 %v498
      %v970 = vpop.f32.mrb[0].mxu0
      %v971 = vadd.f32 %v762, %v970
      %v972 = vpop.f32.mrb[0].mxu0
      %v973 = vpop.f32.mrb[0].mxu0
      %v974 = vadd.f32 %v765, %v973
      %v975 = vpop.f32.mrb[0].mxu0
      %976 = vmatprep.mubr.bf16.mxu0 0
      %977 = vmatmul.mubr.bf16.gmra.mrb[0].mxu0 %v499
      %v978 = vpop.f32.mrb[0].mxu0
      %v979 = vadd.f32 %v770, %v978
      %v980 = vpop.f32.mrb[0].mxu0
      %v981 = vpop.f32.mrb[0].mxu0
      %v982 = vadd.f32 %v773, %v981
      %v983 = vpop.f32.mrb[0].mxu0
      %984 = vmatprep.mubr.bf16.mxu0 0
      %985 = vmatmul.mubr.bf16.gmra.mrb[0].mxu0 %v500
      %v986 = vpop.f32.mrb[0].mxu0
      %v987 = vadd.f32 %v778, %v986
      %v988 = vpop.f32.mrb[0].mxu0
      %v989 = vpop.f32.mrb[0].mxu0
      %v990 = vadd.f32 %v781, %v989
      %v991 = vpop.f32.mrb[0].mxu0
      %992 = vmatprep.mubr.bf16.mxu0 0
      %993 = vmatmul.mubr.bf16.gmra.mrb[0].mxu0 %v501
      %v994 = vpop.f32.mrb[0].mxu0
      %v995 = vadd.f32 %v786, %v994
      %v996 = vpop.f32.mrb[0].mxu0
      %v997 = vpop.f32.mrb[0].mxu0
      %v998 = vadd.f32 %v789, %v997
      %v999 = vpop.f32.mrb[0].mxu0
      %1000 = vdwg.mxu0
      %v1001 = vld [vmem:[%s217 + $0x2] sm:$0xff]
      %v1002 = vld [vmem:[%s217 + $0xa] sm:$0xff]
      %v1003 = vld [vmem:[%s217 + $0x12] sm:$0xff]
      %v1004 = vld [vmem:[%s217 + $0x1a] sm:$0xff]
      %v1005 = vld [vmem:[%s217 + $0x22] sm:$0xff]
      %v1006 = vld [vmem:[%s217 + $0x2a] sm:$0xff]
      %v1007 = vld [vmem:[%s217 + $0x32] sm:$0xff]
      %v1008 = vld [vmem:[%s217 + $0x3a] sm:$0xff]
      %v1009 = vld [vmem:[%s217 + $0x42] sm:$0xff]
      %v1010 = vld [vmem:[%s217 + $0x4a] sm:$0xff]
      %v1011 = vld [vmem:[%s217 + $0x52] sm:$0xff]
      %v1012 = vld [vmem:[%s217 + $0x5a] sm:$0xff]
      %v1013 = vld [vmem:[%s217 + $0x62] sm:$0xff]
      %v1014 = vld [vmem:[%s217 + $0x6a] sm:$0xff]
      %v1015 = vld [vmem:[%s217 + $0x72] sm:$0xff]
      %v1016 = vld [vmem:[%s217 + $0x7a] sm:$0xff]
      %v1017 = vld [vmem:[%s217 + $0x82] sm:$0xff]
      %v1018 = vld [vmem:[%s217 + $0x8a] sm:$0xff]
      %v1019 = vld [vmem:[%s217 + $0x92] sm:$0xff]
      %v1020 = vld [vmem:[%s217 + $0x9a] sm:$0xff]
      %v1021 = vld [vmem:[%s217 + $0xa2] sm:$0xff]
      %v1022 = vld [vmem:[%s217 + $0xaa] sm:$0xff]
      %v1023 = vld [vmem:[%s217 + $0xb2] sm:$0xff]
      %v1024 = vld [vmem:[%s217 + $0xba] sm:$0xff]
      %v1025 = vld [vmem:[%s217 + $0xc2] sm:$0xff]
      %v1026 = vld [vmem:[%s217 + $0xca] sm:$0xff]
      %v1027 = vld [vmem:[%s217 + $0xd2] sm:$0xff]
      %v1028 = vld [vmem:[%s217 + $0xda] sm:$0xff]
      %v1029 = vld [vmem:[%s217 + $0xe2] sm:$0xff]
      %v1030 = vld [vmem:[%s217 + $0xea] sm:$0xff]
      %v1031 = vld [vmem:[%s217 + $0xf2] sm:$0xff]
      %v1032 = vld [vmem:[%s217 + $0xfa] sm:$0xff]
      %v1033 = vld [vmem:[%s2] sm:$0xff]
      %v1034 = vld [vmem:[%s2 + $0x8] sm:$0xff]
      %v1035 = vld [vmem:[%s2 + $0x10] sm:$0xff]
      %v1036 = vld [vmem:[%s2 + $0x18] sm:$0xff]
      %v1037 = vld [vmem:[%s2 + $0x20] sm:$0xff]
      %v1038 = vld [vmem:[%s2 + $0x28] sm:$0xff]
      %v1039 = vld [vmem:[%s2 + $0x30] sm:$0xff]
      %v1040 = vld [vmem:[%s2 + $0x38] sm:$0xff]
      %v1041 = vld [vmem:[%s2 + $0x40] sm:$0xff]
      %v1042 = vld [vmem:[%s2 + $0x48] sm:$0xff]
      %v1043 = vld [vmem:[%s2 + $0x50] sm:$0xff]
      %v1044 = vld [vmem:[%s2 + $0x58] sm:$0xff]
      %v1045 = vld [vmem:[%s2 + $0x60] sm:$0xff]
      %v1046 = vld [vmem:[%s2 + $0x68] sm:$0xff]
      %v1047 = vld [vmem:[%s2 + $0x70] sm:$0xff]
      %v1048 = vld [vmem:[%s2 + $0x78] sm:$0xff]
      %v1049 = vld [vmem:[%s2 + $0x80] sm:$0xff]
      %v1050 = vld [vmem:[%s2 + $0x88] sm:$0xff]
      %v1051 = vld [vmem:[%s2 + $0x90] sm:$0xff]
      %v1052 = vld [vmem:[%s2 + $0x98] sm:$0xff]
      %v1053 = vld [vmem:[%s2 + $0xa0] sm:$0xff]
      %v1054 = vld [vmem:[%s2 + $0xa8] sm:$0xff]
      %v1055 = vld [vmem:[%s2 + $0xb0] sm:$0xff]
      %v1056 = vld [vmem:[%s2 + $0xb8] sm:$0xff]
      %v1057 = vld [vmem:[%s2 + $0xc0] sm:$0xff]
      %v1058 = vld [vmem:[%s2 + $0xc8] sm:$0xff]
      %v1059 = vld [vmem:[%s2 + $0xd0] sm:$0xff]
      %v1060 = vld [vmem:[%s2 + $0xd8] sm:$0xff]
      %v1061 = vld [vmem:[%s2 + $0xe0] sm:$0xff]
      %v1062 = vld [vmem:[%s2 + $0xe8] sm:$0xff]
      %v1063 = vld [vmem:[%s2 + $0xf0] sm:$0xff]
      %v1064 = vld [vmem:[%s2 + $0xf8] sm:$0xff]
      %1066 = vset.pattern.permute.xlu0 0
      %1067 = vperm.xlu0 %1066, %v1033
      %v1068 = vpop.permute.xlu0 %1067
      %1071 = vset.pattern.permute.xlu0 0
      %1072 = vperm.xlu0 %1071, %v1034
      %v1073 = vpop.permute.xlu0 %1072
      %1076 = vset.pattern.permute.xlu0 0
      %1077 = vperm.xlu0 %1076, %v1035
      %v1078 = vpop.permute.xlu0 %1077
      %1081 = vset.pattern.permute.xlu0 0
      %1082 = vperm.xlu0 %1081, %v1036
      %v1083 = vpop.permute.xlu0 %1082
      %1086 = vset.pattern.permute.xlu0 0
      %1087 = vperm.xlu0 %1086, %v1037
      %v1088 = vpop.permute.xlu0 %1087
      %1091 = vset.pattern.permute.xlu0 0
      %1092 = vperm.xlu0 %1091, %v1038
      %v1093 = vpop.permute.xlu0 %1092
      %1096 = vset.pattern.permute.xlu0 0
      %1097 = vperm.xlu0 %1096, %v1039
      %v1098 = vpop.permute.xlu0 %1097
      %1101 = vset.pattern.permute.xlu0 0
      %1102 = vperm.xlu0 %1101, %v1040
      %v1103 = vpop.permute.xlu0 %1102
      %1106 = vset.pattern.permute.xlu0 0
      %1107 = vperm.xlu0 %1106, %v1041
      %v1108 = vpop.permute.xlu0 %1107
      %1111 = vset.pattern.permute.xlu0 0
      %1112 = vperm.xlu0 %1111, %v1042
      %v1113 = vpop.permute.xlu0 %1112
      %1116 = vset.pattern.permute.xlu0 0
      %1117 = vperm.xlu0 %1116, %v1043
      %v1118 = vpop.permute.xlu0 %1117
      %1121 = vset.pattern.permute.xlu0 0
      %1122 = vperm.xlu0 %1121, %v1044
      %v1123 = vpop.permute.xlu0 %1122
      %1126 = vset.pattern.permute.xlu0 0
      %1127 = vperm.xlu0 %1126, %v1045
      %v1128 = vpop.permute.xlu0 %1127
      %1131 = vset.pattern.permute.xlu0 0
      %1132 = vperm.xlu0 %1131, %v1046
      %v1133 = vpop.permute.xlu0 %1132
      %1136 = vset.pattern.permute.xlu0 0
      %1137 = vperm.xlu0 %1136, %v1047
      %v1138 = vpop.permute.xlu0 %1137
      %1141 = vset.pattern.permute.xlu0 0
      %1142 = vperm.xlu0 %1141, %v1048
      %v1143 = vpop.permute.xlu0 %1142
      %1146 = vset.pattern.permute.xlu0 0
      %1147 = vperm.xlu0 %1146, %v1049
      %v1148 = vpop.permute.xlu0 %1147
      %1151 = vset.pattern.permute.xlu0 0
      %1152 = vperm.xlu0 %1151, %v1050
      %v1153 = vpop.permute.xlu0 %1152
      %1156 = vset.pattern.permute.xlu0 0
      %1157 = vperm.xlu0 %1156, %v1051
      %v1158 = vpop.permute.xlu0 %1157
      %1161 = vset.pattern.permute.xlu0 0
      %1162 = vperm.xlu0 %1161, %v1052
      %v1163 = vpop.permute.xlu0 %1162
      %1166 = vset.pattern.permute.xlu0 0
      %1167 = vperm.xlu0 %1166, %v1053
      %v1168 = vpop.permute.xlu0 %1167
      %1171 = vset.pattern.permute.xlu0 0
      %1172 = vperm.xlu0 %1171, %v1054
      %v1173 = vpop.permute.xlu0 %1172
      %1176 = vset.pattern.permute.xlu0 0
      %1177 = vperm.xlu0 %1176, %v1055
      %v1178 = vpop.permute.xlu0 %1177
      %1181 = vset.pattern.permute.xlu0 0
      %1182 = vperm.xlu0 %1181, %v1056
      %v1183 = vpop.permute.xlu0 %1182
      %1186 = vset.pattern.permute.xlu0 0
      %1187 = vperm.xlu0 %1186, %v1057
      %v1188 = vpop.permute.xlu0 %1187
      %1191 = vset.pattern.permute.xlu0 0
      %1192 = vperm.xlu0 %1191, %v1058
      %v1193 = vpop.permute.xlu0 %1192
      %1196 = vset.pattern.permute.xlu0 0
      %1197 = vperm.xlu0 %1196, %v1059
      %v1198 = vpop.permute.xlu0 %1197
      %1201 = vset.pattern.permute.xlu0 0
      %1202 = vperm.xlu0 %1201, %v1060
      %v1203 = vpop.permute.xlu0 %1202
      %1206 = vset.pattern.permute.xlu0 0
      %1207 = vperm.xlu0 %1206, %v1061
      %v1208 = vpop.permute.xlu0 %1207
      %1211 = vset.pattern.permute.xlu0 0
      %1212 = vperm.xlu0 %1211, %v1062
      %v1213 = vpop.permute.xlu0 %1212
      %1216 = vset.pattern.permute.xlu0 0
      %1217 = vperm.xlu0 %1216, %v1063
      %v1218 = vpop.permute.xlu0 %1217
      %1221 = vset.pattern.permute.xlu0 0
      %1222 = vperm.xlu0 %1221, %v1064
      %v1223 = vpop.permute.xlu0 %1222
      %v1225 = vmul.f32 %v1001, %v1068
      %v1226 = vmul.f32 %v1002, %v1073
      %v1227 = vmul.f32 %v1003, %v1078
      %v1228 = vmul.f32 %v1004, %v1083
      %v1229 = vmul.f32 %v1005, %v1088
      %v1230 = vmul.f32 %v1006, %v1093
      %v1231 = vmul.f32 %v1007, %v1098
      %v1232 = vmul.f32 %v1008, %v1103
      %v1233 = vmul.f32 %v1009, %v1108
      %v1234 = vmul.f32 %v1010, %v1113
      %v1235 = vmul.f32 %v1011, %v1118
      %v1236 = vmul.f32 %v1012, %v1123
      %v1237 = vmul.f32 %v1013, %v1128
      %v1238 = vmul.f32 %v1014, %v1133
      %v1239 = vmul.f32 %v1015, %v1138
      %v1240 = vmul.f32 %v1016, %v1143
      %v1241 = vmul.f32 %v1017, %v1148
      %v1242 = vmul.f32 %v1018, %v1153
      %v1243 = vmul.f32 %v1019, %v1158
      %v1244 = vmul.f32 %v1020, %v1163
      %v1245 = vmul.f32 %v1021, %v1168
      %v1246 = vmul.f32 %v1022, %v1173
      %v1247 = vmul.f32 %v1023, %v1178
      %v1248 = vmul.f32 %v1024, %v1183
      %v1249 = vmul.f32 %v1025, %v1188
      %v1250 = vmul.f32 %v1026, %v1193
      %v1251 = vmul.f32 %v1027, %v1198
      %v1252 = vmul.f32 %v1028, %v1203
      %v1253 = vmul.f32 %v1029, %v1208
      %v1254 = vmul.f32 %v1030, %v1213
      %v1255 = vmul.f32 %v1031, %v1218
      %v1256 = vmul.f32 %v1032, %v1223
      %v1257 = vpack.c.bf16 %v1226, %v1225
      %v1258 = vpack.c.bf16 %v1228, %v1227
      %v1259 = vpack.c.bf16 %v1230, %v1229
      %v1260 = vpack.c.bf16 %v1232, %v1231
      %v1261 = vpack.c.bf16 %v1234, %v1233
      %v1262 = vpack.c.bf16 %v1236, %v1235
      %v1263 = vpack.c.bf16 %v1238, %v1237
      %v1264 = vpack.c.bf16 %v1240, %v1239
      %v1265 = vpack.c.bf16 %v1242, %v1241
      %v1266 = vpack.c.bf16 %v1244, %v1243
      %v1267 = vpack.c.bf16 %v1246, %v1245
      %v1268 = vpack.c.bf16 %v1248, %v1247
      %v1269 = vpack.c.bf16 %v1250, %v1249
      %v1270 = vpack.c.bf16 %v1252, %v1251
      %v1271 = vpack.c.bf16 %v1254, %v1253
      %v1272 = vpack.c.bf16 %v1256, %v1255
      %s1273 = scalar_lea.vmem %s3, 128
      %v1274 = vld [vmem:[%s1273] sm:$0xf]
      %v1275 = vld [vmem:[%s1273 + $0x4] sm:$0xf]
      %v1276 = vld [vmem:[%s1273 + $0x8] sm:$0xf]
      %v1277 = vld [vmem:[%s1273 + $0xc] sm:$0xf]
      %v1278 = vld [vmem:[%s1273 + $0x10] sm:$0xf]
      %v1279 = vld [vmem:[%s1273 + $0x14] sm:$0xf]
      %v1280 = vld [vmem:[%s1273 + $0x18] sm:$0xf]
      %v1281 = vld [vmem:[%s1273 + $0x1c] sm:$0xf]
      %v1282 = vld [vmem:[%s1273 + $0x20] sm:$0xf]
      %v1283 = vld [vmem:[%s1273 + $0x24] sm:$0xf]
      %v1284 = vld [vmem:[%s1273 + $0x28] sm:$0xf]
      %v1285 = vld [vmem:[%s1273 + $0x2c] sm:$0xf]
      %v1286 = vld [vmem:[%s1273 + $0x30] sm:$0xf]
      %v1287 = vld [vmem:[%s1273 + $0x34] sm:$0xf]
      %v1288 = vld [vmem:[%s1273 + $0x38] sm:$0xf]
      %v1289 = vld [vmem:[%s1273 + $0x3c] sm:$0xf]
      %v1306 = vunpack.c.l.b16 %v1274
      %v1307 = vunpack.c.l.b16 %v1275
      %v1308 = vunpack.c.l.b16 %v1276
      %v1309 = vunpack.c.l.b16 %v1277
      %v1310 = vunpack.c.l.b16 %v1278
      %v1311 = vunpack.c.l.b16 %v1279
      %v1312 = vunpack.c.l.b16 %v1280
      %v1313 = vunpack.c.l.b16 %v1281
      %v1314 = vunpack.c.l.b16 %v1282
      %v1315 = vunpack.c.l.b16 %v1283
      %v1316 = vunpack.c.l.b16 %v1284
      %v1317 = vunpack.c.l.b16 %v1285
      %v1318 = vunpack.c.l.b16 %v1286
      %v1319 = vunpack.c.l.b16 %v1287
      %v1320 = vunpack.c.l.b16 %v1288
      %v1321 = vunpack.c.l.b16 %v1289
      %v1322 = vpack.c.b16 %v1307, %v1306
      %v1323 = vpack.c.b16 %v1309, %v1308
      %v1324 = vpack.c.b16 %v1311, %v1310
      %v1325 = vpack.c.b16 %v1313, %v1312
      %v1326 = vpack.c.b16 %v1315, %v1314
      %v1327 = vpack.c.b16 %v1317, %v1316
      %v1328 = vpack.c.b16 %v1319, %v1318
      %v1329 = vpack.c.b16 %v1321, %v1320
      %1338 = vmatprep.subr.bf16.mxu0 0
      %1339 = vmatpush1.bf16.msra.mxu0 %v1322
      %1340 = vmatprep.subr.bf16.mxu0 0
      %1341 = vmatpush1.bf16.msra.mxu0 %v1323
      %1342 = vmatprep.subr.bf16.mxu0 0
      %1343 = vmatpush1.bf16.msra.mxu0 %v1324
      %1344 = vmatprep.subr.bf16.mxu0 0
      %1345 = vmatpush1.bf16.msra.mxu0 %v1325
      %1346 = vmatprep.subr.bf16.mxu0 0
      %1347 = vmatpush1.bf16.msra.mxu0 %v1326
      %1348 = vmatprep.subr.bf16.mxu0 0
      %1349 = vmatpush1.bf16.msra.mxu0 %v1327
      %1350 = vmatprep.subr.bf16.mxu0 0
      %1351 = vmatpush1.bf16.msra.mxu0 %v1328
      %1352 = vmatprep.subr.bf16.mxu0 0
      %1353 = vmatpush1.bf16.msra.mxu0 %v1329
      %1354 = vmatprep.subr.bf16.mxu0 0
      %1355 = vmatpush1.bf16.msra.mxu0 0
      %1356 = vmatprep.subr.bf16.mxu0 0
      %1357 = vmatpush1.bf16.msra.mxu0 0
      %1358 = vmatprep.subr.bf16.mxu0 0
      %1359 = vmatpush1.bf16.msra.mxu0 0
      %1360 = vmatprep.subr.bf16.mxu0 0
      %1361 = vmatpush1.bf16.msra.mxu0 0
      %1362 = vmatprep.subr.bf16.mxu0 0
      %1363 = vmatpush1.bf16.msra.mxu0 0
      %1364 = vmatprep.subr.bf16.mxu0 0
      %1365 = vmatpush1.bf16.msra.mxu0 0
      %1366 = vmatprep.subr.bf16.mxu0 0
      %1367 = vmatpush1.bf16.msra.mxu0 0
      %1368 = vmatprep.subr.bf16.mxu0 0
      %1369 = vmatpush1.bf16.msra.mxu0 0
      %1370 = vmatprep.mubr.bf16.mxu0 0
      %1371 = vmatmul.mubr.bf16.gmra.mrb[0].mxu0 %v1257
      %v1372 = vpop.f32.mrb[0].mxu0
      %v1373 = vadd.f32 0.0, %v1372
      %v1374 = vpop.f32.mrb[0].mxu0
      %v1375 = vpop.f32.mrb[0].mxu0
      %v1376 = vadd.f32 0.0, %v1375
      %v1377 = vpop.f32.mrb[0].mxu0
      %1378 = vmatprep.mubr.bf16.mxu0 0
      %1379 = vmatmul.mubr.bf16.gmra.mrb[0].mxu0 %v1258
      %v1380 = vpop.f32.mrb[0].mxu0
      %v1381 = vadd.f32 0.0, %v1380
      %v1382 = vpop.f32.mrb[0].mxu0
      %v1383 = vpop.f32.mrb[0].mxu0
      %v1384 = vadd.f32 0.0, %v1383
      %v1385 = vpop.f32.mrb[0].mxu0
      %1386 = vmatprep.mubr.bf16.mxu0 0
      %1387 = vmatmul.mubr.bf16.gmra.mrb[0].mxu0 %v1259
      %v1388 = vpop.f32.mrb[0].mxu0
      %v1389 = vadd.f32 0.0, %v1388
      %v1390 = vpop.f32.mrb[0].mxu0
      %v1391 = vpop.f32.mrb[0].mxu0
      %v1392 = vadd.f32 0.0, %v1391
      %v1393 = vpop.f32.mrb[0].mxu0
      %1394 = vmatprep.mubr.bf16.mxu0 0
      %1395 = vmatmul.mubr.bf16.gmra.mrb[0].mxu0 %v1260
      %v1396 = vpop.f32.mrb[0].mxu0
      %v1397 = vadd.f32 0.0, %v1396
      %v1398 = vpop.f32.mrb[0].mxu0
      %v1399 = vpop.f32.mrb[0].mxu0
      %v1400 = vadd.f32 0.0, %v1399
      %v1401 = vpop.f32.mrb[0].mxu0
      %1402 = vmatprep.mubr.bf16.mxu0 0
      %1403 = vmatmul.mubr.bf16.gmra.mrb[0].mxu0 %v1261
      %v1404 = vpop.f32.mrb[0].mxu0
      %v1405 = vadd.f32 0.0, %v1404
      %v1406 = vpop.f32.mrb[0].mxu0
      %v1407 = vpop.f32.mrb[0].mxu0
      %v1408 = vadd.f32 0.0, %v1407
      %v1409 = vpop.f32.mrb[0].mxu0
      %1410 = vmatprep.mubr.bf16.mxu0 0
      %1411 = vmatmul.mubr.bf16.gmra.mrb[0].mxu0 %v1262
      %v1412 = vpop.f32.mrb[0].mxu0
      %v1413 = vadd.f32 0.0, %v1412
      %v1414 = vpop.f32.mrb[0].mxu0
      %v1415 = vpop.f32.mrb[0].mxu0
      %v1416 = vadd.f32 0.0, %v1415
      %v1417 = vpop.f32.mrb[0].mxu0
      %1418 = vmatprep.mubr.bf16.mxu0 0
      %1419 = vmatmul.mubr.bf16.gmra.mrb[0].mxu0 %v1263
      %v1420 = vpop.f32.mrb[0].mxu0
      %v1421 = vadd.f32 0.0, %v1420
      %v1422 = vpop.f32.mrb[0].mxu0
      %v1423 = vpop.f32.mrb[0].mxu0
      %v1424 = vadd.f32 0.0, %v1423
      %v1425 = vpop.f32.mrb[0].mxu0
      %1426 = vmatprep.mubr.bf16.mxu0 0
      %1427 = vmatmul.mubr.bf16.gmra.mrb[0].mxu0 %v1264
      %v1428 = vpop.f32.mrb[0].mxu0
      %v1429 = vadd.f32 0.0, %v1428
      %v1430 = vpop.f32.mrb[0].mxu0
      %v1431 = vpop.f32.mrb[0].mxu0
      %v1432 = vadd.f32 0.0, %v1431
      %v1433 = vpop.f32.mrb[0].mxu0
      %1434 = vmatprep.mubr.bf16.mxu0 0
      %1435 = vmatmul.mubr.bf16.gmra.mrb[0].mxu0 %v1265
      %v1436 = vpop.f32.mrb[0].mxu0
      %v1437 = vadd.f32 0.0, %v1436
      %v1438 = vpop.f32.mrb[0].mxu0
      %v1439 = vpop.f32.mrb[0].mxu0
      %v1440 = vadd.f32 0.0, %v1439
      %v1441 = vpop.f32.mrb[0].mxu0
      %1442 = vmatprep.mubr.bf16.mxu0 0
      %1443 = vmatmul.mubr.bf16.gmra.mrb[0].mxu0 %v1266
      %v1444 = vpop.f32.mrb[0].mxu0
      %v1445 = vadd.f32 0.0, %v1444
      %v1446 = vpop.f32.mrb[0].mxu0
      %v1447 = vpop.f32.mrb[0].mxu0
      %v1448 = vadd.f32 0.0, %v1447
      %v1449 = vpop.f32.mrb[0].mxu0
      %1450 = vmatprep.mubr.bf16.mxu0 0
      %1451 = vmatmul.mubr.bf16.gmra.mrb[0].mxu0 %v1267
      %v1452 = vpop.f32.mrb[0].mxu0
      %v1453 = vadd.f32 0.0, %v1452
      %v1454 = vpop.f32.mrb[0].mxu0
      %v1455 = vpop.f32.mrb[0].mxu0
      %v1456 = vadd.f32 0.0, %v1455
      %v1457 = vpop.f32.mrb[0].mxu0
      %1458 = vmatprep.mubr.bf16.mxu0 0
      %1459 = vmatmul.mubr.bf16.gmra.mrb[0].mxu0 %v1268
      %v1460 = vpop.f32.mrb[0].mxu0
      %v1461 = vadd.f32 0.0, %v1460
      %v1462 = vpop.f32.mrb[0].mxu0
      %v1463 = vpop.f32.mrb[0].mxu0
      %v1464 = vadd.f32 0.0, %v1463
      %v1465 = vpop.f32.mrb[0].mxu0
      %1466 = vmatprep.mubr.bf16.mxu0 0
      %1467 = vmatmul.mubr.bf16.gmra.mrb[0].mxu0 %v1269
      %v1468 = vpop.f32.mrb[0].mxu0
      %v1469 = vadd.f32 0.0, %v1468
      %v1470 = vpop.f32.mrb[0].mxu0
      %v1471 = vpop.f32.mrb[0].mxu0
      %v1472 = vadd.f32 0.0, %v1471
      %v1473 = vpop.f32.mrb[0].mxu0
      %1474 = vmatprep.mubr.bf16.mxu0 0
      %1475 = vmatmul.mubr.bf16.gmra.mrb[0].mxu0 %v1270
      %v1476 = vpop.f32.mrb[0].mxu0
      %v1477 = vadd.f32 0.0, %v1476
      %v1478 = vpop.f32.mrb[0].mxu0
      %v1479 = vpop.f32.mrb[0].mxu0
      %v1480 = vadd.f32 0.0, %v1479
      %v1481 = vpop.f32.mrb[0].mxu0
      %1482 = vmatprep.mubr.bf16.mxu0 0
      %1483 = vmatmul.mubr.bf16.gmra.mrb[0].mxu0 %v1271
      %v1484 = vpop.f32.mrb[0].mxu0
      %v1485 = vadd.f32 0.0, %v1484
      %v1486 = vpop.f32.mrb[0].mxu0
      %v1487 = vpop.f32.mrb[0].mxu0
      %v1488 = vadd.f32 0.0, %v1487
      %v1489 = vpop.f32.mrb[0].mxu0
      %1490 = vmatprep.mubr.bf16.mxu0 0
      %1491 = vmatmul.mubr.bf16.gmra.mrb[0].mxu0 %v1272
      %v1492 = vpop.f32.mrb[0].mxu0
      %v1493 = vadd.f32 0.0, %v1492
      %v1494 = vpop.f32.mrb[0].mxu0
      %v1495 = vpop.f32.mrb[0].mxu0
      %v1496 = vadd.f32 0.0, %v1495
      %v1497 = vpop.f32.mrb[0].mxu0
      %1498 = vdwg.mxu0
      %v1499 = vadd.f32 %v875, %v1373
      %v1500 = vadd.f32 %v878, %v1376
      %v1501 = vadd.f32 %v883, %v1381
      %v1502 = vadd.f32 %v886, %v1384
      %v1503 = vadd.f32 %v891, %v1389
      %v1504 = vadd.f32 %v894, %v1392
      %v1505 = vadd.f32 %v899, %v1397
      %v1506 = vadd.f32 %v902, %v1400
      %v1507 = vadd.f32 %v907, %v1405
      %v1508 = vadd.f32 %v910, %v1408
      %v1509 = vadd.f32 %v915, %v1413
      %v1510 = vadd.f32 %v918, %v1416
      %v1511 = vadd.f32 %v923, %v1421
      %v1512 = vadd.f32 %v926, %v1424
      %v1513 = vadd.f32 %v931, %v1429
      %v1514 = vadd.f32 %v934, %v1432
      %v1515 = vadd.f32 %v939, %v1437
      %v1516 = vadd.f32 %v942, %v1440
      %v1517 = vadd.f32 %v947, %v1445
      %v1518 = vadd.f32 %v950, %v1448
      %v1519 = vadd.f32 %v955, %v1453
      %v1520 = vadd.f32 %v958, %v1456
      %v1521 = vadd.f32 %v963, %v1461
      %v1522 = vadd.f32 %v966, %v1464
      %v1523 = vadd.f32 %v971, %v1469
      %v1524 = vadd.f32 %v974, %v1472
      %v1525 = vadd.f32 %v979, %v1477
      %v1526 = vadd.f32 %v982, %v1480
      %v1527 = vadd.f32 %v987, %v1485
      %v1528 = vadd.f32 %v990, %v1488
      %v1529 = vadd.f32 %v995, %v1493
      %v1530 = vadd.f32 %v998, %v1496
      %v1531 = vld [vmem:[%s217 + $0x10] sm:$0xff]
      %v1532 = vld [vmem:[%s217 + $0x18] sm:$0xff]
      %v1533 = vld [vmem:[%s217 + $0x20] sm:$0xff]
      %v1534 = vld [vmem:[%s217 + $0x28] sm:$0xff]
      %v1535 = vld [vmem:[%s217 + $0x30] sm:$0xff]
      %v1536 = vld [vmem:[%s217 + $0x38] sm:$0xff]
      %v1537 = vld [vmem:[%s217 + $0x40] sm:$0xff]
      %v1538 = vld [vmem:[%s217 + $0x48] sm:$0xff]
      %v1539 = vld [vmem:[%s217 + $0x50] sm:$0xff]
      %v1540 = vld [vmem:[%s217 + $0x58] sm:$0xff]
      %v1541 = vld [vmem:[%s217 + $0x60] sm:$0xff]
      %v1542 = vld [vmem:[%s217 + $0x68] sm:$0xff]
      %v1543 = vld [vmem:[%s217 + $0x70] sm:$0xff]
      %v1544 = vld [vmem:[%s217 + $0x78] sm:$0xff]
      %v1545 = vld [vmem:[%s217 + $0x80] sm:$0xff]
      %v1546 = vld [vmem:[%s217 + $0x88] sm:$0xff]
      %v1547 = vld [vmem:[%s217 + $0x90] sm:$0xff]
      %v1548 = vld [vmem:[%s217 + $0x98] sm:$0xff]
      %v1549 = vld [vmem:[%s217 + $0xa0] sm:$0xff]
      %v1550 = vld [vmem:[%s217 + $0xa8] sm:$0xff]
      %v1551 = vld [vmem:[%s217 + $0xb0] sm:$0xff]
      %v1552 = vld [vmem:[%s217 + $0xb8] sm:$0xff]
      %v1553 = vld [vmem:[%s217 + $0xc0] sm:$0xff]
      %v1554 = vld [vmem:[%s217 + $0xc8] sm:$0xff]
      %v1555 = vld [vmem:[%s217 + $0xd0] sm:$0xff]
      %v1556 = vld [vmem:[%s217 + $0xd8] sm:$0xff]
      %v1557 = vld [vmem:[%s217 + $0xe0] sm:$0xff]
      %v1558 = vld [vmem:[%s217 + $0xe8] sm:$0xff]
      %v1559 = vld [vmem:[%s217 + $0xf0] sm:$0xff]
      %v1560 = vld [vmem:[%s217 + $0xf8] sm:$0xff]
      %v1561 = vld [vmem:[%s217 + $0x100] sm:$0xff]
      %v1562 = vld [vmem:[%s217 + $0x108] sm:$0xff]
      %v1563 = vmul.f32 %v1531, %v297
      %v1564 = vmul.f32 %v1532, %v302
      %v1565 = vmul.f32 %v1533, %v307
      %v1566 = vmul.f32 %v1534, %v312
      %v1567 = vmul.f32 %v1535, %v317
      %v1568 = vmul.f32 %v1536, %v322
      %v1569 = vmul.f32 %v1537, %v327
      %v1570 = vmul.f32 %v1538, %v332
      %v1571 = vmul.f32 %v1539, %v337
      %v1572 = vmul.f32 %v1540, %v342
      %v1573 = vmul.f32 %v1541, %v347
      %v1574 = vmul.f32 %v1542, %v352
      %v1575 = vmul.f32 %v1543, %v357
      %v1576 = vmul.f32 %v1544, %v362
      %v1577 = vmul.f32 %v1545, %v367
      %v1578 = vmul.f32 %v1546, %v372
      %v1579 = vmul.f32 %v1547, %v377
      %v1580 = vmul.f32 %v1548, %v382
      %v1581 = vmul.f32 %v1549, %v387
      %v1582 = vmul.f32 %v1550, %v392
      %v1583 = vmul.f32 %v1551, %v397
      %v1584 = vmul.f32 %v1552, %v402
      %v1585 = vmul.f32 %v1553, %v407
      %v1586 = vmul.f32 %v1554, %v412
      %v1587 = vmul.f32 %v1555, %v417
      %v1588 = vmul.f32 %v1556, %v422
      %v1589 = vmul.f32 %v1557, %v427
      %v1590 = vmul.f32 %v1558, %v432
      %v1591 = vmul.f32 %v1559, %v437
      %v1592 = vmul.f32 %v1560, %v442
      %v1593 = vmul.f32 %v1561, %v447
      %v1594 = vmul.f32 %v1562, %v452
      %v1595 = vpack.c.bf16 %v1564, %v1563
      %v1596 = vpack.c.bf16 %v1566, %v1565
      %v1597 = vpack.c.bf16 %v1568, %v1567
      %v1598 = vpack.c.bf16 %v1570, %v1569
      %v1599 = vpack.c.bf16 %v1572, %v1571
      %v1600 = vpack.c.bf16 %v1574, %v1573
      %v1601 = vpack.c.bf16 %v1576, %v1575
      %v1602 = vpack.c.bf16 %v1578, %v1577
      %v1603 = vpack.c.bf16 %v1580, %v1579
      %v1604 = vpack.c.bf16 %v1582, %v1581
      %v1605 = vpack.c.bf16 %v1584, %v1583
      %v1606 = vpack.c.bf16 %v1586, %v1585
      %v1607 = vpack.c.bf16 %v1588, %v1587
      %v1608 = vpack.c.bf16 %v1590, %v1589
      %v1609 = vpack.c.bf16 %v1592, %v1591
      %v1610 = vpack.c.bf16 %v1594, %v1593
      %s1611 = scalar_lea.vmem %s3, 192
      %v1612 = vld [vmem:[%s1611] sm:$0xf]
      %v1613 = vld [vmem:[%s1611 + $0x4] sm:$0xf]
      %v1614 = vld [vmem:[%s1611 + $0x8] sm:$0xf]
      %v1615 = vld [vmem:[%s1611 + $0xc] sm:$0xf]
      %v1616 = vld [vmem:[%s1611 + $0x10] sm:$0xf]
      %v1617 = vld [vmem:[%s1611 + $0x14] sm:$0xf]
      %v1618 = vld [vmem:[%s1611 + $0x18] sm:$0xf]
      %v1619 = vld [vmem:[%s1611 + $0x1c] sm:$0xf]
      %v1620 = vld [vmem:[%s1611 + $0x20] sm:$0xf]
      %v1621 = vld [vmem:[%s1611 + $0x24] sm:$0xf]
      %v1622 = vld [vmem:[%s1611 + $0x28] sm:$0xf]
      %v1623 = vld [vmem:[%s1611 + $0x2c] sm:$0xf]
      %v1624 = vld [vmem:[%s1611 + $0x30] sm:$0xf]
      %v1625 = vld [vmem:[%s1611 + $0x34] sm:$0xf]
      %v1626 = vld [vmem:[%s1611 + $0x38] sm:$0xf]
      %v1627 = vld [vmem:[%s1611 + $0x3c] sm:$0xf]
      %v1644 = vunpack.c.l.b16 %v1612
      %v1645 = vunpack.c.l.b16 %v1613
      %v1646 = vunpack.c.l.b16 %v1614
      %v1647 = vunpack.c.l.b16 %v1615
      %v1648 = vunpack.c.l.b16 %v1616
      %v1649 = vunpack.c.l.b16 %v1617
      %v1650 = vunpack.c.l.b16 %v1618
      %v1651 = vunpack.c.l.b16 %v1619
      %v1652 = vunpack.c.l.b16 %v1620
      %v1653 = vunpack.c.l.b16 %v1621
      %v1654 = vunpack.c.l.b16 %v1622
      %v1655 = vunpack.c.l.b16 %v1623
      %v1656 = vunpack.c.l.b16 %v1624
      %v1657 = vunpack.c.l.b16 %v1625
      %v1658 = vunpack.c.l.b16 %v1626
      %v1659 = vunpack.c.l.b16 %v1627
      %v1660 = vpack.c.b16 %v1645, %v1644
      %v1661 = vpack.c.b16 %v1647, %v1646
      %v1662 = vpack.c.b16 %v1649, %v1648
      %v1663 = vpack.c.b16 %v1651, %v1650
      %v1664 = vpack.c.b16 %v1653, %v1652
      %v1665 = vpack.c.b16 %v1655, %v1654
      %v1666 = vpack.c.b16 %v1657, %v1656
      %v1667 = vpack.c.b16 %v1659, %v1658
      %1676 = vmatprep.subr.bf16.mxu0 0
      %1677 = vmatpush1.bf16.msra.mxu0 %v1660
      %1678 = vmatprep.subr.bf16.mxu0 0
      %1679 = vmatpush1.bf16.msra.mxu0 %v1661
      %1680 = vmatprep.subr.bf16.mxu0 0
      %1681 = vmatpush1.bf16.msra.mxu0 %v1662
      %1682 = vmatprep.subr.bf16.mxu0 0
      %1683 = vmatpush1.bf16.msra.mxu0 %v1663
      %1684 = vmatprep.subr.bf16.mxu0 0
      %1685 = vmatpush1.bf16.msra.mxu0 %v1664
      %1686 = vmatprep.subr.bf16.mxu0 0
      %1687 = vmatpush1.bf16.msra.mxu0 %v1665
      %1688 = vmatprep.subr.bf16.mxu0 0
      %1689 = vmatpush1.bf16.msra.mxu0 %v1666
      %1690 = vmatprep.subr.bf16.mxu0 0
      %1691 = vmatpush1.bf16.msra.mxu0 %v1667
      %1692 = vmatprep.subr.bf16.mxu0 0
      %1693 = vmatpush1.bf16.msra.mxu0 0
      %1694 = vmatprep.subr.bf16.mxu0 0
      %1695 = vmatpush1.bf16.msra.mxu0 0
      %1696 = vmatprep.subr.bf16.mxu0 0
      %1697 = vmatpush1.bf16.msra.mxu0 0
      %1698 = vmatprep.subr.bf16.mxu0 0
      %1699 = vmatpush1.bf16.msra.mxu0 0
      %1700 = vmatprep.subr.bf16.mxu0 0
      %1701 = vmatpush1.bf16.msra.mxu0 0
      %1702 = vmatprep.subr.bf16.mxu0 0
      %1703 = vmatpush1.bf16.msra.mxu0 0
      %1704 = vmatprep.subr.bf16.mxu0 0
      %1705 = vmatpush1.bf16.msra.mxu0 0
      %1706 = vmatprep.subr.bf16.mxu0 0
      %1707 = vmatpush1.bf16.msra.mxu0 0
      %1708 = vmatprep.mubr.bf16.mxu0 0
      %1709 = vmatmul.mubr.bf16.gmra.mrb[0].mxu0 %v1595
      %v1710 = vpop.f32.mrb[0].mxu0
      %v1711 = vadd.f32 0.0, %v1710
      %v1712 = vpop.f32.mrb[0].mxu0
      %v1713 = vpop.f32.mrb[0].mxu0
      %v1714 = vadd.f32 0.0, %v1713
      %v1715 = vpop.f32.mrb[0].mxu0
      %1716 = vmatprep.mubr.bf16.mxu0 0
      %1717 = vmatmul.mubr.bf16.gmra.mrb[0].mxu0 %v1596
      %v1718 = vpop.f32.mrb[0].mxu0
      %v1719 = vadd.f32 0.0, %v1718
      %v1720 = vpop.f32.mrb[0].mxu0
      %v1721 = vpop.f32.mrb[0].mxu0
      %v1722 = vadd.f32 0.0, %v1721
      %v1723 = vpop.f32.mrb[0].mxu0
      %1724 = vmatprep.mubr.bf16.mxu0 0
      %1725 = vmatmul.mubr.bf16.gmra.mrb[0].mxu0 %v1597
      %v1726 = vpop.f32.mrb[0].mxu0
      %v1727 = vadd.f32 0.0, %v1726
      %v1728 = vpop.f32.mrb[0].mxu0
      %v1729 = vpop.f32.mrb[0].mxu0
      %v1730 = vadd.f32 0.0, %v1729
      %v1731 = vpop.f32.mrb[0].mxu0
      %1732 = vmatprep.mubr.bf16.mxu0 0
      %1733 = vmatmul.mubr.bf16.gmra.mrb[0].mxu0 %v1598
      %v1734 = vpop.f32.mrb[0].mxu0
      %v1735 = vadd.f32 0.0, %v1734
      %v1736 = vpop.f32.mrb[0].mxu0
      %v1737 = vpop.f32.mrb[0].mxu0
      %v1738 = vadd.f32 0.0, %v1737
      %v1739 = vpop.f32.mrb[0].mxu0
      %1740 = vmatprep.mubr.bf16.mxu0 0
      %1741 = vmatmul.mubr.bf16.gmra.mrb[0].mxu0 %v1599
      %v1742 = vpop.f32.mrb[0].mxu0
      %v1743 = vadd.f32 0.0, %v1742
      %v1744 = vpop.f32.mrb[0].mxu0
      %v1745 = vpop.f32.mrb[0].mxu0
      %v1746 = vadd.f32 0.0, %v1745
      %v1747 = vpop.f32.mrb[0].mxu0
      %1748 = vmatprep.mubr.bf16.mxu0 0
      %1749 = vmatmul.mubr.bf16.gmra.mrb[0].mxu0 %v1600
      %v1750 = vpop.f32.mrb[0].mxu0
      %v1751 = vadd.f32 0.0, %v1750
      %v1752 = vpop.f32.mrb[0].mxu0
      %v1753 = vpop.f32.mrb[0].mxu0
      %v1754 = vadd.f32 0.0, %v1753
      %v1755 = vpop.f32.mrb[0].mxu0
      %1756 = vmatprep.mubr.bf16.mxu0 0
      %1757 = vmatmul.mubr.bf16.gmra.mrb[0].mxu0 %v1601
      %v1758 = vpop.f32.mrb[0].mxu0
      %v1759 = vadd.f32 0.0, %v1758
      %v1760 = vpop.f32.mrb[0].mxu0
      %v1761 = vpop.f32.mrb[0].mxu0
      %v1762 = vadd.f32 0.0, %v1761
      %v1763 = vpop.f32.mrb[0].mxu0
      %1764 = vmatprep.mubr.bf16.mxu0 0
      %1765 = vmatmul.mubr.bf16.gmra.mrb[0].mxu0 %v1602
      %v1766 = vpop.f32.mrb[0].mxu0
      %v1767 = vadd.f32 0.0, %v1766
      %v1768 = vpop.f32.mrb[0].mxu0
      %v1769 = vpop.f32.mrb[0].mxu0
      %v1770 = vadd.f32 0.0, %v1769
      %v1771 = vpop.f32.mrb[0].mxu0
      %1772 = vmatprep.mubr.bf16.mxu0 0
      %1773 = vmatmul.mubr.bf16.gmra.mrb[0].mxu0 %v1603
      %v1774 = vpop.f32.mrb[0].mxu0
      %v1775 = vadd.f32 0.0, %v1774
      %v1776 = vpop.f32.mrb[0].mxu0
      %v1777 = vpop.f32.mrb[0].mxu0
      %v1778 = vadd.f32 0.0, %v1777
      %v1779 = vpop.f32.mrb[0].mxu0
      %1780 = vmatprep.mubr.bf16.mxu0 0
      %1781 = vmatmul.mubr.bf16.gmra.mrb[0].mxu0 %v1604
      %v1782 = vpop.f32.mrb[0].mxu0
      %v1783 = vadd.f32 0.0, %v1782
      %v1784 = vpop.f32.mrb[0].mxu0
      %v1785 = vpop.f32.mrb[0].mxu0
      %v1786 = vadd.f32 0.0, %v1785
      %v1787 = vpop.f32.mrb[0].mxu0
      %1788 = vmatprep.mubr.bf16.mxu0 0
      %1789 = vmatmul.mubr.bf16.gmra.mrb[0].mxu0 %v1605
      %v1790 = vpop.f32.mrb[0].mxu0
      %v1791 = vadd.f32 0.0, %v1790
      %v1792 = vpop.f32.mrb[0].mxu0
      %v1793 = vpop.f32.mrb[0].mxu0
      %v1794 = vadd.f32 0.0, %v1793
      %v1795 = vpop.f32.mrb[0].mxu0
      %1796 = vmatprep.mubr.bf16.mxu0 0
      %1797 = vmatmul.mubr.bf16.gmra.mrb[0].mxu0 %v1606
      %v1798 = vpop.f32.mrb[0].mxu0
      %v1799 = vadd.f32 0.0, %v1798
      %v1800 = vpop.f32.mrb[0].mxu0
      %v1801 = vpop.f32.mrb[0].mxu0
      %v1802 = vadd.f32 0.0, %v1801
      %v1803 = vpop.f32.mrb[0].mxu0
      %1804 = vmatprep.mubr.bf16.mxu0 0
      %1805 = vmatmul.mubr.bf16.gmra.mrb[0].mxu0 %v1607
      %v1806 = vpop.f32.mrb[0].mxu0
      %v1807 = vadd.f32 0.0, %v1806
      %v1808 = vpop.f32.mrb[0].mxu0
      %v1809 = vpop.f32.mrb[0].mxu0
      %v1810 = vadd.f32 0.0, %v1809
      %v1811 = vpop.f32.mrb[0].mxu0
      %1812 = vmatprep.mubr.bf16.mxu0 0
      %1813 = vmatmul.mubr.bf16.gmra.mrb[0].mxu0 %v1608
      %v1814 = vpop.f32.mrb[0].mxu0
      %v1815 = vadd.f32 0.0, %v1814
      %v1816 = vpop.f32.mrb[0].mxu0
      %v1817 = vpop.f32.mrb[0].mxu0
      %v1818 = vadd.f32 0.0, %v1817
      %v1819 = vpop.f32.mrb[0].mxu0
      %1820 = vmatprep.mubr.bf16.mxu0 0
      %1821 = vmatmul.mubr.bf16.gmra.mrb[0].mxu0 %v1609
      %v1822 = vpop.f32.mrb[0].mxu0
      %v1823 = vadd.f32 0.0, %v1822
      %v1824 = vpop.f32.mrb[0].mxu0
      %v1825 = vpop.f32.mrb[0].mxu0
      %v1826 = vadd.f32 0.0, %v1825
      %v1827 = vpop.f32.mrb[0].mxu0
      %1828 = vmatprep.mubr.bf16.mxu0 0
      %1829 = vmatmul.mubr.bf16.gmra.mrb[0].mxu0 %v1610
      %v1830 = vpop.f32.mrb[0].mxu0
      %v1831 = vadd.f32 0.0, %v1830
      %v1832 = vpop.f32.mrb[0].mxu0
      %v1833 = vpop.f32.mrb[0].mxu0
      %v1834 = vadd.f32 0.0, %v1833
      %v1835 = vpop.f32.mrb[0].mxu0
      %1836 = vdwg.mxu0
      %v1837 = vadd.f32 %v1499, %v1711
      %v1838 = vadd.f32 %v1500, %v1714
      %v1839 = vadd.f32 %v1501, %v1719
      %v1840 = vadd.f32 %v1502, %v1722
      %v1841 = vadd.f32 %v1503, %v1727
      %v1842 = vadd.f32 %v1504, %v1730
      %v1843 = vadd.f32 %v1505, %v1735
      %v1844 = vadd.f32 %v1506, %v1738
      %v1845 = vadd.f32 %v1507, %v1743
      %v1846 = vadd.f32 %v1508, %v1746
      %v1847 = vadd.f32 %v1509, %v1751
      %v1848 = vadd.f32 %v1510, %v1754
      %v1849 = vadd.f32 %v1511, %v1759
      %v1850 = vadd.f32 %v1512, %v1762
      %v1851 = vadd.f32 %v1513, %v1767
      %v1852 = vadd.f32 %v1514, %v1770
      %v1853 = vadd.f32 %v1515, %v1775
      %v1854 = vadd.f32 %v1516, %v1778
      %v1855 = vadd.f32 %v1517, %v1783
      %v1856 = vadd.f32 %v1518, %v1786
      %v1857 = vadd.f32 %v1519, %v1791
      %v1858 = vadd.f32 %v1520, %v1794
      %v1859 = vadd.f32 %v1521, %v1799
      %v1860 = vadd.f32 %v1522, %v1802
      %v1861 = vadd.f32 %v1523, %v1807
      %v1862 = vadd.f32 %v1524, %v1810
      %v1863 = vadd.f32 %v1525, %v1815
      %v1864 = vadd.f32 %v1526, %v1818
      %v1865 = vadd.f32 %v1527, %v1823
      %v1866 = vadd.f32 %v1528, %v1826
      %v1867 = vadd.f32 %v1529, %v1831
      %v1868 = vadd.f32 %v1530, %v1834
      %v1869 = vld [vmem:[%s217 + $0x11] sm:$0xff]
      %v1870 = vld [vmem:[%s217 + $0x19] sm:$0xff]
      %v1871 = vld [vmem:[%s217 + $0x21] sm:$0xff]
      %v1872 = vld [vmem:[%s217 + $0x29] sm:$0xff]
      %v1873 = vld [vmem:[%s217 + $0x31] sm:$0xff]
      %v1874 = vld [vmem:[%s217 + $0x39] sm:$0xff]
      %v1875 = vld [vmem:[%s217 + $0x41] sm:$0xff]
      %v1876 = vld [vmem:[%s217 + $0x49] sm:$0xff]
      %v1877 = vld [vmem:[%s217 + $0x51] sm:$0xff]
      %v1878 = vld [vmem:[%s217 + $0x59] sm:$0xff]
      %v1879 = vld [vmem:[%s217 + $0x61] sm:$0xff]
      %v1880 = vld [vmem:[%s217 + $0x69] sm:$0xff]
      %v1881 = vld [vmem:[%s217 + $0x71] sm:$0xff]
      %v1882 = vld [vmem:[%s217 + $0x79] sm:$0xff]
      %v1883 = vld [vmem:[%s217 + $0x81] sm:$0xff]
      %v1884 = vld [vmem:[%s217 + $0x89] sm:$0xff]
      %v1885 = vld [vmem:[%s217 + $0x91] sm:$0xff]
      %v1886 = vld [vmem:[%s217 + $0x99] sm:$0xff]
      %v1887 = vld [vmem:[%s217 + $0xa1] sm:$0xff]
      %v1888 = vld [vmem:[%s217 + $0xa9] sm:$0xff]
      %v1889 = vld [vmem:[%s217 + $0xb1] sm:$0xff]
      %v1890 = vld [vmem:[%s217 + $0xb9] sm:$0xff]
      %v1891 = vld [vmem:[%s217 + $0xc1] sm:$0xff]
      %v1892 = vld [vmem:[%s217 + $0xc9] sm:$0xff]
      %v1893 = vld [vmem:[%s217 + $0xd1] sm:$0xff]
      %v1894 = vld [vmem:[%s217 + $0xd9] sm:$0xff]
      %v1895 = vld [vmem:[%s217 + $0xe1] sm:$0xff]
      %v1896 = vld [vmem:[%s217 + $0xe9] sm:$0xff]
      %v1897 = vld [vmem:[%s217 + $0xf1] sm:$0xff]
      %v1898 = vld [vmem:[%s217 + $0xf9] sm:$0xff]
      %v1899 = vld [vmem:[%s217 + $0x101] sm:$0xff]
      %v1900 = vld [vmem:[%s217 + $0x109] sm:$0xff]
      %v1901 = vpack.c.bf16 %v1870, %v1869
      %v1902 = vpack.c.bf16 %v1872, %v1871
      %v1903 = vpack.c.bf16 %v1874, %v1873
      %v1904 = vpack.c.bf16 %v1876, %v1875
      %v1905 = vpack.c.bf16 %v1878, %v1877
      %v1906 = vpack.c.bf16 %v1880, %v1879
      %v1907 = vpack.c.bf16 %v1882, %v1881
      %v1908 = vpack.c.bf16 %v1884, %v1883
      %v1909 = vpack.c.bf16 %v1886, %v1885
      %v1910 = vpack.c.bf16 %v1888, %v1887
      %v1911 = vpack.c.bf16 %v1890, %v1889
      %v1912 = vpack.c.bf16 %v1892, %v1891
      %v1913 = vpack.c.bf16 %v1894, %v1893
      %v1914 = vpack.c.bf16 %v1896, %v1895
      %v1915 = vpack.c.bf16 %v1898, %v1897
      %v1916 = vpack.c.bf16 %v1900, %v1899
      %s1917 = scalar_lea.vmem %s3, 256
      %v1918 = vld [vmem:[%s1917] sm:$0xf]
      %v1919 = vld [vmem:[%s1917 + $0x4] sm:$0xf]
      %v1920 = vld [vmem:[%s1917 + $0x8] sm:$0xf]
      %v1921 = vld [vmem:[%s1917 + $0xc] sm:$0xf]
      %v1922 = vld [vmem:[%s1917 + $0x10] sm:$0xf]
      %v1923 = vld [vmem:[%s1917 + $0x14] sm:$0xf]
      %v1924 = vld [vmem:[%s1917 + $0x18] sm:$0xf]
      %v1925 = vld [vmem:[%s1917 + $0x1c] sm:$0xf]
      %v1926 = vld [vmem:[%s1917 + $0x20] sm:$0xf]
      %v1927 = vld [vmem:[%s1917 + $0x24] sm:$0xf]
      %v1928 = vld [vmem:[%s1917 + $0x28] sm:$0xf]
      %v1929 = vld [vmem:[%s1917 + $0x2c] sm:$0xf]
      %v1930 = vld [vmem:[%s1917 + $0x30] sm:$0xf]
      %v1931 = vld [vmem:[%s1917 + $0x34] sm:$0xf]
      %v1932 = vld [vmem:[%s1917 + $0x38] sm:$0xf]
      %v1933 = vld [vmem:[%s1917 + $0x3c] sm:$0xf]
      %v1950 = vunpack.c.l.b16 %v1918
      %v1951 = vunpack.c.l.b16 %v1919
      %v1952 = vunpack.c.l.b16 %v1920
      %v1953 = vunpack.c.l.b16 %v1921
      %v1954 = vunpack.c.l.b16 %v1922
      %v1955 = vunpack.c.l.b16 %v1923
      %v1956 = vunpack.c.l.b16 %v1924
      %v1957 = vunpack.c.l.b16 %v1925
      %v1958 = vunpack.c.l.b16 %v1926
      %v1959 = vunpack.c.l.b16 %v1927
      %v1960 = vunpack.c.l.b16 %v1928
      %v1961 = vunpack.c.l.b16 %v1929
      %v1962 = vunpack.c.l.b16 %v1930
      %v1963 = vunpack.c.l.b16 %v1931
      %v1964 = vunpack.c.l.b16 %v1932
      %v1965 = vunpack.c.l.b16 %v1933
      %v1966 = vpack.c.b16 %v1951, %v1950
      %v1967 = vpack.c.b16 %v1953, %v1952
      %v1968 = vpack.c.b16 %v1955, %v1954
      %v1969 = vpack.c.b16 %v1957, %v1956
      %v1970 = vpack.c.b16 %v1959, %v1958
      %v1971 = vpack.c.b16 %v1961, %v1960
      %v1972 = vpack.c.b16 %v1963, %v1962
      %v1973 = vpack.c.b16 %v1965, %v1964
      %1982 = vmatprep.subr.bf16.mxu0 0
      %1983 = vmatpush1.bf16.msra.mxu0 %v1966
      %1984 = vmatprep.subr.bf16.mxu0 0
      %1985 = vmatpush1.bf16.msra.mxu0 %v1967
      %1986 = vmatprep.subr.bf16.mxu0 0
      %1987 = vmatpush1.bf16.msra.mxu0 %v1968
      %1988 = vmatprep.subr.bf16.mxu0 0
      %1989 = vmatpush1.bf16.msra.mxu0 %v1969
      %1990 = vmatprep.subr.bf16.mxu0 0
      %1991 = vmatpush1.bf16.msra.mxu0 %v1970
      %1992 = vmatprep.subr.bf16.mxu0 0
      %1993 = vmatpush1.bf16.msra.mxu0 %v1971
      %1994 = vmatprep.subr.bf16.mxu0 0
      %1995 = vmatpush1.bf16.msra.mxu0 %v1972
      %1996 = vmatprep.subr.bf16.mxu0 0
      %1997 = vmatpush1.bf16.msra.mxu0 %v1973
      %1998 = vmatprep.subr.bf16.mxu0 0
      %1999 = vmatpush1.bf16.msra.mxu0 0
      %2000 = vmatprep.subr.bf16.mxu0 0
      %2001 = vmatpush1.bf16.msra.mxu0 0
      %2002 = vmatprep.subr.bf16.mxu0 0
      %2003 = vmatpush1.bf16.msra.mxu0 0
      %2004 = vmatprep.subr.bf16.mxu0 0
      %2005 = vmatpush1.bf16.msra.mxu0 0
      %2006 = vmatprep.subr.bf16.mxu0 0
      %2007 = vmatpush1.bf16.msra.mxu0 0
      %2008 = vmatprep.subr.bf16.mxu0 0
      %2009 = vmatpush1.bf16.msra.mxu0 0
      %2010 = vmatprep.subr.bf16.mxu0 0
      %2011 = vmatpush1.bf16.msra.mxu0 0
      %2012 = vmatprep.subr.bf16.mxu0 0
      %2013 = vmatpush1.bf16.msra.mxu0 0
      %2014 = vmatprep.mubr.bf16.mxu0 0
      %2015 = vmatmul.mubr.bf16.gmra.mrb[0].mxu0 %v1901
      %v2016 = vpop.f32.mrb[0].mxu0
      %v2017 = vadd.f32 0.0, %v2016
      %v2018 = vpop.f32.mrb[0].mxu0
      %v2019 = vpop.f32.mrb[0].mxu0
      %v2020 = vadd.f32 0.0, %v2019
      %v2021 = vpop.f32.mrb[0].mxu0
      %2022 = vmatprep.mubr.bf16.mxu0 0
      %2023 = vmatmul.mubr.bf16.gmra.mrb[0].mxu0 %v1902
      %v2024 = vpop.f32.mrb[0].mxu0
      %v2025 = vadd.f32 0.0, %v2024
      %v2026 = vpop.f32.mrb[0].mxu0
      %v2027 = vpop.f32.mrb[0].mxu0
      %v2028 = vadd.f32 0.0, %v2027
      %v2029 = vpop.f32.mrb[0].mxu0
      %2030 = vmatprep.mubr.bf16.mxu0 0
      %2031 = vmatmul.mubr.bf16.gmra.mrb[0].mxu0 %v1903
      %v2032 = vpop.f32.mrb[0].mxu0
      %v2033 = vadd.f32 0.0, %v2032
      %v2034 = vpop.f32.mrb[0].mxu0
      %v2035 = vpop.f32.mrb[0].mxu0
      %v2036 = vadd.f32 0.0, %v2035
      %v2037 = vpop.f32.mrb[0].mxu0
      %2038 = vmatprep.mubr.bf16.mxu0 0
      %2039 = vmatmul.mubr.bf16.gmra.mrb[0].mxu0 %v1904
      %v2040 = vpop.f32.mrb[0].mxu0
      %v2041 = vadd.f32 0.0, %v2040
      %v2042 = vpop.f32.mrb[0].mxu0
      %v2043 = vpop.f32.mrb[0].mxu0
      %v2044 = vadd.f32 0.0, %v2043
      %v2045 = vpop.f32.mrb[0].mxu0
      %2046 = vmatprep.mubr.bf16.mxu0 0
      %2047 = vmatmul.mubr.bf16.gmra.mrb[0].mxu0 %v1905
      %v2048 = vpop.f32.mrb[0].mxu0
      %v2049 = vadd.f32 0.0, %v2048
      %v2050 = vpop.f32.mrb[0].mxu0
      %v2051 = vpop.f32.mrb[0].mxu0
      %v2052 = vadd.f32 0.0, %v2051
      %v2053 = vpop.f32.mrb[0].mxu0
      %2054 = vmatprep.mubr.bf16.mxu0 0
      %2055 = vmatmul.mubr.bf16.gmra.mrb[0].mxu0 %v1906
      %v2056 = vpop.f32.mrb[0].mxu0
      %v2057 = vadd.f32 0.0, %v2056
      %v2058 = vpop.f32.mrb[0].mxu0
      %v2059 = vpop.f32.mrb[0].mxu0
      %v2060 = vadd.f32 0.0, %v2059
      %v2061 = vpop.f32.mrb[0].mxu0
      %2062 = vmatprep.mubr.bf16.mxu0 0
      %2063 = vmatmul.mubr.bf16.gmra.mrb[0].mxu0 %v1907
      %v2064 = vpop.f32.mrb[0].mxu0
      %v2065 = vadd.f32 0.0, %v2064
      %v2066 = vpop.f32.mrb[0].mxu0
      %v2067 = vpop.f32.mrb[0].mxu0
      %v2068 = vadd.f32 0.0, %v2067
      %v2069 = vpop.f32.mrb[0].mxu0
      %2070 = vmatprep.mubr.bf16.mxu0 0
      %2071 = vmatmul.mubr.bf16.gmra.mrb[0].mxu0 %v1908
      %v2072 = vpop.f32.mrb[0].mxu0
      %v2073 = vadd.f32 0.0, %v2072
      %v2074 = vpop.f32.mrb[0].mxu0
      %v2075 = vpop.f32.mrb[0].mxu0
      %v2076 = vadd.f32 0.0, %v2075
      %v2077 = vpop.f32.mrb[0].mxu0
      %2078 = vmatprep.mubr.bf16.mxu0 0
      %2079 = vmatmul.mubr.bf16.gmra.mrb[0].mxu0 %v1909
      %v2080 = vpop.f32.mrb[0].mxu0
      %v2081 = vadd.f32 0.0, %v2080
      %v2082 = vpop.f32.mrb[0].mxu0
      %v2083 = vpop.f32.mrb[0].mxu0
      %v2084 = vadd.f32 0.0, %v2083
      %v2085 = vpop.f32.mrb[0].mxu0
      %2086 = vmatprep.mubr.bf16.mxu0 0
      %2087 = vmatmul.mubr.bf16.gmra.mrb[0].mxu0 %v1910
      %v2088 = vpop.f32.mrb[0].mxu0
      %v2089 = vadd.f32 0.0, %v2088
      %v2090 = vpop.f32.mrb[0].mxu0
      %v2091 = vpop.f32.mrb[0].mxu0
      %v2092 = vadd.f32 0.0, %v2091
      %v2093 = vpop.f32.mrb[0].mxu0
      %2094 = vmatprep.mubr.bf16.mxu0 0
      %2095 = vmatmul.mubr.bf16.gmra.mrb[0].mxu0 %v1911
      %v2096 = vpop.f32.mrb[0].mxu0
      %v2097 = vadd.f32 0.0, %v2096
      %v2098 = vpop.f32.mrb[0].mxu0
      %v2099 = vpop.f32.mrb[0].mxu0
      %v2100 = vadd.f32 0.0, %v2099
      %v2101 = vpop.f32.mrb[0].mxu0
      %2102 = vmatprep.mubr.bf16.mxu0 0
      %2103 = vmatmul.mubr.bf16.gmra.mrb[0].mxu0 %v1912
      %v2104 = vpop.f32.mrb[0].mxu0
      %v2105 = vadd.f32 0.0, %v2104
      %v2106 = vpop.f32.mrb[0].mxu0
      %v2107 = vpop.f32.mrb[0].mxu0
      %v2108 = vadd.f32 0.0, %v2107
      %v2109 = vpop.f32.mrb[0].mxu0
      %2110 = vmatprep.mubr.bf16.mxu0 0
      %2111 = vmatmul.mubr.bf16.gmra.mrb[0].mxu0 %v1913
      %v2112 = vpop.f32.mrb[0].mxu0
      %v2113 = vadd.f32 0.0, %v2112
      %v2114 = vpop.f32.mrb[0].mxu0
      %v2115 = vpop.f32.mrb[0].mxu0
      %v2116 = vadd.f32 0.0, %v2115
      %v2117 = vpop.f32.mrb[0].mxu0
      %2118 = vmatprep.mubr.bf16.mxu0 0
      %2119 = vmatmul.mubr.bf16.gmra.mrb[0].mxu0 %v1914
      %v2120 = vpop.f32.mrb[0].mxu0
      %v2121 = vadd.f32 0.0, %v2120
      %v2122 = vpop.f32.mrb[0].mxu0
      %v2123 = vpop.f32.mrb[0].mxu0
      %v2124 = vadd.f32 0.0, %v2123
      %v2125 = vpop.f32.mrb[0].mxu0
      %2126 = vmatprep.mubr.bf16.mxu0 0
      %2127 = vmatmul.mubr.bf16.gmra.mrb[0].mxu0 %v1915
      %v2128 = vpop.f32.mrb[0].mxu0
      %v2129 = vadd.f32 0.0, %v2128
      %v2130 = vpop.f32.mrb[0].mxu0
      %v2131 = vpop.f32.mrb[0].mxu0
      %v2132 = vadd.f32 0.0, %v2131
      %v2133 = vpop.f32.mrb[0].mxu0
      %2134 = vmatprep.mubr.bf16.mxu0 0
      %2135 = vmatmul.mubr.bf16.gmra.mrb[0].mxu0 %v1916
      %v2136 = vpop.f32.mrb[0].mxu0
      %v2137 = vadd.f32 0.0, %v2136
      %v2138 = vpop.f32.mrb[0].mxu0
      %v2139 = vpop.f32.mrb[0].mxu0
      %v2140 = vadd.f32 0.0, %v2139
      %v2141 = vpop.f32.mrb[0].mxu0
      %2142 = vdwg.mxu0
      %v2143 = vadd.f32 %v1837, %v2017
      %v2144 = vadd.f32 %v1838, %v2020
      %v2145 = vadd.f32 %v1839, %v2025
      %v2146 = vadd.f32 %v1840, %v2028
      %v2147 = vadd.f32 %v1841, %v2033
      %v2148 = vadd.f32 %v1842, %v2036
      %v2149 = vadd.f32 %v1843, %v2041
      %v2150 = vadd.f32 %v1844, %v2044
      %v2151 = vadd.f32 %v1845, %v2049
      %v2152 = vadd.f32 %v1846, %v2052
      %v2153 = vadd.f32 %v1847, %v2057
      %v2154 = vadd.f32 %v1848, %v2060
      %v2155 = vadd.f32 %v1849, %v2065
      %v2156 = vadd.f32 %v1850, %v2068
      %v2157 = vadd.f32 %v1851, %v2073
      %v2158 = vadd.f32 %v1852, %v2076
      %v2159 = vadd.f32 %v1853, %v2081
      %v2160 = vadd.f32 %v1854, %v2084
      %v2161 = vadd.f32 %v1855, %v2089
      %v2162 = vadd.f32 %v1856, %v2092
      %v2163 = vadd.f32 %v1857, %v2097
      %v2164 = vadd.f32 %v1858, %v2100
      %v2165 = vadd.f32 %v1859, %v2105
      %v2166 = vadd.f32 %v1860, %v2108
      %v2167 = vadd.f32 %v1861, %v2113
      %v2168 = vadd.f32 %v1862, %v2116
      %v2169 = vadd.f32 %v1863, %v2121
      %v2170 = vadd.f32 %v1864, %v2124
      %v2171 = vadd.f32 %v1865, %v2129
      %v2172 = vadd.f32 %v1866, %v2132
      %v2173 = vadd.f32 %v1867, %v2137
      %v2174 = vadd.f32 %v1868, %v2140
      %v2175 = vld [vmem:[%s217 + $0x12] sm:$0xff]
      %v2176 = vld [vmem:[%s217 + $0x1a] sm:$0xff]
      %v2177 = vld [vmem:[%s217 + $0x22] sm:$0xff]
      %v2178 = vld [vmem:[%s217 + $0x2a] sm:$0xff]
      %v2179 = vld [vmem:[%s217 + $0x32] sm:$0xff]
      %v2180 = vld [vmem:[%s217 + $0x3a] sm:$0xff]
      %v2181 = vld [vmem:[%s217 + $0x42] sm:$0xff]
      %v2182 = vld [vmem:[%s217 + $0x4a] sm:$0xff]
      %v2183 = vld [vmem:[%s217 + $0x52] sm:$0xff]
      %v2184 = vld [vmem:[%s217 + $0x5a] sm:$0xff]
      %v2185 = vld [vmem:[%s217 + $0x62] sm:$0xff]
      %v2186 = vld [vmem:[%s217 + $0x6a] sm:$0xff]
      %v2187 = vld [vmem:[%s217 + $0x72] sm:$0xff]
      %v2188 = vld [vmem:[%s217 + $0x7a] sm:$0xff]
      %v2189 = vld [vmem:[%s217 + $0x82] sm:$0xff]
      %v2190 = vld [vmem:[%s217 + $0x8a] sm:$0xff]
      %v2191 = vld [vmem:[%s217 + $0x92] sm:$0xff]
      %v2192 = vld [vmem:[%s217 + $0x9a] sm:$0xff]
      %v2193 = vld [vmem:[%s217 + $0xa2] sm:$0xff]
      %v2194 = vld [vmem:[%s217 + $0xaa] sm:$0xff]
      %v2195 = vld [vmem:[%s217 + $0xb2] sm:$0xff]
      %v2196 = vld [vmem:[%s217 + $0xba] sm:$0xff]
      %v2197 = vld [vmem:[%s217 + $0xc2] sm:$0xff]
      %v2198 = vld [vmem:[%s217 + $0xca] sm:$0xff]
      %v2199 = vld [vmem:[%s217 + $0xd2] sm:$0xff]
      %v2200 = vld [vmem:[%s217 + $0xda] sm:$0xff]
      %v2201 = vld [vmem:[%s217 + $0xe2] sm:$0xff]
      %v2202 = vld [vmem:[%s217 + $0xea] sm:$0xff]
      %v2203 = vld [vmem:[%s217 + $0xf2] sm:$0xff]
      %v2204 = vld [vmem:[%s217 + $0xfa] sm:$0xff]
      %v2205 = vld [vmem:[%s217 + $0x102] sm:$0xff]
      %v2206 = vld [vmem:[%s217 + $0x10a] sm:$0xff]
      %v2207 = vmul.f32 %v2175, %v1068
      %v2208 = vmul.f32 %v2176, %v1073
      %v2209 = vmul.f32 %v2177, %v1078
      %v2210 = vmul.f32 %v2178, %v1083
      %v2211 = vmul.f32 %v2179, %v1088
      %v2212 = vmul.f32 %v2180, %v1093
      %v2213 = vmul.f32 %v2181, %v1098
      %v2214 = vmul.f32 %v2182, %v1103
      %v2215 = vmul.f32 %v2183, %v1108
      %v2216 = vmul.f32 %v2184, %v1113
      %v2217 = vmul.f32 %v2185, %v1118
      %v2218 = vmul.f32 %v2186, %v1123
      %v2219 = vmul.f32 %v2187, %v1128
      %v2220 = vmul.f32 %v2188, %v1133
      %v2221 = vmul.f32 %v2189, %v1138
      %v2222 = vmul.f32 %v2190, %v1143
      %v2223 = vmul.f32 %v2191, %v1148
      %v2224 = vmul.f32 %v2192, %v1153
      %v2225 = vmul.f32 %v2193, %v1158
      %v2226 = vmul.f32 %v2194, %v1163
      %v2227 = vmul.f32 %v2195, %v1168
      %v2228 = vmul.f32 %v2196, %v1173
      %v2229 = vmul.f32 %v2197, %v1178
      %v2230 = vmul.f32 %v2198, %v1183
      %v2231 = vmul.f32 %v2199, %v1188
      %v2232 = vmul.f32 %v2200, %v1193
      %v2233 = vmul.f32 %v2201, %v1198
      %v2234 = vmul.f32 %v2202, %v1203
      %v2235 = vmul.f32 %v2203, %v1208
      %v2236 = vmul.f32 %v2204, %v1213
      %v2237 = vmul.f32 %v2205, %v1218
      %v2238 = vmul.f32 %v2206, %v1223
      %v2239 = vpack.c.bf16 %v2208, %v2207
      %v2240 = vpack.c.bf16 %v2210, %v2209
      %v2241 = vpack.c.bf16 %v2212, %v2211
      %v2242 = vpack.c.bf16 %v2214, %v2213
      %v2243 = vpack.c.bf16 %v2216, %v2215
      %v2244 = vpack.c.bf16 %v2218, %v2217
      %v2245 = vpack.c.bf16 %v2220, %v2219
      %v2246 = vpack.c.bf16 %v2222, %v2221
      %v2247 = vpack.c.bf16 %v2224, %v2223
      %v2248 = vpack.c.bf16 %v2226, %v2225
      %v2249 = vpack.c.bf16 %v2228, %v2227
      %v2250 = vpack.c.bf16 %v2230, %v2229
      %v2251 = vpack.c.bf16 %v2232, %v2231
      %v2252 = vpack.c.bf16 %v2234, %v2233
      %v2253 = vpack.c.bf16 %v2236, %v2235
      %v2254 = vpack.c.bf16 %v2238, %v2237
      %s2255 = scalar_lea.vmem %s3, 320
      %v2256 = vld [vmem:[%s2255] sm:$0xf]
      %v2257 = vld [vmem:[%s2255 + $0x4] sm:$0xf]
      %v2258 = vld [vmem:[%s2255 + $0x8] sm:$0xf]
      %v2259 = vld [vmem:[%s2255 + $0xc] sm:$0xf]
      %v2260 = vld [vmem:[%s2255 + $0x10] sm:$0xf]
      %v2261 = vld [vmem:[%s2255 + $0x14] sm:$0xf]
      %v2262 = vld [vmem:[%s2255 + $0x18] sm:$0xf]
      %v2263 = vld [vmem:[%s2255 + $0x1c] sm:$0xf]
      %v2264 = vld [vmem:[%s2255 + $0x20] sm:$0xf]
      %v2265 = vld [vmem:[%s2255 + $0x24] sm:$0xf]
      %v2266 = vld [vmem:[%s2255 + $0x28] sm:$0xf]
      %v2267 = vld [vmem:[%s2255 + $0x2c] sm:$0xf]
      %v2268 = vld [vmem:[%s2255 + $0x30] sm:$0xf]
      %v2269 = vld [vmem:[%s2255 + $0x34] sm:$0xf]
      %v2270 = vld [vmem:[%s2255 + $0x38] sm:$0xf]
      %v2271 = vld [vmem:[%s2255 + $0x3c] sm:$0xf]
      %v2288 = vunpack.c.l.b16 %v2256
      %v2289 = vunpack.c.l.b16 %v2257
      %v2290 = vunpack.c.l.b16 %v2258
      %v2291 = vunpack.c.l.b16 %v2259
      %v2292 = vunpack.c.l.b16 %v2260
      %v2293 = vunpack.c.l.b16 %v2261
      %v2294 = vunpack.c.l.b16 %v2262
      %v2295 = vunpack.c.l.b16 %v2263
      %v2296 = vunpack.c.l.b16 %v2264
      %v2297 = vunpack.c.l.b16 %v2265
      %v2298 = vunpack.c.l.b16 %v2266
      %v2299 = vunpack.c.l.b16 %v2267
      %v2300 = vunpack.c.l.b16 %v2268
      %v2301 = vunpack.c.l.b16 %v2269
      %v2302 = vunpack.c.l.b16 %v2270
      %v2303 = vunpack.c.l.b16 %v2271
      %v2304 = vpack.c.b16 %v2289, %v2288
      %v2305 = vpack.c.b16 %v2291, %v2290
      %v2306 = vpack.c.b16 %v2293, %v2292
      %v2307 = vpack.c.b16 %v2295, %v2294
      %v2308 = vpack.c.b16 %v2297, %v2296
      %v2309 = vpack.c.b16 %v2299, %v2298
      %v2310 = vpack.c.b16 %v2301, %v2300
      %v2311 = vpack.c.b16 %v2303, %v2302
      %2320 = vmatprep.subr.bf16.mxu0 0
      %2321 = vmatpush1.bf16.msra.mxu0 %v2304
      %2322 = vmatprep.subr.bf16.mxu0 0
      %2323 = vmatpush1.bf16.msra.mxu0 %v2305
      %2324 = vmatprep.subr.bf16.mxu0 0
      %2325 = vmatpush1.bf16.msra.mxu0 %v2306
      %2326 = vmatprep.subr.bf16.mxu0 0
      %2327 = vmatpush1.bf16.msra.mxu0 %v2307
      %2328 = vmatprep.subr.bf16.mxu0 0
      %2329 = vmatpush1.bf16.msra.mxu0 %v2308
      %2330 = vmatprep.subr.bf16.mxu0 0
      %2331 = vmatpush1.bf16.msra.mxu0 %v2309
      %2332 = vmatprep.subr.bf16.mxu0 0
      %2333 = vmatpush1.bf16.msra.mxu0 %v2310
      %2334 = vmatprep.subr.bf16.mxu0 0
      %2335 = vmatpush1.bf16.msra.mxu0 %v2311
      %2336 = vmatprep.subr.bf16.mxu0 0
      %2337 = vmatpush1.bf16.msra.mxu0 0
      %2338 = vmatprep.subr.bf16.mxu0 0
      %2339 = vmatpush1.bf16.msra.mxu0 0
      %2340 = vmatprep.subr.bf16.mxu0 0
      %2341 = vmatpush1.bf16.msra.mxu0 0
      %2342 = vmatprep.subr.bf16.mxu0 0
      %2343 = vmatpush1.bf16.msra.mxu0 0
      %2344 = vmatprep.subr.bf16.mxu0 0
      %2345 = vmatpush1.bf16.msra.mxu0 0
      %2346 = vmatprep.subr.bf16.mxu0 0
      %2347 = vmatpush1.bf16.msra.mxu0 0
      %2348 = vmatprep.subr.bf16.mxu0 0
      %2349 = vmatpush1.bf16.msra.mxu0 0
      %2350 = vmatprep.subr.bf16.mxu0 0
      %2351 = vmatpush1.bf16.msra.mxu0 0
      %2352 = vmatprep.mubr.bf16.mxu0 0
      %2353 = vmatmul.mubr.bf16.gmra.mrb[0].mxu0 %v2239
      %v2354 = vpop.f32.mrb[0].mxu0
      %v2355 = vadd.f32 0.0, %v2354
      %v2356 = vpop.f32.mrb[0].mxu0
      %v2357 = vpop.f32.mrb[0].mxu0
      %v2358 = vadd.f32 0.0, %v2357
      %v2359 = vpop.f32.mrb[0].mxu0
      %2360 = vmatprep.mubr.bf16.mxu0 0
      %2361 = vmatmul.mubr.bf16.gmra.mrb[0].mxu0 %v2240
      %v2362 = vpop.f32.mrb[0].mxu0
      %v2363 = vadd.f32 0.0, %v2362
      %v2364 = vpop.f32.mrb[0].mxu0
      %v2365 = vpop.f32.mrb[0].mxu0
      %v2366 = vadd.f32 0.0, %v2365
      %v2367 = vpop.f32.mrb[0].mxu0
      %2368 = vmatprep.mubr.bf16.mxu0 0
      %2369 = vmatmul.mubr.bf16.gmra.mrb[0].mxu0 %v2241
      %v2370 = vpop.f32.mrb[0].mxu0
      %v2371 = vadd.f32 0.0, %v2370
      %v2372 = vpop.f32.mrb[0].mxu0
      %v2373 = vpop.f32.mrb[0].mxu0
      %v2374 = vadd.f32 0.0, %v2373
      %v2375 = vpop.f32.mrb[0].mxu0
      %2376 = vmatprep.mubr.bf16.mxu0 0
      %2377 = vmatmul.mubr.bf16.gmra.mrb[0].mxu0 %v2242
      %v2378 = vpop.f32.mrb[0].mxu0
      %v2379 = vadd.f32 0.0, %v2378
      %v2380 = vpop.f32.mrb[0].mxu0
      %v2381 = vpop.f32.mrb[0].mxu0
      %v2382 = vadd.f32 0.0, %v2381
      %v2383 = vpop.f32.mrb[0].mxu0
      %2384 = vmatprep.mubr.bf16.mxu0 0
      %2385 = vmatmul.mubr.bf16.gmra.mrb[0].mxu0 %v2243
      %v2386 = vpop.f32.mrb[0].mxu0
      %v2387 = vadd.f32 0.0, %v2386
      %v2388 = vpop.f32.mrb[0].mxu0
      %v2389 = vpop.f32.mrb[0].mxu0
      %v2390 = vadd.f32 0.0, %v2389
      %v2391 = vpop.f32.mrb[0].mxu0
      %2392 = vmatprep.mubr.bf16.mxu0 0
      %2393 = vmatmul.mubr.bf16.gmra.mrb[0].mxu0 %v2244
      %v2394 = vpop.f32.mrb[0].mxu0
      %v2395 = vadd.f32 0.0, %v2394
      %v2396 = vpop.f32.mrb[0].mxu0
      %v2397 = vpop.f32.mrb[0].mxu0
      %v2398 = vadd.f32 0.0, %v2397
      %v2399 = vpop.f32.mrb[0].mxu0
      %2400 = vmatprep.mubr.bf16.mxu0 0
      %2401 = vmatmul.mubr.bf16.gmra.mrb[0].mxu0 %v2245
      %v2402 = vpop.f32.mrb[0].mxu0
      %v2403 = vadd.f32 0.0, %v2402
      %v2404 = vpop.f32.mrb[0].mxu0
      %v2405 = vpop.f32.mrb[0].mxu0
      %v2406 = vadd.f32 0.0, %v2405
      %v2407 = vpop.f32.mrb[0].mxu0
      %2408 = vmatprep.mubr.bf16.mxu0 0
      %2409 = vmatmul.mubr.bf16.gmra.mrb[0].mxu0 %v2246
      %v2410 = vpop.f32.mrb[0].mxu0
      %v2411 = vadd.f32 0.0, %v2410
      %v2412 = vpop.f32.mrb[0].mxu0
      %v2413 = vpop.f32.mrb[0].mxu0
      %v2414 = vadd.f32 0.0, %v2413
      %v2415 = vpop.f32.mrb[0].mxu0
      %2416 = vmatprep.mubr.bf16.mxu0 0
      %2417 = vmatmul.mubr.bf16.gmra.mrb[0].mxu0 %v2247
      %v2418 = vpop.f32.mrb[0].mxu0
      %v2419 = vadd.f32 0.0, %v2418
      %v2420 = vpop.f32.mrb[0].mxu0
      %v2421 = vpop.f32.mrb[0].mxu0
      %v2422 = vadd.f32 0.0, %v2421
      %v2423 = vpop.f32.mrb[0].mxu0
      %2424 = vmatprep.mubr.bf16.mxu0 0
      %2425 = vmatmul.mubr.bf16.gmra.mrb[0].mxu0 %v2248
      %v2426 = vpop.f32.mrb[0].mxu0
      %v2427 = vadd.f32 0.0, %v2426
      %v2428 = vpop.f32.mrb[0].mxu0
      %v2429 = vpop.f32.mrb[0].mxu0
      %v2430 = vadd.f32 0.0, %v2429
      %v2431 = vpop.f32.mrb[0].mxu0
      %2432 = vmatprep.mubr.bf16.mxu0 0
      %2433 = vmatmul.mubr.bf16.gmra.mrb[0].mxu0 %v2249
      %v2434 = vpop.f32.mrb[0].mxu0
      %v2435 = vadd.f32 0.0, %v2434
      %v2436 = vpop.f32.mrb[0].mxu0
      %v2437 = vpop.f32.mrb[0].mxu0
      %v2438 = vadd.f32 0.0, %v2437
      %v2439 = vpop.f32.mrb[0].mxu0
      %2440 = vmatprep.mubr.bf16.mxu0 0
      %2441 = vmatmul.mubr.bf16.gmra.mrb[0].mxu0 %v2250
      %v2442 = vpop.f32.mrb[0].mxu0
      %v2443 = vadd.f32 0.0, %v2442
      %v2444 = vpop.f32.mrb[0].mxu0
      %v2445 = vpop.f32.mrb[0].mxu0
      %v2446 = vadd.f32 0.0, %v2445
      %v2447 = vpop.f32.mrb[0].mxu0
      %2448 = vmatprep.mubr.bf16.mxu0 0
      %2449 = vmatmul.mubr.bf16.gmra.mrb[0].mxu0 %v2251
      %v2450 = vpop.f32.mrb[0].mxu0
      %v2451 = vadd.f32 0.0, %v2450
      %v2452 = vpop.f32.mrb[0].mxu0
      %v2453 = vpop.f32.mrb[0].mxu0
      %v2454 = vadd.f32 0.0, %v2453
      %v2455 = vpop.f32.mrb[0].mxu0
      %2456 = vmatprep.mubr.bf16.mxu0 0
      %2457 = vmatmul.mubr.bf16.gmra.mrb[0].mxu0 %v2252
      %v2458 = vpop.f32.mrb[0].mxu0
      %v2459 = vadd.f32 0.0, %v2458
      %v2460 = vpop.f32.mrb[0].mxu0
      %v2461 = vpop.f32.mrb[0].mxu0
      %v2462 = vadd.f32 0.0, %v2461
      %v2463 = vpop.f32.mrb[0].mxu0
      %2464 = vmatprep.mubr.bf16.mxu0 0
      %2465 = vmatmul.mubr.bf16.gmra.mrb[0].mxu0 %v2253
      %v2466 = vpop.f32.mrb[0].mxu0
      %v2467 = vadd.f32 0.0, %v2466
      %v2468 = vpop.f32.mrb[0].mxu0
      %v2469 = vpop.f32.mrb[0].mxu0
      %v2470 = vadd.f32 0.0, %v2469
      %v2471 = vpop.f32.mrb[0].mxu0
      %2472 = vmatprep.mubr.bf16.mxu0 0
      %2473 = vmatmul.mubr.bf16.gmra.mrb[0].mxu0 %v2254
      %v2474 = vpop.f32.mrb[0].mxu0
      %v2475 = vadd.f32 0.0, %v2474
      %v2476 = vpop.f32.mrb[0].mxu0
      %v2477 = vpop.f32.mrb[0].mxu0
      %v2478 = vadd.f32 0.0, %v2477
      %v2479 = vpop.f32.mrb[0].mxu0
      %2480 = vdwg.mxu0
      %v2481 = vadd.f32 %v2143, %v2355
      %v2482 = vadd.f32 %v2144, %v2358
      %v2483 = vadd.f32 %v2145, %v2363
      %v2484 = vadd.f32 %v2146, %v2366
      %v2485 = vadd.f32 %v2147, %v2371
      %v2486 = vadd.f32 %v2148, %v2374
      %v2487 = vadd.f32 %v2149, %v2379
      %v2488 = vadd.f32 %v2150, %v2382
      %v2489 = vadd.f32 %v2151, %v2387
      %v2490 = vadd.f32 %v2152, %v2390
      %v2491 = vadd.f32 %v2153, %v2395
      %v2492 = vadd.f32 %v2154, %v2398
      %v2493 = vadd.f32 %v2155, %v2403
      %v2494 = vadd.f32 %v2156, %v2406
      %v2495 = vadd.f32 %v2157, %v2411
      %v2496 = vadd.f32 %v2158, %v2414
      %v2497 = vadd.f32 %v2159, %v2419
      %v2498 = vadd.f32 %v2160, %v2422
      %v2499 = vadd.f32 %v2161, %v2427
      %v2500 = vadd.f32 %v2162, %v2430
      %v2501 = vadd.f32 %v2163, %v2435
      %v2502 = vadd.f32 %v2164, %v2438
      %v2503 = vadd.f32 %v2165, %v2443
      %v2504 = vadd.f32 %v2166, %v2446
      %v2505 = vadd.f32 %v2167, %v2451
      %v2506 = vadd.f32 %v2168, %v2454
      %v2507 = vadd.f32 %v2169, %v2459
      %v2508 = vadd.f32 %v2170, %v2462
      %v2509 = vadd.f32 %v2171, %v2467
      %v2510 = vadd.f32 %v2172, %v2470
      %v2511 = vadd.f32 %v2173, %v2475
      %v2512 = vadd.f32 %v2174, %v2478
      %v2513 = vld [vmem:[%s217 + $0x20] sm:$0xff]
      %v2514 = vld [vmem:[%s217 + $0x28] sm:$0xff]
      %v2515 = vld [vmem:[%s217 + $0x30] sm:$0xff]
      %v2516 = vld [vmem:[%s217 + $0x38] sm:$0xff]
      %v2517 = vld [vmem:[%s217 + $0x40] sm:$0xff]
      %v2518 = vld [vmem:[%s217 + $0x48] sm:$0xff]
      %v2519 = vld [vmem:[%s217 + $0x50] sm:$0xff]
      %v2520 = vld [vmem:[%s217 + $0x58] sm:$0xff]
      %v2521 = vld [vmem:[%s217 + $0x60] sm:$0xff]
      %v2522 = vld [vmem:[%s217 + $0x68] sm:$0xff]
      %v2523 = vld [vmem:[%s217 + $0x70] sm:$0xff]
      %v2524 = vld [vmem:[%s217 + $0x78] sm:$0xff]
      %v2525 = vld [vmem:[%s217 + $0x80] sm:$0xff]
      %v2526 = vld [vmem:[%s217 + $0x88] sm:$0xff]
      %v2527 = vld [vmem:[%s217 + $0x90] sm:$0xff]
      %v2528 = vld [vmem:[%s217 + $0x98] sm:$0xff]
      %v2529 = vld [vmem:[%s217 + $0xa0] sm:$0xff]
      %v2530 = vld [vmem:[%s217 + $0xa8] sm:$0xff]
      %v2531 = vld [vmem:[%s217 + $0xb0] sm:$0xff]
      %v2532 = vld [vmem:[%s217 + $0xb8] sm:$0xff]
      %v2533 = vld [vmem:[%s217 + $0xc0] sm:$0xff]
      %v2534 = vld [vmem:[%s217 + $0xc8] sm:$0xff]
      %v2535 = vld [vmem:[%s217 + $0xd0] sm:$0xff]
      %v2536 = vld [vmem:[%s217 + $0xd8] sm:$0xff]
      %v2537 = vld [vmem:[%s217 + $0xe0] sm:$0xff]
      %v2538 = vld [vmem:[%s217 + $0xe8] sm:$0xff]
      %v2539 = vld [vmem:[%s217 + $0xf0] sm:$0xff]
      %v2540 = vld [vmem:[%s217 + $0xf8] sm:$0xff]
      %v2541 = vld [vmem:[%s217 + $0x100] sm:$0xff]
      %v2542 = vld [vmem:[%s217 + $0x108] sm:$0xff]
      %v2543 = vld [vmem:[%s217 + $0x110] sm:$0xff]
      %v2544 = vld [vmem:[%s217 + $0x118] sm:$0xff]
      %v2545 = vmul.f32 %v2513, %v297
      %v2546 = vmul.f32 %v2514, %v302
      %v2547 = vmul.f32 %v2515, %v307
      %v2548 = vmul.f32 %v2516, %v312
      %v2549 = vmul.f32 %v2517, %v317
      %v2550 = vmul.f32 %v2518, %v322
      %v2551 = vmul.f32 %v2519, %v327
      %v2552 = vmul.f32 %v2520, %v332
      %v2553 = vmul.f32 %v2521, %v337
      %v2554 = vmul.f32 %v2522, %v342
      %v2555 = vmul.f32 %v2523, %v347
      %v2556 = vmul.f32 %v2524, %v352
      %v2557 = vmul.f32 %v2525, %v357
      %v2558 = vmul.f32 %v2526, %v362
      %v2559 = vmul.f32 %v2527, %v367
      %v2560 = vmul.f32 %v2528, %v372
      %v2561 = vmul.f32 %v2529, %v377
      %v2562 = vmul.f32 %v2530, %v382
      %v2563 = vmul.f32 %v2531, %v387
      %v2564 = vmul.f32 %v2532, %v392
      %v2565 = vmul.f32 %v2533, %v397
      %v2566 = vmul.f32 %v2534, %v402
      %v2567 = vmul.f32 %v2535, %v407
      %v2568 = vmul.f32 %v2536, %v412
      %v2569 = vmul.f32 %v2537, %v417
      %v2570 = vmul.f32 %v2538, %v422
      %v2571 = vmul.f32 %v2539, %v427
      %v2572 = vmul.f32 %v2540, %v432
      %v2573 = vmul.f32 %v2541, %v437
      %v2574 = vmul.f32 %v2542, %v442
      %v2575 = vmul.f32 %v2543, %v447
      %v2576 = vmul.f32 %v2544, %v452
      %v2577 = vpack.c.bf16 %v2546, %v2545
      %v2578 = vpack.c.bf16 %v2548, %v2547
      %v2579 = vpack.c.bf16 %v2550, %v2549
      %v2580 = vpack.c.bf16 %v2552, %v2551
      %v2581 = vpack.c.bf16 %v2554, %v2553
      %v2582 = vpack.c.bf16 %v2556, %v2555
      %v2583 = vpack.c.bf16 %v2558, %v2557
      %v2584 = vpack.c.bf16 %v2560, %v2559
      %v2585 = vpack.c.bf16 %v2562, %v2561
      %v2586 = vpack.c.bf16 %v2564, %v2563
      %v2587 = vpack.c.bf16 %v2566, %v2565
      %v2588 = vpack.c.bf16 %v2568, %v2567
      %v2589 = vpack.c.bf16 %v2570, %v2569
      %v2590 = vpack.c.bf16 %v2572, %v2571
      %v2591 = vpack.c.bf16 %v2574, %v2573
      %v2592 = vpack.c.bf16 %v2576, %v2575
      %s2593 = scalar_lea.vmem %s3, 384
      %v2594 = vld [vmem:[%s2593] sm:$0xf]
      %v2595 = vld [vmem:[%s2593 + $0x4] sm:$0xf]
      %v2596 = vld [vmem:[%s2593 + $0x8] sm:$0xf]
      %v2597 = vld [vmem:[%s2593 + $0xc] sm:$0xf]
      %v2598 = vld [vmem:[%s2593 + $0x10] sm:$0xf]
      %v2599 = vld [vmem:[%s2593 + $0x14] sm:$0xf]
      %v2600 = vld [vmem:[%s2593 + $0x18] sm:$0xf]
      %v2601 = vld [vmem:[%s2593 + $0x1c] sm:$0xf]
      %v2602 = vld [vmem:[%s2593 + $0x20] sm:$0xf]
      %v2603 = vld [vmem:[%s2593 + $0x24] sm:$0xf]
      %v2604 = vld [vmem:[%s2593 + $0x28] sm:$0xf]
      %v2605 = vld [vmem:[%s2593 + $0x2c] sm:$0xf]
      %v2606 = vld [vmem:[%s2593 + $0x30] sm:$0xf]
      %v2607 = vld [vmem:[%s2593 + $0x34] sm:$0xf]
      %v2608 = vld [vmem:[%s2593 + $0x38] sm:$0xf]
      %v2609 = vld [vmem:[%s2593 + $0x3c] sm:$0xf]
      %v2626 = vunpack.c.l.b16 %v2594
      %v2627 = vunpack.c.l.b16 %v2595
      %v2628 = vunpack.c.l.b16 %v2596
      %v2629 = vunpack.c.l.b16 %v2597
      %v2630 = vunpack.c.l.b16 %v2598
      %v2631 = vunpack.c.l.b16 %v2599
      %v2632 = vunpack.c.l.b16 %v2600
      %v2633 = vunpack.c.l.b16 %v2601
      %v2634 = vunpack.c.l.b16 %v2602
      %v2635 = vunpack.c.l.b16 %v2603
      %v2636 = vunpack.c.l.b16 %v2604
      %v2637 = vunpack.c.l.b16 %v2605
      %v2638 = vunpack.c.l.b16 %v2606
      %v2639 = vunpack.c.l.b16 %v2607
      %v2640 = vunpack.c.l.b16 %v2608
      %v2641 = vunpack.c.l.b16 %v2609
      %v2642 = vpack.c.b16 %v2627, %v2626
      %v2643 = vpack.c.b16 %v2629, %v2628
      %v2644 = vpack.c.b16 %v2631, %v2630
      %v2645 = vpack.c.b16 %v2633, %v2632
      %v2646 = vpack.c.b16 %v2635, %v2634
      %v2647 = vpack.c.b16 %v2637, %v2636
      %v2648 = vpack.c.b16 %v2639, %v2638
      %v2649 = vpack.c.b16 %v2641, %v2640
      %2658 = vmatprep.subr.bf16.mxu0 0
      %2659 = vmatpush1.bf16.msra.mxu0 %v2642
      %2660 = vmatprep.subr.bf16.mxu0 0
      %2661 = vmatpush1.bf16.msra.mxu0 %v2643
      %2662 = vmatprep.subr.bf16.mxu0 0
      %2663 = vmatpush1.bf16.msra.mxu0 %v2644
      %2664 = vmatprep.subr.bf16.mxu0 0
      %2665 = vmatpush1.bf16.msra.mxu0 %v2645
      %2666 = vmatprep.subr.bf16.mxu0 0
      %2667 = vmatpush1.bf16.msra.mxu0 %v2646
      %2668 = vmatprep.subr.bf16.mxu0 0
      %2669 = vmatpush1.bf16.msra.mxu0 %v2647
      %2670 = vmatprep.subr.bf16.mxu0 0
      %2671 = vmatpush1.bf16.msra.mxu0 %v2648
      %2672 = vmatprep.subr.bf16.mxu0 0
      %2673 = vmatpush1.bf16.msra.mxu0 %v2649
      %2674 = vmatprep.subr.bf16.mxu0 0
      %2675 = vmatpush1.bf16.msra.mxu0 0
      %2676 = vmatprep.subr.bf16.mxu0 0
      %2677 = vmatpush1.bf16.msra.mxu0 0
      %2678 = vmatprep.subr.bf16.mxu0 0
      %2679 = vmatpush1.bf16.msra.mxu0 0
      %2680 = vmatprep.subr.bf16.mxu0 0
      %2681 = vmatpush1.bf16.msra.mxu0 0
      %2682 = vmatprep.subr.bf16.mxu0 0
      %2683 = vmatpush1.bf16.msra.mxu0 0
      %2684 = vmatprep.subr.bf16.mxu0 0
      %2685 = vmatpush1.bf16.msra.mxu0 0
      %2686 = vmatprep.subr.bf16.mxu0 0
      %2687 = vmatpush1.bf16.msra.mxu0 0
      %2688 = vmatprep.subr.bf16.mxu0 0
      %2689 = vmatpush1.bf16.msra.mxu0 0
      %2690 = vmatprep.mubr.bf16.mxu0 0
      %2691 = vmatmul.mubr.bf16.gmra.mrb[0].mxu0 %v2577
      %v2692 = vpop.f32.mrb[0].mxu0
      %v2693 = vadd.f32 0.0, %v2692
      %v2694 = vpop.f32.mrb[0].mxu0
      %v2695 = vpop.f32.mrb[0].mxu0
      %v2696 = vadd.f32 0.0, %v2695
      %v2697 = vpop.f32.mrb[0].mxu0
      %2698 = vmatprep.mubr.bf16.mxu0 0
      %2699 = vmatmul.mubr.bf16.gmra.mrb[0].mxu0 %v2578
      %v2700 = vpop.f32.mrb[0].mxu0
      %v2701 = vadd.f32 0.0, %v2700
      %v2702 = vpop.f32.mrb[0].mxu0
      %v2703 = vpop.f32.mrb[0].mxu0
      %v2704 = vadd.f32 0.0, %v2703
      %v2705 = vpop.f32.mrb[0].mxu0
      %2706 = vmatprep.mubr.bf16.mxu0 0
      %2707 = vmatmul.mubr.bf16.gmra.mrb[0].mxu0 %v2579
      %v2708 = vpop.f32.mrb[0].mxu0
      %v2709 = vadd.f32 0.0, %v2708
      %v2710 = vpop.f32.mrb[0].mxu0
      %v2711 = vpop.f32.mrb[0].mxu0
      %v2712 = vadd.f32 0.0, %v2711
      %v2713 = vpop.f32.mrb[0].mxu0
      %2714 = vmatprep.mubr.bf16.mxu0 0
      %2715 = vmatmul.mubr.bf16.gmra.mrb[0].mxu0 %v2580
      %v2716 = vpop.f32.mrb[0].mxu0
      %v2717 = vadd.f32 0.0, %v2716
      %v2718 = vpop.f32.mrb[0].mxu0
      %v2719 = vpop.f32.mrb[0].mxu0
      %v2720 = vadd.f32 0.0, %v2719
      %v2721 = vpop.f32.mrb[0].mxu0
      %2722 = vmatprep.mubr.bf16.mxu0 0
      %2723 = vmatmul.mubr.bf16.gmra.mrb[0].mxu0 %v2581
      %v2724 = vpop.f32.mrb[0].mxu0
      %v2725 = vadd.f32 0.0, %v2724
      %v2726 = vpop.f32.mrb[0].mxu0
      %v2727 = vpop.f32.mrb[0].mxu0
      %v2728 = vadd.f32 0.0, %v2727
      %v2729 = vpop.f32.mrb[0].mxu0
      %2730 = vmatprep.mubr.bf16.mxu0 0
      %2731 = vmatmul.mubr.bf16.gmra.mrb[0].mxu0 %v2582
      %v2732 = vpop.f32.mrb[0].mxu0
      %v2733 = vadd.f32 0.0, %v2732
      %v2734 = vpop.f32.mrb[0].mxu0
      %v2735 = vpop.f32.mrb[0].mxu0
      %v2736 = vadd.f32 0.0, %v2735
      %v2737 = vpop.f32.mrb[0].mxu0
      %2738 = vmatprep.mubr.bf16.mxu0 0
      %2739 = vmatmul.mubr.bf16.gmra.mrb[0].mxu0 %v2583
      %v2740 = vpop.f32.mrb[0].mxu0
      %v2741 = vadd.f32 0.0, %v2740
      %v2742 = vpop.f32.mrb[0].mxu0
      %v2743 = vpop.f32.mrb[0].mxu0
      %v2744 = vadd.f32 0.0, %v2743
      %v2745 = vpop.f32.mrb[0].mxu0
      %2746 = vmatprep.mubr.bf16.mxu0 0
      %2747 = vmatmul.mubr.bf16.gmra.mrb[0].mxu0 %v2584
      %v2748 = vpop.f32.mrb[0].mxu0
      %v2749 = vadd.f32 0.0, %v2748
      %v2750 = vpop.f32.mrb[0].mxu0
      %v2751 = vpop.f32.mrb[0].mxu0
      %v2752 = vadd.f32 0.0, %v2751
      %v2753 = vpop.f32.mrb[0].mxu0
      %2754 = vmatprep.mubr.bf16.mxu0 0
      %2755 = vmatmul.mubr.bf16.gmra.mrb[0].mxu0 %v2585
      %v2756 = vpop.f32.mrb[0].mxu0
      %v2757 = vadd.f32 0.0, %v2756
      %v2758 = vpop.f32.mrb[0].mxu0
      %v2759 = vpop.f32.mrb[0].mxu0
      %v2760 = vadd.f32 0.0, %v2759
      %v2761 = vpop.f32.mrb[0].mxu0
      %2762 = vmatprep.mubr.bf16.mxu0 0
      %2763 = vmatmul.mubr.bf16.gmra.mrb[0].mxu0 %v2586
      %v2764 = vpop.f32.mrb[0].mxu0
      %v2765 = vadd.f32 0.0, %v2764
      %v2766 = vpop.f32.mrb[0].mxu0
      %v2767 = vpop.f32.mrb[0].mxu0
      %v2768 = vadd.f32 0.0, %v2767
      %v2769 = vpop.f32.mrb[0].mxu0
      %2770 = vmatprep.mubr.bf16.mxu0 0
      %2771 = vmatmul.mubr.bf16.gmra.mrb[0].mxu0 %v2587
      %v2772 = vpop.f32.mrb[0].mxu0
      %v2773 = vadd.f32 0.0, %v2772
      %v2774 = vpop.f32.mrb[0].mxu0
      %v2775 = vpop.f32.mrb[0].mxu0
      %v2776 = vadd.f32 0.0, %v2775
      %v2777 = vpop.f32.mrb[0].mxu0
      %2778 = vmatprep.mubr.bf16.mxu0 0
      %2779 = vmatmul.mubr.bf16.gmra.mrb[0].mxu0 %v2588
      %v2780 = vpop.f32.mrb[0].mxu0
      %v2781 = vadd.f32 0.0, %v2780
      %v2782 = vpop.f32.mrb[0].mxu0
      %v2783 = vpop.f32.mrb[0].mxu0
      %v2784 = vadd.f32 0.0, %v2783
      %v2785 = vpop.f32.mrb[0].mxu0
      %2786 = vmatprep.mubr.bf16.mxu0 0
      %2787 = vmatmul.mubr.bf16.gmra.mrb[0].mxu0 %v2589
      %v2788 = vpop.f32.mrb[0].mxu0
      %v2789 = vadd.f32 0.0, %v2788
      %v2790 = vpop.f32.mrb[0].mxu0
      %v2791 = vpop.f32.mrb[0].mxu0
      %v2792 = vadd.f32 0.0, %v2791
      %v2793 = vpop.f32.mrb[0].mxu0
      %2794 = vmatprep.mubr.bf16.mxu0 0
      %2795 = vmatmul.mubr.bf16.gmra.mrb[0].mxu0 %v2590
      %v2796 = vpop.f32.mrb[0].mxu0
      %v2797 = vadd.f32 0.0, %v2796
      %v2798 = vpop.f32.mrb[0].mxu0
      %v2799 = vpop.f32.mrb[0].mxu0
      %v2800 = vadd.f32 0.0, %v2799
      %v2801 = vpop.f32.mrb[0].mxu0
      %2802 = vmatprep.mubr.bf16.mxu0 0
      %2803 = vmatmul.mubr.bf16.gmra.mrb[0].mxu0 %v2591
      %v2804 = vpop.f32.mrb[0].mxu0
      %v2805 = vadd.f32 0.0, %v2804
      %v2806 = vpop.f32.mrb[0].mxu0
      %v2807 = vpop.f32.mrb[0].mxu0
      %v2808 = vadd.f32 0.0, %v2807
      %v2809 = vpop.f32.mrb[0].mxu0
      %2810 = vmatprep.mubr.bf16.mxu0 0
      %2811 = vmatmul.mubr.bf16.gmra.mrb[0].mxu0 %v2592
      %v2812 = vpop.f32.mrb[0].mxu0
      %v2813 = vadd.f32 0.0, %v2812
      %v2814 = vpop.f32.mrb[0].mxu0
      %v2815 = vpop.f32.mrb[0].mxu0
      %v2816 = vadd.f32 0.0, %v2815
      %v2817 = vpop.f32.mrb[0].mxu0
      %2818 = vdwg.mxu0
      %v2819 = vadd.f32 %v2481, %v2693
      %v2820 = vadd.f32 %v2482, %v2696
      %v2821 = vadd.f32 %v2483, %v2701
      %v2822 = vadd.f32 %v2484, %v2704
      %v2823 = vadd.f32 %v2485, %v2709
      %v2824 = vadd.f32 %v2486, %v2712
      %v2825 = vadd.f32 %v2487, %v2717
      %v2826 = vadd.f32 %v2488, %v2720
      %v2827 = vadd.f32 %v2489, %v2725
      %v2828 = vadd.f32 %v2490, %v2728
      %v2829 = vadd.f32 %v2491, %v2733
      %v2830 = vadd.f32 %v2492, %v2736
      %v2831 = vadd.f32 %v2493, %v2741
      %v2832 = vadd.f32 %v2494, %v2744
      %v2833 = vadd.f32 %v2495, %v2749
      %v2834 = vadd.f32 %v2496, %v2752
      %v2835 = vadd.f32 %v2497, %v2757
      %v2836 = vadd.f32 %v2498, %v2760
      %v2837 = vadd.f32 %v2499, %v2765
      %v2838 = vadd.f32 %v2500, %v2768
      %v2839 = vadd.f32 %v2501, %v2773
      %v2840 = vadd.f32 %v2502, %v2776
      %v2841 = vadd.f32 %v2503, %v2781
      %v2842 = vadd.f32 %v2504, %v2784
      %v2843 = vadd.f32 %v2505, %v2789
      %v2844 = vadd.f32 %v2506, %v2792
      %v2845 = vadd.f32 %v2507, %v2797
      %v2846 = vadd.f32 %v2508, %v2800
      %v2847 = vadd.f32 %v2509, %v2805
      %v2848 = vadd.f32 %v2510, %v2808
      %v2849 = vadd.f32 %v2511, %v2813
      %v2850 = vadd.f32 %v2512, %v2816
      %v2851 = vld [vmem:[%s217 + $0x21] sm:$0xff]
      %v2852 = vld [vmem:[%s217 + $0x29] sm:$0xff]
      %v2853 = vld [vmem:[%s217 + $0x31] sm:$0xff]
      %v2854 = vld [vmem:[%s217 + $0x39] sm:$0xff]
      %v2855 = vld [vmem:[%s217 + $0x41] sm:$0xff]
      %v2856 = vld [vmem:[%s217 + $0x49] sm:$0xff]
      %v2857 = vld [vmem:[%s217 + $0x51] sm:$0xff]
      %v2858 = vld [vmem:[%s217 + $0x59] sm:$0xff]
      %v2859 = vld [vmem:[%s217 + $0x61] sm:$0xff]
      %v2860 = vld [vmem:[%s217 + $0x69] sm:$0xff]
      %v2861 = vld [vmem:[%s217 + $0x71] sm:$0xff]
      %v2862 = vld [vmem:[%s217 + $0x79] sm:$0xff]
      %v2863 = vld [vmem:[%s217 + $0x81] sm:$0xff]
      %v2864 = vld [vmem:[%s217 + $0x89] sm:$0xff]
      %v2865 = vld [vmem:[%s217 + $0x91] sm:$0xff]
      %v2866 = vld [vmem:[%s217 + $0x99] sm:$0xff]
      %v2867 = vld [vmem:[%s217 + $0xa1] sm:$0xff]
      %v2868 = vld [vmem:[%s217 + $0xa9] sm:$0xff]
      %v2869 = vld [vmem:[%s217 + $0xb1] sm:$0xff]
      %v2870 = vld [vmem:[%s217 + $0xb9] sm:$0xff]
      %v2871 = vld [vmem:[%s217 + $0xc1] sm:$0xff]
      %v2872 = vld [vmem:[%s217 + $0xc9] sm:$0xff]
      %v2873 = vld [vmem:[%s217 + $0xd1] sm:$0xff]
      %v2874 = vld [vmem:[%s217 + $0xd9] sm:$0xff]
      %v2875 = vld [vmem:[%s217 + $0xe1] sm:$0xff]
      %v2876 = vld [vmem:[%s217 + $0xe9] sm:$0xff]
      %v2877 = vld [vmem:[%s217 + $0xf1] sm:$0xff]
      %v2878 = vld [vmem:[%s217 + $0xf9] sm:$0xff]
      %v2879 = vld [vmem:[%s217 + $0x101] sm:$0xff]
      %v2880 = vld [vmem:[%s217 + $0x109] sm:$0xff]
      %v2881 = vld [vmem:[%s217 + $0x111] sm:$0xff]
      %v2882 = vld [vmem:[%s217 + $0x119] sm:$0xff]
      %v2883 = vpack.c.bf16 %v2852, %v2851
      %v2884 = vpack.c.bf16 %v2854, %v2853
      %v2885 = vpack.c.bf16 %v2856, %v2855
      %v2886 = vpack.c.bf16 %v2858, %v2857
      %v2887 = vpack.c.bf16 %v2860, %v2859
      %v2888 = vpack.c.bf16 %v2862, %v2861
      %v2889 = vpack.c.bf16 %v2864, %v2863
      %v2890 = vpack.c.bf16 %v2866, %v2865
      %v2891 = vpack.c.bf16 %v2868, %v2867
      %v2892 = vpack.c.bf16 %v2870, %v2869
      %v2893 = vpack.c.bf16 %v2872, %v2871
      %v2894 = vpack.c.bf16 %v2874, %v2873
      %v2895 = vpack.c.bf16 %v2876, %v2875
      %v2896 = vpack.c.bf16 %v2878, %v2877
      %v2897 = vpack.c.bf16 %v2880, %v2879
      %v2898 = vpack.c.bf16 %v2882, %v2881
      %s2899 = scalar_lea.vmem %s3, 448
      %v2900 = vld [vmem:[%s2899] sm:$0xf]
      %v2901 = vld [vmem:[%s2899 + $0x4] sm:$0xf]
      %v2902 = vld [vmem:[%s2899 + $0x8] sm:$0xf]
      %v2903 = vld [vmem:[%s2899 + $0xc] sm:$0xf]
      %v2904 = vld [vmem:[%s2899 + $0x10] sm:$0xf]
      %v2905 = vld [vmem:[%s2899 + $0x14] sm:$0xf]
      %v2906 = vld [vmem:[%s2899 + $0x18] sm:$0xf]
      %v2907 = vld [vmem:[%s2899 + $0x1c] sm:$0xf]
      %v2908 = vld [vmem:[%s2899 + $0x20] sm:$0xf]
      %v2909 = vld [vmem:[%s2899 + $0x24] sm:$0xf]
      %v2910 = vld [vmem:[%s2899 + $0x28] sm:$0xf]
      %v2911 = vld [vmem:[%s2899 + $0x2c] sm:$0xf]
      %v2912 = vld [vmem:[%s2899 + $0x30] sm:$0xf]
      %v2913 = vld [vmem:[%s2899 + $0x34] sm:$0xf]
      %v2914 = vld [vmem:[%s2899 + $0x38] sm:$0xf]
      %v2915 = vld [vmem:[%s2899 + $0x3c] sm:$0xf]
      %v2932 = vunpack.c.l.b16 %v2900
      %v2933 = vunpack.c.l.b16 %v2901
      %v2934 = vunpack.c.l.b16 %v2902
      %v2935 = vunpack.c.l.b16 %v2903
      %v2936 = vunpack.c.l.b16 %v2904
      %v2937 = vunpack.c.l.b16 %v2905
      %v2938 = vunpack.c.l.b16 %v2906
      %v2939 = vunpack.c.l.b16 %v2907
      %v2940 = vunpack.c.l.b16 %v2908
      %v2941 = vunpack.c.l.b16 %v2909
      %v2942 = vunpack.c.l.b16 %v2910
      %v2943 = vunpack.c.l.b16 %v2911
      %v2944 = vunpack.c.l.b16 %v2912
      %v2945 = vunpack.c.l.b16 %v2913
      %v2946 = vunpack.c.l.b16 %v2914
      %v2947 = vunpack.c.l.b16 %v2915
      %v2948 = vpack.c.b16 %v2933, %v2932
      %v2949 = vpack.c.b16 %v2935, %v2934
      %v2950 = vpack.c.b16 %v2937, %v2936
      %v2951 = vpack.c.b16 %v2939, %v2938
      %v2952 = vpack.c.b16 %v2941, %v2940
      %v2953 = vpack.c.b16 %v2943, %v2942
      %v2954 = vpack.c.b16 %v2945, %v2944
      %v2955 = vpack.c.b16 %v2947, %v2946
      %2964 = vmatprep.subr.bf16.mxu0 0
      %2965 = vmatpush1.bf16.msra.mxu0 %v2948
      %2966 = vmatprep.subr.bf16.mxu0 0
      %2967 = vmatpush1.bf16.msra.mxu0 %v2949
      %2968 = vmatprep.subr.bf16.mxu0 0
      %2969 = vmatpush1.bf16.msra.mxu0 %v2950
      %2970 = vmatprep.subr.bf16.mxu0 0
      %2971 = vmatpush1.bf16.msra.mxu0 %v2951
      %2972 = vmatprep.subr.bf16.mxu0 0
      %2973 = vmatpush1.bf16.msra.mxu0 %v2952
      %2974 = vmatprep.subr.bf16.mxu0 0
      %2975 = vmatpush1.bf16.msra.mxu0 %v2953
      %2976 = vmatprep.subr.bf16.mxu0 0
      %2977 = vmatpush1.bf16.msra.mxu0 %v2954
      %2978 = vmatprep.subr.bf16.mxu0 0
      %2979 = vmatpush1.bf16.msra.mxu0 %v2955
      %2980 = vmatprep.subr.bf16.mxu0 0
      %2981 = vmatpush1.bf16.msra.mxu0 0
      %2982 = vmatprep.subr.bf16.mxu0 0
      %2983 = vmatpush1.bf16.msra.mxu0 0
      %2984 = vmatprep.subr.bf16.mxu0 0
      %2985 = vmatpush1.bf16.msra.mxu0 0
      %2986 = vmatprep.subr.bf16.mxu0 0
      %2987 = vmatpush1.bf16.msra.mxu0 0
      %2988 = vmatprep.subr.bf16.mxu0 0
      %2989 = vmatpush1.bf16.msra.mxu0 0
      %2990 = vmatprep.subr.bf16.mxu0 0
      %2991 = vmatpush1.bf16.msra.mxu0 0
      %2992 = vmatprep.subr.bf16.mxu0 0
      %2993 = vmatpush1.bf16.msra.mxu0 0
      %2994 = vmatprep.subr.bf16.mxu0 0
      %2995 = vmatpush1.bf16.msra.mxu0 0
      %2996 = vmatprep.mubr.bf16.mxu0 0
      %2997 = vmatmul.mubr.bf16.gmra.mrb[0].mxu0 %v2883
      %v2998 = vpop.f32.mrb[0].mxu0
      %v2999 = vadd.f32 0.0, %v2998
      %v3000 = vpop.f32.mrb[0].mxu0
      %v3001 = vpop.f32.mrb[0].mxu0
      %v3002 = vadd.f32 0.0, %v3001
      %v3003 = vpop.f32.mrb[0].mxu0
      %3004 = vmatprep.mubr.bf16.mxu0 0
      %3005 = vmatmul.mubr.bf16.gmra.mrb[0].mxu0 %v2884
      %v3006 = vpop.f32.mrb[0].mxu0
      %v3007 = vadd.f32 0.0, %v3006
      %v3008 = vpop.f32.mrb[0].mxu0
      %v3009 = vpop.f32.mrb[0].mxu0
      %v3010 = vadd.f32 0.0, %v3009
      %v3011 = vpop.f32.mrb[0].mxu0
      %3012 = vmatprep.mubr.bf16.mxu0 0
      %3013 = vmatmul.mubr.bf16.gmra.mrb[0].mxu0 %v2885
      %v3014 = vpop.f32.mrb[0].mxu0
      %v3015 = vadd.f32 0.0, %v3014
      %v3016 = vpop.f32.mrb[0].mxu0
      %v3017 = vpop.f32.mrb[0].mxu0
      %v3018 = vadd.f32 0.0, %v3017
      %v3019 = vpop.f32.mrb[0].mxu0
      %3020 = vmatprep.mubr.bf16.mxu0 0
      %3021 = vmatmul.mubr.bf16.gmra.mrb[0].mxu0 %v2886
      %v3022 = vpop.f32.mrb[0].mxu0
      %v3023 = vadd.f32 0.0, %v3022
      %v3024 = vpop.f32.mrb[0].mxu0
      %v3025 = vpop.f32.mrb[0].mxu0
      %v3026 = vadd.f32 0.0, %v3025
      %v3027 = vpop.f32.mrb[0].mxu0
      %3028 = vmatprep.mubr.bf16.mxu0 0
      %3029 = vmatmul.mubr.bf16.gmra.mrb[0].mxu0 %v2887
      %v3030 = vpop.f32.mrb[0].mxu0
      %v3031 = vadd.f32 0.0, %v3030
      %v3032 = vpop.f32.mrb[0].mxu0
      %v3033 = vpop.f32.mrb[0].mxu0
      %v3034 = vadd.f32 0.0, %v3033
      %v3035 = vpop.f32.mrb[0].mxu0
      %3036 = vmatprep.mubr.bf16.mxu0 0
      %3037 = vmatmul.mubr.bf16.gmra.mrb[0].mxu0 %v2888
      %v3038 = vpop.f32.mrb[0].mxu0
      %v3039 = vadd.f32 0.0, %v3038
      %v3040 = vpop.f32.mrb[0].mxu0
      %v3041 = vpop.f32.mrb[0].mxu0
      %v3042 = vadd.f32 0.0, %v3041
      %v3043 = vpop.f32.mrb[0].mxu0
      %3044 = vmatprep.mubr.bf16.mxu0 0
      %3045 = vmatmul.mubr.bf16.gmra.mrb[0].mxu0 %v2889
      %v3046 = vpop.f32.mrb[0].mxu0
      %v3047 = vadd.f32 0.0, %v3046
      %v3048 = vpop.f32.mrb[0].mxu0
      %v3049 = vpop.f32.mrb[0].mxu0
      %v3050 = vadd.f32 0.0, %v3049
      %v3051 = vpop.f32.mrb[0].mxu0
      %3052 = vmatprep.mubr.bf16.mxu0 0
      %3053 = vmatmul.mubr.bf16.gmra.mrb[0].mxu0 %v2890
      %v3054 = vpop.f32.mrb[0].mxu0
      %v3055 = vadd.f32 0.0, %v3054
      %v3056 = vpop.f32.mrb[0].mxu0
      %v3057 = vpop.f32.mrb[0].mxu0
      %v3058 = vadd.f32 0.0, %v3057
      %v3059 = vpop.f32.mrb[0].mxu0
      %3060 = vmatprep.mubr.bf16.mxu0 0
      %3061 = vmatmul.mubr.bf16.gmra.mrb[0].mxu0 %v2891
      %v3062 = vpop.f32.mrb[0].mxu0
      %v3063 = vadd.f32 0.0, %v3062
      %v3064 = vpop.f32.mrb[0].mxu0
      %v3065 = vpop.f32.mrb[0].mxu0
      %v3066 = vadd.f32 0.0, %v3065
      %v3067 = vpop.f32.mrb[0].mxu0
      %3068 = vmatprep.mubr.bf16.mxu0 0
      %3069 = vmatmul.mubr.bf16.gmra.mrb[0].mxu0 %v2892
      %v3070 = vpop.f32.mrb[0].mxu0
      %v3071 = vadd.f32 0.0, %v3070
      %v3072 = vpop.f32.mrb[0].mxu0
      %v3073 = vpop.f32.mrb[0].mxu0
      %v3074 = vadd.f32 0.0, %v3073
      %v3075 = vpop.f32.mrb[0].mxu0
      %3076 = vmatprep.mubr.bf16.mxu0 0
      %3077 = vmatmul.mubr.bf16.gmra.mrb[0].mxu0 %v2893
      %v3078 = vpop.f32.mrb[0].mxu0
      %v3079 = vadd.f32 0.0, %v3078
      %v3080 = vpop.f32.mrb[0].mxu0
      %v3081 = vpop.f32.mrb[0].mxu0
      %v3082 = vadd.f32 0.0, %v3081
      %v3083 = vpop.f32.mrb[0].mxu0
      %3084 = vmatprep.mubr.bf16.mxu0 0
      %3085 = vmatmul.mubr.bf16.gmra.mrb[0].mxu0 %v2894
      %v3086 = vpop.f32.mrb[0].mxu0
      %v3087 = vadd.f32 0.0, %v3086
      %v3088 = vpop.f32.mrb[0].mxu0
      %v3089 = vpop.f32.mrb[0].mxu0
      %v3090 = vadd.f32 0.0, %v3089
      %v3091 = vpop.f32.mrb[0].mxu0
      %3092 = vmatprep.mubr.bf16.mxu0 0
      %3093 = vmatmul.mubr.bf16.gmra.mrb[0].mxu0 %v2895
      %v3094 = vpop.f32.mrb[0].mxu0
      %v3095 = vadd.f32 0.0, %v3094
      %v3096 = vpop.f32.mrb[0].mxu0
      %v3097 = vpop.f32.mrb[0].mxu0
      %v3098 = vadd.f32 0.0, %v3097
      %v3099 = vpop.f32.mrb[0].mxu0
      %3100 = vmatprep.mubr.bf16.mxu0 0
      %3101 = vmatmul.mubr.bf16.gmra.mrb[0].mxu0 %v2896
      %v3102 = vpop.f32.mrb[0].mxu0
      %v3103 = vadd.f32 0.0, %v3102
      %v3104 = vpop.f32.mrb[0].mxu0
      %v3105 = vpop.f32.mrb[0].mxu0
      %v3106 = vadd.f32 0.0, %v3105
      %v3107 = vpop.f32.mrb[0].mxu0
      %3108 = vmatprep.mubr.bf16.mxu0 0
      %3109 = vmatmul.mubr.bf16.gmra.mrb[0].mxu0 %v2897
      %v3110 = vpop.f32.mrb[0].mxu0
      %v3111 = vadd.f32 0.0, %v3110
      %v3112 = vpop.f32.mrb[0].mxu0
      %v3113 = vpop.f32.mrb[0].mxu0
      %v3114 = vadd.f32 0.0, %v3113
      %v3115 = vpop.f32.mrb[0].mxu0
      %3116 = vmatprep.mubr.bf16.mxu0 0
      %3117 = vmatmul.mubr.bf16.gmra.mrb[0].mxu0 %v2898
      %v3118 = vpop.f32.mrb[0].mxu0
      %v3119 = vadd.f32 0.0, %v3118
      %v3120 = vpop.f32.mrb[0].mxu0
      %v3121 = vpop.f32.mrb[0].mxu0
      %v3122 = vadd.f32 0.0, %v3121
      %v3123 = vpop.f32.mrb[0].mxu0
      %3124 = vdwg.mxu0
      %v3125 = vadd.f32 %v2819, %v2999
      %v3126 = vadd.f32 %v2820, %v3002
      %v3127 = vadd.f32 %v2821, %v3007
      %v3128 = vadd.f32 %v2822, %v3010
      %v3129 = vadd.f32 %v2823, %v3015
      %v3130 = vadd.f32 %v2824, %v3018
      %v3131 = vadd.f32 %v2825, %v3023
      %v3132 = vadd.f32 %v2826, %v3026
      %v3133 = vadd.f32 %v2827, %v3031
      %v3134 = vadd.f32 %v2828, %v3034
      %v3135 = vadd.f32 %v2829, %v3039
      %v3136 = vadd.f32 %v2830, %v3042
      %v3137 = vadd.f32 %v2831, %v3047
      %v3138 = vadd.f32 %v2832, %v3050
      %v3139 = vadd.f32 %v2833, %v3055
      %v3140 = vadd.f32 %v2834, %v3058
      %v3141 = vadd.f32 %v2835, %v3063
      %v3142 = vadd.f32 %v2836, %v3066
      %v3143 = vadd.f32 %v2837, %v3071
      %v3144 = vadd.f32 %v2838, %v3074
      %v3145 = vadd.f32 %v2839, %v3079
      %v3146 = vadd.f32 %v2840, %v3082
      %v3147 = vadd.f32 %v2841, %v3087
      %v3148 = vadd.f32 %v2842, %v3090
      %v3149 = vadd.f32 %v2843, %v3095
      %v3150 = vadd.f32 %v2844, %v3098
      %v3151 = vadd.f32 %v2845, %v3103
      %v3152 = vadd.f32 %v2846, %v3106
      %v3153 = vadd.f32 %v2847, %v3111
      %v3154 = vadd.f32 %v2848, %v3114
      %v3155 = vadd.f32 %v2849, %v3119
      %v3156 = vadd.f32 %v2850, %v3122
      %v3157 = vld [vmem:[%s217 + $0x22] sm:$0xff]
      %v3158 = vld [vmem:[%s217 + $0x2a] sm:$0xff]
      %v3159 = vld [vmem:[%s217 + $0x32] sm:$0xff]
      %v3160 = vld [vmem:[%s217 + $0x3a] sm:$0xff]
      %v3161 = vld [vmem:[%s217 + $0x42] sm:$0xff]
      %v3162 = vld [vmem:[%s217 + $0x4a] sm:$0xff]
      %v3163 = vld [vmem:[%s217 + $0x52] sm:$0xff]
      %v3164 = vld [vmem:[%s217 + $0x5a] sm:$0xff]
      %v3165 = vld [vmem:[%s217 + $0x62] sm:$0xff]
      %v3166 = vld [vmem:[%s217 + $0x6a] sm:$0xff]
      %v3167 = vld [vmem:[%s217 + $0x72] sm:$0xff]
      %v3168 = vld [vmem:[%s217 + $0x7a] sm:$0xff]
      %v3169 = vld [vmem:[%s217 + $0x82] sm:$0xff]
      %v3170 = vld [vmem:[%s217 + $0x8a] sm:$0xff]
      %v3171 = vld [vmem:[%s217 + $0x92] sm:$0xff]
      %v3172 = vld [vmem:[%s217 + $0x9a] sm:$0xff]
      %v3173 = vld [vmem:[%s217 + $0xa2] sm:$0xff]
      %v3174 = vld [vmem:[%s217 + $0xaa] sm:$0xff]
      %v3175 = vld [vmem:[%s217 + $0xb2] sm:$0xff]
      %v3176 = vld [vmem:[%s217 + $0xba] sm:$0xff]
      %v3177 = vld [vmem:[%s217 + $0xc2] sm:$0xff]
      %v3178 = vld [vmem:[%s217 + $0xca] sm:$0xff]
      %v3179 = vld [vmem:[%s217 + $0xd2] sm:$0xff]
      %v3180 = vld [vmem:[%s217 + $0xda] sm:$0xff]
      %v3181 = vld [vmem:[%s217 + $0xe2] sm:$0xff]
      %v3182 = vld [vmem:[%s217 + $0xea] sm:$0xff]
      %v3183 = vld [vmem:[%s217 + $0xf2] sm:$0xff]
      %v3184 = vld [vmem:[%s217 + $0xfa] sm:$0xff]
      %v3185 = vld [vmem:[%s217 + $0x102] sm:$0xff]
      %v3186 = vld [vmem:[%s217 + $0x10a] sm:$0xff]
      %v3187 = vld [vmem:[%s217 + $0x112] sm:$0xff]
      %v3188 = vld [vmem:[%s217 + $0x11a] sm:$0xff]
      %v3189 = vmul.f32 %v3157, %v1068
      %v3190 = vmul.f32 %v3158, %v1073
      %v3191 = vmul.f32 %v3159, %v1078
      %v3192 = vmul.f32 %v3160, %v1083
      %v3193 = vmul.f32 %v3161, %v1088
      %v3194 = vmul.f32 %v3162, %v1093
      %v3195 = vmul.f32 %v3163, %v1098
      %v3196 = vmul.f32 %v3164, %v1103
      %v3197 = vmul.f32 %v3165, %v1108
      %v3198 = vmul.f32 %v3166, %v1113
      %v3199 = vmul.f32 %v3167, %v1118
      %v3200 = vmul.f32 %v3168, %v1123
      %v3201 = vmul.f32 %v3169, %v1128
      %v3202 = vmul.f32 %v3170, %v1133
      %v3203 = vmul.f32 %v3171, %v1138
      %v3204 = vmul.f32 %v3172, %v1143
      %v3205 = vmul.f32 %v3173, %v1148
      %v3206 = vmul.f32 %v3174, %v1153
      %v3207 = vmul.f32 %v3175, %v1158
      %v3208 = vmul.f32 %v3176, %v1163
      %v3209 = vmul.f32 %v3177, %v1168
      %v3210 = vmul.f32 %v3178, %v1173
      %v3211 = vmul.f32 %v3179, %v1178
      %v3212 = vmul.f32 %v3180, %v1183
      %v3213 = vmul.f32 %v3181, %v1188
      %v3214 = vmul.f32 %v3182, %v1193
      %v3215 = vmul.f32 %v3183, %v1198
      %v3216 = vmul.f32 %v3184, %v1203
      %v3217 = vmul.f32 %v3185, %v1208
      %v3218 = vmul.f32 %v3186, %v1213
      %v3219 = vmul.f32 %v3187, %v1218
      %v3220 = vmul.f32 %v3188, %v1223
      %v3221 = vpack.c.bf16 %v3190, %v3189
      %v3222 = vpack.c.bf16 %v3192, %v3191
      %v3223 = vpack.c.bf16 %v3194, %v3193
      %v3224 = vpack.c.bf16 %v3196, %v3195
      %v3225 = vpack.c.bf16 %v3198, %v3197
      %v3226 = vpack.c.bf16 %v3200, %v3199
      %v3227 = vpack.c.bf16 %v3202, %v3201
      %v3228 = vpack.c.bf16 %v3204, %v3203
      %v3229 = vpack.c.bf16 %v3206, %v3205
      %v3230 = vpack.c.bf16 %v3208, %v3207
      %v3231 = vpack.c.bf16 %v3210, %v3209
      %v3232 = vpack.c.bf16 %v3212, %v3211
      %v3233 = vpack.c.bf16 %v3214, %v3213
      %v3234 = vpack.c.bf16 %v3216, %v3215
      %v3235 = vpack.c.bf16 %v3218, %v3217
      %v3236 = vpack.c.bf16 %v3220, %v3219
      %s3237 = scalar_lea.vmem %s3, 512
      %v3238 = vld [vmem:[%s3237] sm:$0xf]
      %v3239 = vld [vmem:[%s3237 + $0x4] sm:$0xf]
      %v3240 = vld [vmem:[%s3237 + $0x8] sm:$0xf]
      %v3241 = vld [vmem:[%s3237 + $0xc] sm:$0xf]
      %v3242 = vld [vmem:[%s3237 + $0x10] sm:$0xf]
      %v3243 = vld [vmem:[%s3237 + $0x14] sm:$0xf]
      %v3244 = vld [vmem:[%s3237 + $0x18] sm:$0xf]
      %v3245 = vld [vmem:[%s3237 + $0x1c] sm:$0xf]
      %v3246 = vld [vmem:[%s3237 + $0x20] sm:$0xf]
      %v3247 = vld [vmem:[%s3237 + $0x24] sm:$0xf]
      %v3248 = vld [vmem:[%s3237 + $0x28] sm:$0xf]
      %v3249 = vld [vmem:[%s3237 + $0x2c] sm:$0xf]
      %v3250 = vld [vmem:[%s3237 + $0x30] sm:$0xf]
      %v3251 = vld [vmem:[%s3237 + $0x34] sm:$0xf]
      %v3252 = vld [vmem:[%s3237 + $0x38] sm:$0xf]
      %v3253 = vld [vmem:[%s3237 + $0x3c] sm:$0xf]
      %v3270 = vunpack.c.l.b16 %v3238
      %v3271 = vunpack.c.l.b16 %v3239
      %v3272 = vunpack.c.l.b16 %v3240
      %v3273 = vunpack.c.l.b16 %v3241
      %v3274 = vunpack.c.l.b16 %v3242
      %v3275 = vunpack.c.l.b16 %v3243
      %v3276 = vunpack.c.l.b16 %v3244
      %v3277 = vunpack.c.l.b16 %v3245
      %v3278 = vunpack.c.l.b16 %v3246
      %v3279 = vunpack.c.l.b16 %v3247
      %v3280 = vunpack.c.l.b16 %v3248
      %v3281 = vunpack.c.l.b16 %v3249
      %v3282 = vunpack.c.l.b16 %v3250
      %v3283 = vunpack.c.l.b16 %v3251
      %v3284 = vunpack.c.l.b16 %v3252
      %v3285 = vunpack.c.l.b16 %v3253
      %v3286 = vpack.c.b16 %v3271, %v3270
      %v3287 = vpack.c.b16 %v3273, %v3272
      %v3288 = vpack.c.b16 %v3275, %v3274
      %v3289 = vpack.c.b16 %v3277, %v3276
      %v3290 = vpack.c.b16 %v3279, %v3278
      %v3291 = vpack.c.b16 %v3281, %v3280
      %v3292 = vpack.c.b16 %v3283, %v3282
      %v3293 = vpack.c.b16 %v3285, %v3284
      %3302 = vmatprep.subr.bf16.mxu0 0
      %3303 = vmatpush1.bf16.msra.mxu0 %v3286
      %3304 = vmatprep.subr.bf16.mxu0 0
      %3305 = vmatpush1.bf16.msra.mxu0 %v3287
      %3306 = vmatprep.subr.bf16.mxu0 0
      %3307 = vmatpush1.bf16.msra.mxu0 %v3288
      %3308 = vmatprep.subr.bf16.mxu0 0
      %3309 = vmatpush1.bf16.msra.mxu0 %v3289
      %3310 = vmatprep.subr.bf16.mxu0 0
      %3311 = vmatpush1.bf16.msra.mxu0 %v3290
      %3312 = vmatprep.subr.bf16.mxu0 0
      %3313 = vmatpush1.bf16.msra.mxu0 %v3291
      %3314 = vmatprep.subr.bf16.mxu0 0
      %3315 = vmatpush1.bf16.msra.mxu0 %v3292
      %3316 = vmatprep.subr.bf16.mxu0 0
      %3317 = vmatpush1.bf16.msra.mxu0 %v3293
      %3318 = vmatprep.subr.bf16.mxu0 0
      %3319 = vmatpush1.bf16.msra.mxu0 0
      %3320 = vmatprep.subr.bf16.mxu0 0
      %3321 = vmatpush1.bf16.msra.mxu0 0
      %3322 = vmatprep.subr.bf16.mxu0 0
      %3323 = vmatpush1.bf16.msra.mxu0 0
      %3324 = vmatprep.subr.bf16.mxu0 0
      %3325 = vmatpush1.bf16.msra.mxu0 0
      %3326 = vmatprep.subr.bf16.mxu0 0
      %3327 = vmatpush1.bf16.msra.mxu0 0
      %3328 = vmatprep.subr.bf16.mxu0 0
      %3329 = vmatpush1.bf16.msra.mxu0 0
      %3330 = vmatprep.subr.bf16.mxu0 0
      %3331 = vmatpush1.bf16.msra.mxu0 0
      %3332 = vmatprep.subr.bf16.mxu0 0
      %3333 = vmatpush1.bf16.msra.mxu0 0
      %3334 = vmatprep.mubr.bf16.mxu0 0
      %3335 = vmatmul.mubr.bf16.gmra.mrb[0].mxu0 %v3221
      %v3336 = vpop.f32.mrb[0].mxu0
      %v3337 = vadd.f32 0.0, %v3336
      %v3338 = vpop.f32.mrb[0].mxu0
      %v3339 = vpop.f32.mrb[0].mxu0
      %v3340 = vadd.f32 0.0, %v3339
      %v3341 = vpop.f32.mrb[0].mxu0
      %3342 = vmatprep.mubr.bf16.mxu0 0
      %3343 = vmatmul.mubr.bf16.gmra.mrb[0].mxu0 %v3222
      %v3344 = vpop.f32.mrb[0].mxu0
      %v3345 = vadd.f32 0.0, %v3344
      %v3346 = vpop.f32.mrb[0].mxu0
      %v3347 = vpop.f32.mrb[0].mxu0
      %v3348 = vadd.f32 0.0, %v3347
      %v3349 = vpop.f32.mrb[0].mxu0
      %3350 = vmatprep.mubr.bf16.mxu0 0
      %3351 = vmatmul.mubr.bf16.gmra.mrb[0].mxu0 %v3223
      %v3352 = vpop.f32.mrb[0].mxu0
      %v3353 = vadd.f32 0.0, %v3352
      %v3354 = vpop.f32.mrb[0].mxu0
      %v3355 = vpop.f32.mrb[0].mxu0
      %v3356 = vadd.f32 0.0, %v3355
      %v3357 = vpop.f32.mrb[0].mxu0
      %3358 = vmatprep.mubr.bf16.mxu0 0
      %3359 = vmatmul.mubr.bf16.gmra.mrb[0].mxu0 %v3224
      %v3360 = vpop.f32.mrb[0].mxu0
      %v3361 = vadd.f32 0.0, %v3360
      %v3362 = vpop.f32.mrb[0].mxu0
      %v3363 = vpop.f32.mrb[0].mxu0
      %v3364 = vadd.f32 0.0, %v3363
      %v3365 = vpop.f32.mrb[0].mxu0
      %3366 = vmatprep.mubr.bf16.mxu0 0
      %3367 = vmatmul.mubr.bf16.gmra.mrb[0].mxu0 %v3225
      %v3368 = vpop.f32.mrb[0].mxu0
      %v3369 = vadd.f32 0.0, %v3368
      %v3370 = vpop.f32.mrb[0].mxu0
      %v3371 = vpop.f32.mrb[0].mxu0
      %v3372 = vadd.f32 0.0, %v3371
      %v3373 = vpop.f32.mrb[0].mxu0
      %3374 = vmatprep.mubr.bf16.mxu0 0
      %3375 = vmatmul.mubr.bf16.gmra.mrb[0].mxu0 %v3226
      %v3376 = vpop.f32.mrb[0].mxu0
      %v3377 = vadd.f32 0.0, %v3376
      %v3378 = vpop.f32.mrb[0].mxu0
      %v3379 = vpop.f32.mrb[0].mxu0
      %v3380 = vadd.f32 0.0, %v3379
      %v3381 = vpop.f32.mrb[0].mxu0
      %3382 = vmatprep.mubr.bf16.mxu0 0
      %3383 = vmatmul.mubr.bf16.gmra.mrb[0].mxu0 %v3227
      %v3384 = vpop.f32.mrb[0].mxu0
      %v3385 = vadd.f32 0.0, %v3384
      %v3386 = vpop.f32.mrb[0].mxu0
      %v3387 = vpop.f32.mrb[0].mxu0
      %v3388 = vadd.f32 0.0, %v3387
      %v3389 = vpop.f32.mrb[0].mxu0
      %3390 = vmatprep.mubr.bf16.mxu0 0
      %3391 = vmatmul.mubr.bf16.gmra.mrb[0].mxu0 %v3228
      %v3392 = vpop.f32.mrb[0].mxu0
      %v3393 = vadd.f32 0.0, %v3392
      %v3394 = vpop.f32.mrb[0].mxu0
      %v3395 = vpop.f32.mrb[0].mxu0
      %v3396 = vadd.f32 0.0, %v3395
      %v3397 = vpop.f32.mrb[0].mxu0
      %3398 = vmatprep.mubr.bf16.mxu0 0
      %3399 = vmatmul.mubr.bf16.gmra.mrb[0].mxu0 %v3229
      %v3400 = vpop.f32.mrb[0].mxu0
      %v3401 = vadd.f32 0.0, %v3400
      %v3402 = vpop.f32.mrb[0].mxu0
      %v3403 = vpop.f32.mrb[0].mxu0
      %v3404 = vadd.f32 0.0, %v3403
      %v3405 = vpop.f32.mrb[0].mxu0
      %3406 = vmatprep.mubr.bf16.mxu0 0
      %3407 = vmatmul.mubr.bf16.gmra.mrb[0].mxu0 %v3230
      %v3408 = vpop.f32.mrb[0].mxu0
      %v3409 = vadd.f32 0.0, %v3408
      %v3410 = vpop.f32.mrb[0].mxu0
      %v3411 = vpop.f32.mrb[0].mxu0
      %v3412 = vadd.f32 0.0, %v3411
      %v3413 = vpop.f32.mrb[0].mxu0
      %3414 = vmatprep.mubr.bf16.mxu0 0
      %3415 = vmatmul.mubr.bf16.gmra.mrb[0].mxu0 %v3231
      %v3416 = vpop.f32.mrb[0].mxu0
      %v3417 = vadd.f32 0.0, %v3416
      %v3418 = vpop.f32.mrb[0].mxu0
      %v3419 = vpop.f32.mrb[0].mxu0
      %v3420 = vadd.f32 0.0, %v3419
      %v3421 = vpop.f32.mrb[0].mxu0
      %3422 = vmatprep.mubr.bf16.mxu0 0
      %3423 = vmatmul.mubr.bf16.gmra.mrb[0].mxu0 %v3232
      %v3424 = vpop.f32.mrb[0].mxu0
      %v3425 = vadd.f32 0.0, %v3424
      %v3426 = vpop.f32.mrb[0].mxu0
      %v3427 = vpop.f32.mrb[0].mxu0
      %v3428 = vadd.f32 0.0, %v3427
      %v3429 = vpop.f32.mrb[0].mxu0
      %3430 = vmatprep.mubr.bf16.mxu0 0
      %3431 = vmatmul.mubr.bf16.gmra.mrb[0].mxu0 %v3233
      %v3432 = vpop.f32.mrb[0].mxu0
      %v3433 = vadd.f32 0.0, %v3432
      %v3434 = vpop.f32.mrb[0].mxu0
      %v3435 = vpop.f32.mrb[0].mxu0
      %v3436 = vadd.f32 0.0, %v3435
      %v3437 = vpop.f32.mrb[0].mxu0
      %3438 = vmatprep.mubr.bf16.mxu0 0
      %3439 = vmatmul.mubr.bf16.gmra.mrb[0].mxu0 %v3234
      %v3440 = vpop.f32.mrb[0].mxu0
      %v3441 = vadd.f32 0.0, %v3440
      %v3442 = vpop.f32.mrb[0].mxu0
      %v3443 = vpop.f32.mrb[0].mxu0
      %v3444 = vadd.f32 0.0, %v3443
      %v3445 = vpop.f32.mrb[0].mxu0
      %3446 = vmatprep.mubr.bf16.mxu0 0
      %3447 = vmatmul.mubr.bf16.gmra.mrb[0].mxu0 %v3235
      %v3448 = vpop.f32.mrb[0].mxu0
      %v3449 = vadd.f32 0.0, %v3448
      %v3450 = vpop.f32.mrb[0].mxu0
      %v3451 = vpop.f32.mrb[0].mxu0
      %v3452 = vadd.f32 0.0, %v3451
      %v3453 = vpop.f32.mrb[0].mxu0
      %3454 = vmatprep.mubr.bf16.mxu0 0
      %3455 = vmatmul.mubr.bf16.gmra.mrb[0].mxu0 %v3236
      %v3456 = vpop.f32.mrb[0].mxu0
      %v3457 = vadd.f32 0.0, %v3456
      %v3458 = vpop.f32.mrb[0].mxu0
      %v3459 = vpop.f32.mrb[0].mxu0
      %v3460 = vadd.f32 0.0, %v3459
      %v3461 = vpop.f32.mrb[0].mxu0
      %3462 = vdwg.mxu0
      %v3463 = vadd.f32 %v3125, %v3337
      %v3464 = vadd.f32 %v3126, %v3340
      %v3465 = vadd.f32 %v3127, %v3345
      %v3466 = vadd.f32 %v3128, %v3348
      %v3467 = vadd.f32 %v3129, %v3353
      %v3468 = vadd.f32 %v3130, %v3356
      %v3469 = vadd.f32 %v3131, %v3361
      %v3470 = vadd.f32 %v3132, %v3364
      %v3471 = vadd.f32 %v3133, %v3369
      %v3472 = vadd.f32 %v3134, %v3372
      %v3473 = vadd.f32 %v3135, %v3377
      %v3474 = vadd.f32 %v3136, %v3380
      %v3475 = vadd.f32 %v3137, %v3385
      %v3476 = vadd.f32 %v3138, %v3388
      %v3477 = vadd.f32 %v3139, %v3393
      %v3478 = vadd.f32 %v3140, %v3396
      %v3479 = vadd.f32 %v3141, %v3401
      %v3480 = vadd.f32 %v3142, %v3404
      %v3481 = vadd.f32 %v3143, %v3409
      %v3482 = vadd.f32 %v3144, %v3412
      %v3483 = vadd.f32 %v3145, %v3417
      %v3484 = vadd.f32 %v3146, %v3420
      %v3485 = vadd.f32 %v3147, %v3425
      %v3486 = vadd.f32 %v3148, %v3428
      %v3487 = vadd.f32 %v3149, %v3433
      %v3488 = vadd.f32 %v3150, %v3436
      %v3489 = vadd.f32 %v3151, %v3441
      %v3490 = vadd.f32 %v3152, %v3444
      %v3491 = vadd.f32 %v3153, %v3449
      %v3492 = vadd.f32 %v3154, %v3452
      %v3493 = vadd.f32 %v3155, %v3457
      %v3494 = vadd.f32 %v3156, %v3460
      %3495 = vst [vmem:[%s222] sm:$0xff] %v3463
      %3496 = vst [vmem:[%s222 + $0x8] sm:$0xff] %v3464
      %3497 = vst [vmem:[%s222 + $0x10] sm:$0xff] %v3465
      %3498 = vst [vmem:[%s222 + $0x18] sm:$0xff] %v3466
      %3499 = vst [vmem:[%s222 + $0x20] sm:$0xff] %v3467
      %3500 = vst [vmem:[%s222 + $0x28] sm:$0xff] %v3468
      %3501 = vst [vmem:[%s222 + $0x30] sm:$0xff] %v3469
      %3502 = vst [vmem:[%s222 + $0x38] sm:$0xff] %v3470
      %3503 = vst [vmem:[%s222 + $0x40] sm:$0xff] %v3471
      %3504 = vst [vmem:[%s222 + $0x48] sm:$0xff] %v3472
      %3505 = vst [vmem:[%s222 + $0x50] sm:$0xff] %v3473
      %3506 = vst [vmem:[%s222 + $0x58] sm:$0xff] %v3474
      %3507 = vst [vmem:[%s222 + $0x60] sm:$0xff] %v3475
      %3508 = vst [vmem:[%s222 + $0x68] sm:$0xff] %v3476
      %3509 = vst [vmem:[%s222 + $0x70] sm:$0xff] %v3477
      %3510 = vst [vmem:[%s222 + $0x78] sm:$0xff] %v3478
      %3511 = vst [vmem:[%s222 + $0x80] sm:$0xff] %v3479
      %3512 = vst [vmem:[%s222 + $0x88] sm:$0xff] %v3480
      %3513 = vst [vmem:[%s222 + $0x90] sm:$0xff] %v3481
      %3514 = vst [vmem:[%s222 + $0x98] sm:$0xff] %v3482
      %3515 = vst [vmem:[%s222 + $0xa0] sm:$0xff] %v3483
      %3516 = vst [vmem:[%s222 + $0xa8] sm:$0xff] %v3484
      %3517 = vst [vmem:[%s222 + $0xb0] sm:$0xff] %v3485
      %3518 = vst [vmem:[%s222 + $0xb8] sm:$0xff] %v3486
      %3519 = vst [vmem:[%s222 + $0xc0] sm:$0xff] %v3487
      %3520 = vst [vmem:[%s222 + $0xc8] sm:$0xff] %v3488
      %3521 = vst [vmem:[%s222 + $0xd0] sm:$0xff] %v3489
      %3522 = vst [vmem:[%s222 + $0xd8] sm:$0xff] %v3490
      %3523 = vst [vmem:[%s222 + $0xe0] sm:$0xff] %v3491
      %3524 = vst [vmem:[%s222 + $0xe8] sm:$0xff] %v3492
      %3525 = vst [vmem:[%s222 + $0xf0] sm:$0xff] %v3493
      %3526 = vst [vmem:[%s222 + $0xf8] sm:$0xff] %v3494
      %v3527 = vld [vmem:[%s5] sm:$0x1]
      %v3528 = vadd.f32 %v3463, %v3464
      %v3529 = vadd.f32 %v3528, %v3465
      %v3530 = vadd.f32 %v3529, %v3466
      %v3531 = vadd.f32 %v3530, %v3467
      %v3532 = vadd.f32 %v3531, %v3468
      %v3533 = vadd.f32 %v3532, %v3469
      %v3534 = vadd.f32 %v3533, %v3470
      %v3535 = vadd.f32 %v3534, %v3471
      %v3536 = vadd.f32 %v3535, %v3472
      %v3537 = vadd.f32 %v3536, %v3473
      %v3538 = vadd.f32 %v3537, %v3474
      %v3539 = vadd.f32 %v3538, %v3475
      %v3540 = vadd.f32 %v3539, %v3476
      %v3541 = vadd.f32 %v3540, %v3477
      %v3542 = vadd.f32 %v3541, %v3478
      %v3543 = vadd.f32 %v3542, %v3479
      %v3544 = vadd.f32 %v3543, %v3480
      %v3545 = vadd.f32 %v3544, %v3481
      %v3546 = vadd.f32 %v3545, %v3482
      %v3547 = vadd.f32 %v3546, %v3483
      %v3548 = vadd.f32 %v3547, %v3484
      %v3549 = vadd.f32 %v3548, %v3485
      %v3550 = vadd.f32 %v3549, %v3486
      %v3551 = vadd.f32 %v3550, %v3487
      %v3552 = vadd.f32 %v3551, %v3488
      %v3553 = vadd.f32 %v3552, %v3489
      %v3554 = vadd.f32 %v3553, %v3490
      %v3555 = vadd.f32 %v3554, %v3491
      %v3556 = vadd.f32 %v3555, %v3492
      %v3557 = vadd.f32 %v3556, %v3493
      %v3558 = vadd.f32 %v3557, %v3494
      %v3559 = vrot.slane %v3558, 4
      %v3560 = vadd.f32 %v3558, %v3559
      %v3561 = vrot.slane %v3560, 2
      %v3562 = vadd.f32 %v3560, %v3561
      %v3563 = vrot.slane %v3562, 1
      %v3564 = vadd.f32 %v3562, %v3563
      %v3565 = vadd.f32 %v3527, %v3564
      %3566 = vst [vmem:[%s5] sm:$0x1] %v3565
      %v3567 = vld [vmem:[%s5 + $0x1] sm:$0x1]
      %v3568 = vmul.f32 %v3463, %v3463
      %v3569 = vmul.f32 %v3464, %v3464
      %v3570 = vmul.f32 %v3465, %v3465
      %v3571 = vmul.f32 %v3466, %v3466
      %v3572 = vmul.f32 %v3467, %v3467
      %v3573 = vmul.f32 %v3468, %v3468
      %v3574 = vmul.f32 %v3469, %v3469
      %v3575 = vmul.f32 %v3470, %v3470
      %v3576 = vmul.f32 %v3471, %v3471
      %v3577 = vmul.f32 %v3472, %v3472
      %v3578 = vmul.f32 %v3473, %v3473
      %v3579 = vmul.f32 %v3474, %v3474
      %v3580 = vmul.f32 %v3475, %v3475
      %v3581 = vmul.f32 %v3476, %v3476
      %v3582 = vmul.f32 %v3477, %v3477
      %v3583 = vmul.f32 %v3478, %v3478
      %v3584 = vmul.f32 %v3479, %v3479
      %v3585 = vmul.f32 %v3480, %v3480
      %v3586 = vmul.f32 %v3481, %v3481
      %v3587 = vmul.f32 %v3482, %v3482
      %v3588 = vmul.f32 %v3483, %v3483
      %v3589 = vmul.f32 %v3484, %v3484
      %v3590 = vmul.f32 %v3485, %v3485
      %v3591 = vmul.f32 %v3486, %v3486
      %v3592 = vmul.f32 %v3487, %v3487
      %v3593 = vmul.f32 %v3488, %v3488
      %v3594 = vmul.f32 %v3489, %v3489
      %v3595 = vmul.f32 %v3490, %v3490
      %v3596 = vmul.f32 %v3491, %v3491
      %v3597 = vmul.f32 %v3492, %v3492
      %v3598 = vmul.f32 %v3493, %v3493
      %v3599 = vmul.f32 %v3494, %v3494
      %v3600 = vadd.f32 %v3568, %v3569
      %v3601 = vadd.f32 %v3600, %v3570
      %v3602 = vadd.f32 %v3601, %v3571
      %v3603 = vadd.f32 %v3602, %v3572
      %v3604 = vadd.f32 %v3603, %v3573
      %v3605 = vadd.f32 %v3604, %v3574
      %v3606 = vadd.f32 %v3605, %v3575
      %v3607 = vadd.f32 %v3606, %v3576
      %v3608 = vadd.f32 %v3607, %v3577
      %v3609 = vadd.f32 %v3608, %v3578
      %v3610 = vadd.f32 %v3609, %v3579
      %v3611 = vadd.f32 %v3610, %v3580
      %v3612 = vadd.f32 %v3611, %v3581
      %v3613 = vadd.f32 %v3612, %v3582
      %v3614 = vadd.f32 %v3613, %v3583
      %v3615 = vadd.f32 %v3614, %v3584
      %v3616 = vadd.f32 %v3615, %v3585
      %v3617 = vadd.f32 %v3616, %v3586
      %v3618 = vadd.f32 %v3617, %v3587
      %v3619 = vadd.f32 %v3618, %v3588
      %v3620 = vadd.f32 %v3619, %v3589
      %v3621 = vadd.f32 %v3620, %v3590
      %v3622 = vadd.f32 %v3621, %v3591
      %v3623 = vadd.f32 %v3622, %v3592
      %v3624 = vadd.f32 %v3623, %v3593
      %v3625 = vadd.f32 %v3624, %v3594
      %v3626 = vadd.f32 %v3625, %v3595
      %v3627 = vadd.f32 %v3626, %v3596
      %v3628 = vadd.f32 %v3627, %v3597
      %v3629 = vadd.f32 %v3628, %v3598
      %v3630 = vadd.f32 %v3629, %v3599
      %v3631 = vrot.slane %v3630, 4
      %v3632 = vadd.f32 %v3630, %v3631
      %v3633 = vrot.slane %v3632, 2
      %v3634 = vadd.f32 %v3632, %v3633
      %v3635 = vrot.slane %v3634, 1
      %v3636 = vadd.f32 %v3634, %v3635
      %v3637 = vadd.f32 %v3567, %v3636
      %3638 = vst [vmem:[%s5 + $0x1] sm:$0x1] %v3637
      %s3639 = smul.u32 32, %s17
      %p3640 = scmp.lt.s32.totalorder %s3639, 63
      %s3641 = scalar_select %p3640, %s3639, 63
      %s3642 = smul.addr %s3641, 8
      %s3643 = scalar_lea.vmem %s4, %s3642
      // Predicated region
      $region41: #{resblock_forward.3} parent=35 // pred_check
        %p3644 = pneg %p124
      $region42: #{resblock_forward.3} parent=35 // pred_check_branch
        %3646 = sbr.rel (%p3644) target = $region44
      $region43: #{resblock_forward.3} parent=35 // pred_region
        %s3647 = smul.u32 32, %s17
      $region44: #{resblock_forward.3} parent=35 // pred_fallthru
        _
      // Predicated region
      $region45: #{resblock_forward.3} parent=35 // pred_check
        %p3648 = pneg %p145
      $region46: #{resblock_forward.3} parent=35 // pred_check_branch
        %3650 = sbr.rel (%p3648) target = $region48
      $region47: #{resblock_forward.3} parent=35 // pred_region
        _
      $region48: #{resblock_forward.3} parent=35 // pred_fallthru
        _
      // Predicated region
      $region49: #{resblock_forward.3} parent=35 // pred_check
        %p3651 = pneg %p145
      $region50: #{resblock_forward.3} parent=35 // pred_check_branch
        %3653 = sbr.rel (%p3651) target = $region52
      $region51: #{resblock_forward.3} parent=35 // pred_region
        _
      $region52: #{resblock_forward.3} parent=35 // pred_fallthru
        _
    $region36: #{resblock_forward.3} parent=5 // pred_fallthru
      _
    %p3654 = scmp.le.s32.totalorder 2, %s12
    // Predicated region
    $region53: #{resblock_forward.3} parent=5 // pred_check
      %p3655 = pneg %p3654
    $region54: #{resblock_forward.3} parent=5 // pred_check_branch
      %3657 = sbr.rel (%p3655) target = $region56
    $region55: #{resblock_forward.3} parent=5 // pred_region
      %s3658 = ssub.s32 %s12, 2
      // Predicated region
      $region57: #{resblock_forward.3} parent=55 // pred_check
        %p3659 = pneg %p130
      $region58: #{resblock_forward.3} parent=55 // pred_check_branch
        %3661 = sbr.rel (%p3659) target = $region60
      $region59: #{resblock_forward.3} parent=55 // pred_region
        %s3662 = smul.u32 32, %s18
        %p3663 = scmp.lt.s32.totalorder %s3662, 63
        %s3664 = scalar_select %p3663, %s3662, 63
        %s3665 = smul.addr %s3664, 8
        %s3666 = scalar_lea.vmem %s4, %s3665
      $region60: #{resblock_forward.3} parent=55 // pred_fallthru
        _
    $region56: #{resblock_forward.3} parent=5 // pred_fallthru
      _
  $region6: #{resblock_forward.3} parent=0 // loop_footer
    %s16 = sadd.s32 1, %s12
  $region7: #{resblock_forward.3} parent=0 // loop_footer_branch
    %11 = sbr.rel target = $region3
  $region8: #{resblock_forward.3} parent=0 // loop_exit
    _

</llo_original>
